<compile_context>
chip_gen: v7x
topology: tpu7x:2x2x1
jax: 0.10.0
libtpu: 0.0.40
codegen_flags: <defaults>
</compile_context>

<pallas_src>
import numpy as np
import jax
import jax.numpy as jnp
from jax.experimental import pallas as pl
from jax.experimental.pallas import tpu as pltpu

AUXOUT = 512          # fixed by the module
POOL = 4              # adaptive_avg_pool2d target (4, 4)
S = POOL * POOL       # 16 pooled spatial positions
BN_EPS = 1e-5


def _round_up(n, m):
    return ((n + m - 1) // m) * m


def _adaptive_pool_matrix(H, W, oh=POOL, ow=POOL):
    """(oh*ow, H*W) matrix reproducing F.adaptive_avg_pool2d((oh,ow)) exactly."""
    M = np.zeros((oh * ow, H * W), dtype=np.float32)
    for oi in range(oh):
        hs, he = (oi * H) // oh, -((-(oi + 1) * H) // oh)
        for oj in range(ow):
            ws, we = (oj * W) // ow, -((-(oj + 1) * W) // ow)
            inv = 1.0 / float((he - hs) * (we - ws))
            for h in range(hs, he):
                for w in range(ws, we):
                    M[oi * ow + oj, h * W + w] = inv
    return M


# ----------------------------- fused kernel --------------------------------- #

def _make_kernel(tb, C, HW):
    def kernel(x_ref, pm_ref, cw_ref, scale_ref, shift_ref,
               w1_ref, b1_ref, w2_ref, b2_ref, o_ref):
        # x_ref:  (tb, C, HW) f32   TB batch items, NCHW-native (no wrapper cast)
        # pm_ref: (16, HW)    f32   adaptive-pool weights (exact bin averages)
        # cw_ref: (C, 512)    bf16  1x1-conv weight (transposed)
        # scale/shift: (1, 512) f32 folded BatchNorm (+conv bias)
        # w1_ref: (16, 512, H1P) bf16  fc1 weight, [s,c,h] = fc1_w[h, c*16+s]
        # b1_ref: (1, H1P) f32 ; w2_ref: (H1P, NCP) bf16 ; b2_ref: (1, NCP) f32
        # o_ref:  (1, tb, NCP) f32
        x3 = x_ref[...]                                            # (tb, C, HW)

        # Adaptive avg-pool, batched over the TB images ('bqd,bkd->bqk' pattern:
        # contraction on the last dim of both operands -> no relayout of the
        # large activation tile).  Pool matrix stays f32 for exact averages.
        pm_b = jnp.broadcast_to(pm_ref[...], (tb, S, HW))          # (tb, 16, HW)
        pooled = jnp.einsum("bsp,bcp->bsc", pm_b, x3,
                            preferred_element_type=jnp.float32)    # (tb, 16, C)
        pooled2 = pooled.reshape(tb * S, C).astype(jnp.bfloat16)   # rows = b*16+s

        # 1x1 conv + folded BN + ReLU for all tb*16 rows in one MXU matmul.
        conv = jnp.dot(pooled2, cw_ref[...],
                       preferred_element_type=jnp.float32)         # (tb*16, 512)
        y = jnp.maximum(conv * scale_ref[...] + shift_ref[...], 0.0)
        y3 = y.astype(jnp.bfloat16).reshape(tb, S, AUXOUT)         # cast hoisted

        # fc1 without materializing the (tb, 8192) flatten: 16-term dot-accumulate
        # chain, each term (tb,512)@(512,H1P); fc1 bias added once at the end.
        acc = None
        for s in range(S):
            t = jnp.dot(y3[:, s, :], w1_ref[s],
                        preferred_element_type=jnp.float32)        # (tb, H1P)
            acc = t if acc is None else acc + t
        h = jnp.maximum(acc + b1_ref[...], 0.0).astype(jnp.bfloat16)

        # dropout: identity at inference.
        # TODO(synk): training-mode dropout (pltpu.prng_seed / prng_random_bits).
        o_ref[0] = (jnp.dot(h, w2_ref[...], preferred_element_type=jnp.float32)
                    + b2_ref[...])
    return kernel


# ----------------------------- one-time parameter prep ---------------------- #

def prepare_inception_aux_params(params, H, W):
    """Hoisted parameter preprocessing: do once at model-load time."""
    C = params["conv_w"].reshape(AUXOUT, -1).shape[1]
    HW = H * W

    pm = jnp.asarray(_adaptive_pool_matrix(H, W), dtype=jnp.float32)       # (16, HW)
    conv_w_t = params["conv_w"].reshape(AUXOUT, C).T.astype(jnp.bfloat16)  # (C, 512)

    # Fold BatchNorm (eval / running stats) and conv bias into scale/shift.
    scale = params["bn_gamma"] / jnp.sqrt(params["bn_var"] + BN_EPS)
    shift = params["bn_beta"] + scale * (params["conv_b"] - params["bn_mean"])
    scale = scale.reshape(1, AUXOUT).astype(jnp.float32)
    shift = shift.reshape(1, AUXOUT).astype(jnp.float32)

    w1 = params["fc1_w"]                       # (H1, 8192), column index = c*16 + s
    H1 = w1.shape[0]
    NC = params["fc2_w"].shape[0]
    H1P = _round_up(H1, 128)
    NCP = _round_up(NC, 128)

    # (H1, 8192) -> (H1, 512, 16) -> (16, 512, H1), zero-pad H1 -> H1P (lane-dense).
    w1r = jnp.transpose(w1.reshape(H1, AUXOUT, S), (2, 1, 0)).astype(jnp.bfloat16)
    w1p = jnp.zeros((S, AUXOUT, H1P), jnp.bfloat16).at[:, :, :H1].set(w1r)
    b1p = jnp.zeros((1, H1P), jnp.float32).at[0, :H1].set(params["fc1_b"])
    w2p = jnp.zeros((H1P, NCP), jnp.bfloat16).at[:H1, :NC].set(
        params["fc2_w"].T.astype(jnp.bfloat16))
    b2p = jnp.zeros((1, NCP), jnp.float32).at[0, :NC].set(params["fc2_b"])

    return {
        "pm": pm, "conv_w_t": conv_w_t, "scale": scale, "shift": shift,
        "w1": w1p, "b1": b1p, "w2": w2p, "b2": b2p,
        "C": C, "HW": HW, "h1_pad": H1P, "nc_pad": NCP, "num_classes": NC,
    }


# ----------------------------- batch-tile choice ---------------------------- #

def _choose_tb(B, C, HW, h1p, ncp, vmem_limit_bytes):
    weight_bytes = (S * HW * 4 + C * AUXOUT * 2 + 2 * AUXOUT * 4
                    + S * AUXOUT * h1p * 2 + h1p * 4 + h1p * ncp * 2 + ncp * 4)
    budget = max(vmem_limit_bytes - weight_bytes - (4 << 20), 1 << 20)
    per_item = (2 * C * HW * 4               # double-buffered f32 activation block
                + S * HW * 4                 # broadcast pool matrix
                + S * C * 6                  # pooled f32 + bf16
                + S * AUXOUT * 10            # conv f32, y f32, y bf16
                + 2 * h1p * 4 + 2 * ncp * 4)
    cap = int(max(1, min(64, budget // max(per_item, 1))))
    divs = [d for d in range(1, B + 1) if B % d == 0 and d <= cap] or [1]
    tb = max(divs)
    # Keep >= 2 grid steps (v7x has 2 TensorCores) as long as that doesn't
    # starve the fc matmuls of M-rows on a large batch.
    if tb == B and len(divs) > 1:
        alt = max(d for d in divs if d < B)
        if alt >= 8 or B < 16:
            tb = alt
    return tb


# ----------------------------- forward wrapper ------------------------------ #

def inception_aux_forward(x_nchw, prep, *, tb=None,
                          vmem_limit_bytes=32 * 1024 * 1024):
    B, C, H, W = x_nchw.shape
    HW = H * W
    assert C == prep["C"] and HW == prep["HW"]
    H1P, NCP = prep["h1_pad"], prep["nc_pad"]

    if tb is None:
        tb = _choose_tb(B, C, HW, H1P, NCP, vmem_limit_bytes)
    assert B % tb == 0, (B, tb)
    nb = B // tb

    # Pure metadata reshape; activation stays f32 (no extra HBM cast pass).
    x3 = x_nchw.reshape(B, C, HW)

    resident = dict(pipeline_mode=pl.Buffered(1))   # grid-invariant operands

    flops = 2 * B * (S * HW * C + S * C * AUXOUT + S * AUXOUT * H1P + H1P * NCP)
    bytes_accessed = (B * C * HW * 4 + B * NCP * 4
                      + S * HW * 4 + C * AUXOUT * 2 + 2 * AUXOUT * 4
                      + S * AUXOUT * H1P * 2 + H1P * 4 + H1P * NCP * 2 + NCP * 4)

    out = pl.pallas_call(
        _make_kernel(tb, C, HW),
        out_shape=jax.ShapeDtypeStruct((nb, tb, NCP), jnp.float32),
        grid=(nb,),
        in_specs=[
            pl.BlockSpec((tb, C, HW), lambda b: (b, 0, 0)),               # activation
            pl.BlockSpec((S, HW), lambda b: (0, 0), **resident),          # pool matrix
            pl.BlockSpec((C, AUXOUT), lambda b: (0, 0), **resident),      # conv weight
            pl.BlockSpec((1, AUXOUT), lambda b: (0, 0), **resident),      # BN scale
            pl.BlockSpec((1, AUXOUT), lambda b: (0, 0), **resident),      # BN shift
            pl.BlockSpec((S, AUXOUT, H1P), lambda b: (0, 0, 0), **resident),  # fc1 w
            pl.BlockSpec((1, H1P), lambda b: (0, 0), **resident),         # fc1 b
            pl.BlockSpec((H1P, NCP), lambda b: (0, 0), **resident),       # fc2 w
            pl.BlockSpec((1, NCP), lambda b: (0, 0), **resident),         # fc2 b
        ],
        out_specs=pl.BlockSpec((1, tb, NCP), lambda b: (b, 0, 0)),
        compiler_params=pltpu.CompilerParams(
            dimension_semantics=("parallel",),
            vmem_limit_bytes=vmem_limit_bytes),
        cost_estimate=pl.CostEstimate(flops=flops, transcendentals=0,
                                      bytes_accessed=bytes_accessed),
    )(x3, prep["pm"], prep["conv_w_t"], prep["scale"], prep["shift"],
      prep["w1"], prep["b1"], prep["w2"], prep["b2"])

    return out.reshape(B, NCP)[:, :prep["num_classes"]]


# ----------------------------- reference (pure JAX, NCHW, f32) -------------- #

def inception_aux_reference(x, params):
    B, C, H, W = x.shape
    pm = jnp.asarray(_adaptive_pool_matrix(H, W))
    pooled = jnp.einsum("ps,bcs->bcp", pm, x.reshape(B, C, H * W)).reshape(
        B, C, POOL, POOL)
    conv = jnp.einsum("oc,bchw->bohw", params["conv_w"].reshape(AUXOUT, C), pooled)
    conv = conv + params["conv_b"][None, :, None, None]
    bn = (conv - params["bn_mean"][None, :, None, None]) / jnp.sqrt(
        params["bn_var"] + BN_EPS)[None, :, None, None]
    bn = bn * params["bn_gamma"][None, :, None, None] + params["bn_beta"][None, :, None, None]
    r = jnp.maximum(bn, 0.0)
    flat = r.reshape(B, -1)                              # channel-major, like torch.flatten
    h = jnp.maximum(flat @ params["fc1_w"].T + params["fc1_b"], 0.0)
    return h @ params["fc2_w"].T + params["fc2_b"]


# ----------------------------- main ----------------------------------------- #

if __name__ == "__main__":
    # cfg stand-ins: head_size1=32, drop_fc irrelevant at inference, num_classes=10.
    # B=4 so the TB-batched path (TB=2) and a 2-step grid are both exercised.
    B, C, H, W = 4, 4, 16, 16
    HEAD_SIZE1, NUM_CLASSES = 32, 10

    key = jax.random.PRNGKey(0)
    ks = jax.random.split(key, 10)
    params = {
        "conv_w": 0.05 * jax.random.normal(ks[0], (AUXOUT, C), jnp.float32),
        "conv_b": 0.05 * jax.random.normal(ks[1], (AUXOUT,), jnp.float32),
        "bn_gamma": 1.0 + 0.1 * jax.random.normal(ks[2], (AUXOUT,), jnp.float32),
        "bn_beta": 0.05 * jax.random.normal(ks[3], (AUXOUT,), jnp.float32),
        "bn_mean": 0.05 * jax.random.normal(ks[4], (AUXOUT,), jnp.float32),
        "bn_var": jax.random.uniform(ks[5], (AUXOUT,), jnp.float32, 0.5, 1.5),
        "fc1_w": 0.02 * jax.random.normal(ks[6], (HEAD_SIZE1, POOL * POOL * AUXOUT),
                                          jnp.float32),
        "fc1_b": 0.02 * jax.random.normal(ks[7], (HEAD_SIZE1,), jnp.float32),
        "fc2_w": 0.05 * jax.random.normal(ks[8], (NUM_CLASSES, HEAD_SIZE1), jnp.float32),
        "fc2_b": 0.05 * jax.random.normal(ks[9], (NUM_CLASSES,), jnp.float32),
    }
    x = jax.random.normal(key, (B, C, H, W), jnp.float32)

    prep = prepare_inception_aux_params(params, H, W)     # one-time, at model load

    out = jax.block_until_ready(inception_aux_forward(x, prep))
    ref = jax.block_until_ready(inception_aux_reference(x, params))

    assert out.shape == (B, NUM_CLASSES), out.shape
    assert np.allclose(np.asarray(out), np.asarray(ref), rtol=5e-2, atol=5e-2), (
        np.max(np.abs(np.asarray(out) - np.asarray(ref))))

    print("KERNEL_OK")
</pallas_src>

<mosaic_0001>
module attributes {stable_mosaic.version = 11 : i64} {
  func.func @kernel(%arg0: i32, %arg1: memref<2x4x256xf32, #tpu.memory_space<vmem>>, %arg2: memref<16x256xf32, #tpu.memory_space<vmem>>, %arg3: memref<4x512xbf16, #tpu.memory_space<vmem>>, %arg4: memref<1x512xf32, #tpu.memory_space<vmem>>, %arg5: memref<1x512xf32, #tpu.memory_space<vmem>>, %arg6: memref<16x512x128xbf16, #tpu.memory_space<vmem>>, %arg7: memref<1x128xf32, #tpu.memory_space<vmem>>, %arg8: memref<128x128xbf16, #tpu.memory_space<vmem>>, %arg9: memref<1x128xf32, #tpu.memory_space<vmem>>, %arg10: memref<1x2x128xf32, #tpu.memory_space<vmem>>) attributes {dimension_semantics = [#tpu.dimension_semantics<parallel>], iteration_bounds = array<i64: 2>, scalar_prefetch = 0 : i64, scratch_operands = 0 : i64, tpu.core_type = #tpu.core_type<tc>, window_params = [{transform_indices = @transform_0, window_bounds = array<i64: 2, 4, 256>}, {pipeline_mode = #tpu.pipeline_mode<synchronous>, transform_indices = @transform_1, window_bounds = array<i64: 16, 256>}, {pipeline_mode = #tpu.pipeline_mode<synchronous>, transform_indices = @transform_2, window_bounds = array<i64: 4, 512>}, {pipeline_mode = #tpu.pipeline_mode<synchronous>, transform_indices = @transform_3, window_bounds = array<i64: 1, 512>}, {pipeline_mode = #tpu.pipeline_mode<synchronous>, transform_indices = @transform_4, window_bounds = array<i64: 1, 512>}, {pipeline_mode = #tpu.pipeline_mode<synchronous>, transform_indices = @transform_5, window_bounds = array<i64: 16, 512, 128>}, {pipeline_mode = #tpu.pipeline_mode<synchronous>, transform_indices = @transform_6, window_bounds = array<i64: 1, 128>}, {pipeline_mode = #tpu.pipeline_mode<synchronous>, transform_indices = @transform_7, window_bounds = array<i64: 128, 128>}, {pipeline_mode = #tpu.pipeline_mode<synchronous>, transform_indices = @transform_8, window_bounds = array<i64: 1, 128>}, {transform_indices = @transform_9, window_bounds = array<i64: 1, 2, 128>}]} {
    %c0 = arith.constant 0 : index
    %c0_0 = arith.constant 0 : index
    %c0_1 = arith.constant 0 : index
    %0 = vector.load %arg1[%c0, %c0_0, %c0_1] : memref<2x4x256xf32, #tpu.memory_space<vmem>>, vector<2x4x256xf32>
    %c0_2 = arith.constant 0 : index
    %c0_3 = arith.constant 0 : index
    %1 = vector.load %arg2[%c0_2, %c0_3] : memref<16x256xf32, #tpu.memory_space<vmem>>, vector<16x256xf32>
    %2 = vector.shape_cast %1 : vector<16x256xf32> to vector<1x16x256xf32>
    %3 = vector.broadcast %2 : vector<1x16x256xf32> to vector<2x16x256xf32>
    "tpu.trace_start"() <{level = 10 : i32, message = "bsp,bcp->bsc"}> : () -> ()
    %cst = arith.constant dense<0.000000e+00> : vector<2x16x4xf32>
    %4 = tpu.matmul %3, %0, %cst {dimension_numbers = #tpu.dot_dimension_numbers<[2], [2], [1], [1], [0, 0, 0, 1, 1, 1], [0], [0]>} : vector<2x16x256xf32>, vector<2x4x256xf32>, vector<2x16x4xf32> -> vector<2x16x4xf32>
    "tpu.trace_stop"() : () -> ()
    %5 = vector.shape_cast %4 : vector<2x16x4xf32> to vector<32x4xf32>
    %6 = arith.truncf %5 : vector<32x4xf32> to vector<32x4xbf16>
    %c0_4 = arith.constant 0 : index
    %c0_5 = arith.constant 0 : index
    %7 = vector.load %arg3[%c0_4, %c0_5] : memref<4x512xbf16, #tpu.memory_space<vmem>>, vector<4x512xbf16>
    %cst_6 = arith.constant dense<0.000000e+00> : vector<32x512xf32>
    %8 = tpu.matmul %6, %7, %cst_6 {dimension_numbers = #tpu.dot_dimension_numbers<[1], [0], [0], [1], [0, 0, 1, 1], [], []>} : vector<32x4xbf16>, vector<4x512xbf16>, vector<32x512xf32> -> vector<32x512xf32>
    %c0_7 = arith.constant 0 : index
    %c0_8 = arith.constant 0 : index
    %9 = vector.load %arg4[%c0_7, %c0_8] : memref<1x512xf32, #tpu.memory_space<vmem>>, vector<1x512xf32>
    %10 = vector.broadcast %9 : vector<1x512xf32> to vector<32x512xf32>
    %11 = arith.mulf %8, %10 : vector<32x512xf32>
    %c0_9 = arith.constant 0 : index
    %c0_10 = arith.constant 0 : index
    %12 = vector.load %arg5[%c0_9, %c0_10] : memref<1x512xf32, #tpu.memory_space<vmem>>, vector<1x512xf32>
    %13 = vector.broadcast %12 : vector<1x512xf32> to vector<32x512xf32>
    %14 = arith.addf %11, %13 : vector<32x512xf32>
    %cst_11 = arith.constant 0.000000e+00 : f32
    %15 = vector.broadcast %cst_11 : f32 to vector<32x512xf32>
    %16 = arith.maximumf %14, %15 : vector<32x512xf32>
    %17 = arith.truncf %16 : vector<32x512xf32> to vector<32x512xbf16>
    %18 = vector.shape_cast %17 : vector<32x512xbf16> to vector<2x16x512xbf16>
    %19 = vector.extract_strided_slice %18 {offsets = [0, 0, 0], sizes = [2, 1, 512], strides = [1, 1, 1]} : vector<2x16x512xbf16> to vector<2x1x512xbf16>
    %20 = vector.shape_cast %19 : vector<2x1x512xbf16> to vector<2x512xbf16>
    %c0_12 = arith.constant 0 : index
    %c0_13 = arith.constant 0 : index
    %c0_14 = arith.constant 0 : index
    %21 = vector.load %arg6[%c0_12, %c0_13, %c0_14] : memref<16x512x128xbf16, #tpu.memory_space<vmem>>, vector<1x512x128xbf16>
    %22 = vector.shape_cast %21 : vector<1x512x128xbf16> to vector<512x128xbf16>
    %cst_15 = arith.constant dense<0.000000e+00> : vector<2x128xf32>
    %23 = tpu.matmul %20, %22, %cst_15 {dimension_numbers = #tpu.dot_dimension_numbers<[1], [0], [0], [1], [0, 0, 1, 1], [], []>} : vector<2x512xbf16>, vector<512x128xbf16>, vector<2x128xf32> -> vector<2x128xf32>
    %24 = vector.extract_strided_slice %18 {offsets = [0, 1, 0], sizes = [2, 1, 512], strides = [1, 1, 1]} : vector<2x16x512xbf16> to vector<2x1x512xbf16>
    %25 = vector.shape_cast %24 : vector<2x1x512xbf16> to vector<2x512xbf16>
    %c1 = arith.constant 1 : index
    %c0_16 = arith.constant 0 : index
    %c0_17 = arith.constant 0 : index
    %26 = vector.load %arg6[%c1, %c0_16, %c0_17] : memref<16x512x128xbf16, #tpu.memory_space<vmem>>, vector<1x512x128xbf16>
    %27 = vector.shape_cast %26 : vector<1x512x128xbf16> to vector<512x128xbf16>
    %cst_18 = arith.constant dense<0.000000e+00> : vector<2x128xf32>
    %28 = tpu.matmul %25, %27, %cst_18 {dimension_numbers = #tpu.dot_dimension_numbers<[1], [0], [0], [1], [0, 0, 1, 1], [], []>} : vector<2x512xbf16>, vector<512x128xbf16>, vector<2x128xf32> -> vector<2x128xf32>
    %29 = arith.addf %23, %28 : vector<2x128xf32>
    %30 = vector.extract_strided_slice %18 {offsets = [0, 2, 0], sizes = [2, 1, 512], strides = [1, 1, 1]} : vector<2x16x512xbf16> to vector<2x1x512xbf16>
    %31 = vector.shape_cast %30 : vector<2x1x512xbf16> to vector<2x512xbf16>
    %c2 = arith.constant 2 : index
    %c0_19 = arith.constant 0 : index
    %c0_20 = arith.constant 0 : index
    %32 = vector.load %arg6[%c2, %c0_19, %c0_20] : memref<16x512x128xbf16, #tpu.memory_space<vmem>>, vector<1x512x128xbf16>
    %33 = vector.shape_cast %32 : vector<1x512x128xbf16> to vector<512x128xbf16>
    %cst_21 = arith.constant dense<0.000000e+00> : vector<2x128xf32>
    %34 = tpu.matmul %31, %33, %cst_21 {dimension_numbers = #tpu.dot_dimension_numbers<[1], [0], [0], [1], [0, 0, 1, 1], [], []>} : vector<2x512xbf16>, vector<512x128xbf16>, vector<2x128xf32> -> vector<2x128xf32>
    %35 = arith.addf %29, %34 : vector<2x128xf32>
    %36 = vector.extract_strided_slice %18 {offsets = [0, 3, 0], sizes = [2, 1, 512], strides = [1, 1, 1]} : vector<2x16x512xbf16> to vector<2x1x512xbf16>
    %37 = vector.shape_cast %36 : vector<2x1x512xbf16> to vector<2x512xbf16>
    %c3 = arith.constant 3 : index
    %c0_22 = arith.constant 0 : index
    %c0_23 = arith.constant 0 : index
    %38 = vector.load %arg6[%c3, %c0_22, %c0_23] : memref<16x512x128xbf16, #tpu.memory_space<vmem>>, vector<1x512x128xbf16>
    %39 = vector.shape_cast %38 : vector<1x512x128xbf16> to vector<512x128xbf16>
    %cst_24 = arith.constant dense<0.000000e+00> : vector<2x128xf32>
    %40 = tpu.matmul %37, %39, %cst_24 {dimension_numbers = #tpu.dot_dimension_numbers<[1], [0], [0], [1], [0, 0, 1, 1], [], []>} : vector<2x512xbf16>, vector<512x128xbf16>, vector<2x128xf32> -> vector<2x128xf32>
    %41 = arith.addf %35, %40 : vector<2x128xf32>
    %42 = vector.extract_strided_slice %18 {offsets = [0, 4, 0], sizes = [2, 1, 512], strides = [1, 1, 1]} : vector<2x16x512xbf16> to vector<2x1x512xbf16>
    %43 = vector.shape_cast %42 : vector<2x1x512xbf16> to vector<2x512xbf16>
    %c4 = arith.constant 4 : index
    %c0_25 = arith.constant 0 : index
    %c0_26 = arith.constant 0 : index
    %44 = vector.load %arg6[%c4, %c0_25, %c0_26] : memref<16x512x128xbf16, #tpu.memory_space<vmem>>, vector<1x512x128xbf16>
    %45 = vector.shape_cast %44 : vector<1x512x128xbf16> to vector<512x128xbf16>
    %cst_27 = arith.constant dense<0.000000e+00> : vector<2x128xf32>
    %46 = tpu.matmul %43, %45, %cst_27 {dimension_numbers = #tpu.dot_dimension_numbers<[1], [0], [0], [1], [0, 0, 1, 1], [], []>} : vector<2x512xbf16>, vector<512x128xbf16>, vector<2x128xf32> -> vector<2x128xf32>
    %47 = arith.addf %41, %46 : vector<2x128xf32>
    %48 = vector.extract_strided_slice %18 {offsets = [0, 5, 0], sizes = [2, 1, 512], strides = [1, 1, 1]} : vector<2x16x512xbf16> to vector<2x1x512xbf16>
    %49 = vector.shape_cast %48 : vector<2x1x512xbf16> to vector<2x512xbf16>
    %c5 = arith.constant 5 : index
    %c0_28 = arith.constant 0 : index
    %c0_29 = arith.constant 0 : index
    %50 = vector.load %arg6[%c5, %c0_28, %c0_29] : memref<16x512x128xbf16, #tpu.memory_space<vmem>>, vector<1x512x128xbf16>
    %51 = vector.shape_cast %50 : vector<1x512x128xbf16> to vector<512x128xbf16>
    %cst_30 = arith.constant dense<0.000000e+00> : vector<2x128xf32>
    %52 = tpu.matmul %49, %51, %cst_30 {dimension_numbers = #tpu.dot_dimension_numbers<[1], [0], [0], [1], [0, 0, 1, 1], [], []>} : vector<2x512xbf16>, vector<512x128xbf16>, vector<2x128xf32> -> vector<2x128xf32>
    %53 = arith.addf %47, %52 : vector<2x128xf32>
    %54 = vector.extract_strided_slice %18 {offsets = [0, 6, 0], sizes = [2, 1, 512], strides = [1, 1, 1]} : vector<2x16x512xbf16> to vector<2x1x512xbf16>
    %55 = vector.shape_cast %54 : vector<2x1x512xbf16> to vector<2x512xbf16>
    %c6 = arith.constant 6 : index
    %c0_31 = arith.constant 0 : index
    %c0_32 = arith.constant 0 : index
    %56 = vector.load %arg6[%c6, %c0_31, %c0_32] : memref<16x512x128xbf16, #tpu.memory_space<vmem>>, vector<1x512x128xbf16>
    %57 = vector.shape_cast %56 : vector<1x512x128xbf16> to vector<512x128xbf16>
    %cst_33 = arith.constant dense<0.000000e+00> : vector<2x128xf32>
    %58 = tpu.matmul %55, %57, %cst_33 {dimension_numbers = #tpu.dot_dimension_numbers<[1], [0], [0], [1], [0, 0, 1, 1], [], []>} : vector<2x512xbf16>, vector<512x128xbf16>, vector<2x128xf32> -> vector<2x128xf32>
    %59 = arith.addf %53, %58 : vector<2x128xf32>
    %60 = vector.extract_strided_slice %18 {offsets = [0, 7, 0], sizes = [2, 1, 512], strides = [1, 1, 1]} : vector<2x16x512xbf16> to vector<2x1x512xbf16>
    %61 = vector.shape_cast %60 : vector<2x1x512xbf16> to vector<2x512xbf16>
    %c7 = arith.constant 7 : index
    %c0_34 = arith.constant 0 : index
    %c0_35 = arith.constant 0 : index
    %62 = vector.load %arg6[%c7, %c0_34, %c0_35] : memref<16x512x128xbf16, #tpu.memory_space<vmem>>, vector<1x512x128xbf16>
    %63 = vector.shape_cast %62 : vector<1x512x128xbf16> to vector<512x128xbf16>
    %cst_36 = arith.constant dense<0.000000e+00> : vector<2x128xf32>
    %64 = tpu.matmul %61, %63, %cst_36 {dimension_numbers = #tpu.dot_dimension_numbers<[1], [0], [0], [1], [0, 0, 1, 1], [], []>} : vector<2x512xbf16>, vector<512x128xbf16>, vector<2x128xf32> -> vector<2x128xf32>
    %65 = arith.addf %59, %64 : vector<2x128xf32>
    %66 = vector.extract_strided_slice %18 {offsets = [0, 8, 0], sizes = [2, 1, 512], strides = [1, 1, 1]} : vector<2x16x512xbf16> to vector<2x1x512xbf16>
    %67 = vector.shape_cast %66 : vector<2x1x512xbf16> to vector<2x512xbf16>
    %c8 = arith.constant 8 : index
    %c0_37 = arith.constant 0 : index
    %c0_38 = arith.constant 0 : index
    %68 = vector.load %arg6[%c8, %c0_37, %c0_38] : memref<16x512x128xbf16, #tpu.memory_space<vmem>>, vector<1x512x128xbf16>
    %69 = vector.shape_cast %68 : vector<1x512x128xbf16> to vector<512x128xbf16>
    %cst_39 = arith.constant dense<0.000000e+00> : vector<2x128xf32>
    %70 = tpu.matmul %67, %69, %cst_39 {dimension_numbers = #tpu.dot_dimension_numbers<[1], [0], [0], [1], [0, 0, 1, 1], [], []>} : vector<2x512xbf16>, vector<512x128xbf16>, vector<2x128xf32> -> vector<2x128xf32>
    %71 = arith.addf %65, %70 : vector<2x128xf32>
    %72 = vector.extract_strided_slice %18 {offsets = [0, 9, 0], sizes = [2, 1, 512], strides = [1, 1, 1]} : vector<2x16x512xbf16> to vector<2x1x512xbf16>
    %73 = vector.shape_cast %72 : vector<2x1x512xbf16> to vector<2x512xbf16>
    %c9 = arith.constant 9 : index
    %c0_40 = arith.constant 0 : index
    %c0_41 = arith.constant 0 : index
    %74 = vector.load %arg6[%c9, %c0_40, %c0_41] : memref<16x512x128xbf16, #tpu.memory_space<vmem>>, vector<1x512x128xbf16>
    %75 = vector.shape_cast %74 : vector<1x512x128xbf16> to vector<512x128xbf16>
    %cst_42 = arith.constant dense<0.000000e+00> : vector<2x128xf32>
    %76 = tpu.matmul %73, %75, %cst_42 {dimension_numbers = #tpu.dot_dimension_numbers<[1], [0], [0], [1], [0, 0, 1, 1], [], []>} : vector<2x512xbf16>, vector<512x128xbf16>, vector<2x128xf32> -> vector<2x128xf32>
    %77 = arith.addf %71, %76 : vector<2x128xf32>
    %78 = vector.extract_strided_slice %18 {offsets = [0, 10, 0], sizes = [2, 1, 512], strides = [1, 1, 1]} : vector<2x16x512xbf16> to vector<2x1x512xbf16>
    %79 = vector.shape_cast %78 : vector<2x1x512xbf16> to vector<2x512xbf16>
    %c10 = arith.constant 10 : index
    %c0_43 = arith.constant 0 : index
    %c0_44 = arith.constant 0 : index
    %80 = vector.load %arg6[%c10, %c0_43, %c0_44] : memref<16x512x128xbf16, #tpu.memory_space<vmem>>, vector<1x512x128xbf16>
    %81 = vector.shape_cast %80 : vector<1x512x128xbf16> to vector<512x128xbf16>
    %cst_45 = arith.constant dense<0.000000e+00> : vector<2x128xf32>
    %82 = tpu.matmul %79, %81, %cst_45 {dimension_numbers = #tpu.dot_dimension_numbers<[1], [0], [0], [1], [0, 0, 1, 1], [], []>} : vector<2x512xbf16>, vector<512x128xbf16>, vector<2x128xf32> -> vector<2x128xf32>
    %83 = arith.addf %77, %82 : vector<2x128xf32>
    %84 = vector.extract_strided_slice %18 {offsets = [0, 11, 0], sizes = [2, 1, 512], strides = [1, 1, 1]} : vector<2x16x512xbf16> to vector<2x1x512xbf16>
    %85 = vector.shape_cast %84 : vector<2x1x512xbf16> to vector<2x512xbf16>
    %c11 = arith.constant 11 : index
    %c0_46 = arith.constant 0 : index
    %c0_47 = arith.constant 0 : index
    %86 = vector.load %arg6[%c11, %c0_46, %c0_47] : memref<16x512x128xbf16, #tpu.memory_space<vmem>>, vector<1x512x128xbf16>
    %87 = vector.shape_cast %86 : vector<1x512x128xbf16> to vector<512x128xbf16>
    %cst_48 = arith.constant dense<0.000000e+00> : vector<2x128xf32>
    %88 = tpu.matmul %85, %87, %cst_48 {dimension_numbers = #tpu.dot_dimension_numbers<[1], [0], [0], [1], [0, 0, 1, 1], [], []>} : vector<2x512xbf16>, vector<512x128xbf16>, vector<2x128xf32> -> vector<2x128xf32>
    %89 = arith.addf %83, %88 : vector<2x128xf32>
    %90 = vector.extract_strided_slice %18 {offsets = [0, 12, 0], sizes = [2, 1, 512], strides = [1, 1, 1]} : vector<2x16x512xbf16> to vector<2x1x512xbf16>
    %91 = vector.shape_cast %90 : vector<2x1x512xbf16> to vector<2x512xbf16>
    %c12 = arith.constant 12 : index
    %c0_49 = arith.constant 0 : index
    %c0_50 = arith.constant 0 : index
    %92 = vector.load %arg6[%c12, %c0_49, %c0_50] : memref<16x512x128xbf16, #tpu.memory_space<vmem>>, vector<1x512x128xbf16>
    %93 = vector.shape_cast %92 : vector<1x512x128xbf16> to vector<512x128xbf16>
    %cst_51 = arith.constant dense<0.000000e+00> : vector<2x128xf32>
    %94 = tpu.matmul %91, %93, %cst_51 {dimension_numbers = #tpu.dot_dimension_numbers<[1], [0], [0], [1], [0, 0, 1, 1], [], []>} : vector<2x512xbf16>, vector<512x128xbf16>, vector<2x128xf32> -> vector<2x128xf32>
    %95 = arith.addf %89, %94 : vector<2x128xf32>
    %96 = vector.extract_strided_slice %18 {offsets = [0, 13, 0], sizes = [2, 1, 512], strides = [1, 1, 1]} : vector<2x16x512xbf16> to vector<2x1x512xbf16>
    %97 = vector.shape_cast %96 : vector<2x1x512xbf16> to vector<2x512xbf16>
    %c13 = arith.constant 13 : index
    %c0_52 = arith.constant 0 : index
    %c0_53 = arith.constant 0 : index
    %98 = vector.load %arg6[%c13, %c0_52, %c0_53] : memref<16x512x128xbf16, #tpu.memory_space<vmem>>, vector<1x512x128xbf16>
    %99 = vector.shape_cast %98 : vector<1x512x128xbf16> to vector<512x128xbf16>
    %cst_54 = arith.constant dense<0.000000e+00> : vector<2x128xf32>
    %100 = tpu.matmul %97, %99, %cst_54 {dimension_numbers = #tpu.dot_dimension_numbers<[1], [0], [0], [1], [0, 0, 1, 1], [], []>} : vector<2x512xbf16>, vector<512x128xbf16>, vector<2x128xf32> -> vector<2x128xf32>
    %101 = arith.addf %95, %100 : vector<2x128xf32>
    %102 = vector.extract_strided_slice %18 {offsets = [0, 14, 0], sizes = [2, 1, 512], strides = [1, 1, 1]} : vector<2x16x512xbf16> to vector<2x1x512xbf16>
    %103 = vector.shape_cast %102 : vector<2x1x512xbf16> to vector<2x512xbf16>
    %c14 = arith.constant 14 : index
    %c0_55 = arith.constant 0 : index
    %c0_56 = arith.constant 0 : index
    %104 = vector.load %arg6[%c14, %c0_55, %c0_56] : memref<16x512x128xbf16, #tpu.memory_space<vmem>>, vector<1x512x128xbf16>
    %105 = vector.shape_cast %104 : vector<1x512x128xbf16> to vector<512x128xbf16>
    %cst_57 = arith.constant dense<0.000000e+00> : vector<2x128xf32>
    %106 = tpu.matmul %103, %105, %cst_57 {dimension_numbers = #tpu.dot_dimension_numbers<[1], [0], [0], [1], [0, 0, 1, 1], [], []>} : vector<2x512xbf16>, vector<512x128xbf16>, vector<2x128xf32> -> vector<2x128xf32>
    %107 = arith.addf %101, %106 : vector<2x128xf32>
    %108 = vector.extract_strided_slice %18 {offsets = [0, 15, 0], sizes = [2, 1, 512], strides = [1, 1, 1]} : vector<2x16x512xbf16> to vector<2x1x512xbf16>
    %109 = vector.shape_cast %108 : vector<2x1x512xbf16> to vector<2x512xbf16>
    %c15 = arith.constant 15 : index
    %c0_58 = arith.constant 0 : index
    %c0_59 = arith.constant 0 : index
    %110 = vector.load %arg6[%c15, %c0_58, %c0_59] : memref<16x512x128xbf16, #tpu.memory_space<vmem>>, vector<1x512x128xbf16>
    %111 = vector.shape_cast %110 : vector<1x512x128xbf16> to vector<512x128xbf16>
    %cst_60 = arith.constant dense<0.000000e+00> : vector<2x128xf32>
    %112 = tpu.matmul %109, %111, %cst_60 {dimension_numbers = #tpu.dot_dimension_numbers<[1], [0], [0], [1], [0, 0, 1, 1], [], []>} : vector<2x512xbf16>, vector<512x128xbf16>, vector<2x128xf32> -> vector<2x128xf32>
    %113 = arith.addf %107, %112 : vector<2x128xf32>
    %c0_61 = arith.constant 0 : index
    %c0_62 = arith.constant 0 : index
    %114 = vector.load %arg7[%c0_61, %c0_62] : memref<1x128xf32, #tpu.memory_space<vmem>>, vector<1x128xf32>
    %115 = vector.broadcast %114 : vector<1x128xf32> to vector<2x128xf32>
    %116 = arith.addf %113, %115 : vector<2x128xf32>
    %cst_63 = arith.constant 0.000000e+00 : f32
    %117 = vector.broadcast %cst_63 : f32 to vector<2x128xf32>
    %118 = arith.maximumf %116, %117 : vector<2x128xf32>
    %119 = arith.truncf %118 : vector<2x128xf32> to vector<2x128xbf16>
    %c0_64 = arith.constant 0 : index
    %c0_65 = arith.constant 0 : index
    %120 = vector.load %arg8[%c0_64, %c0_65] : memref<128x128xbf16, #tpu.memory_space<vmem>>, vector<128x128xbf16>
    %cst_66 = arith.constant dense<0.000000e+00> : vector<2x128xf32>
    %121 = tpu.matmul %119, %120, %cst_66 {dimension_numbers = #tpu.dot_dimension_numbers<[1], [0], [0], [1], [0, 0, 1, 1], [], []>} : vector<2x128xbf16>, vector<128x128xbf16>, vector<2x128xf32> -> vector<2x128xf32>
    %c0_67 = arith.constant 0 : index
    %c0_68 = arith.constant 0 : index
    %122 = vector.load %arg9[%c0_67, %c0_68] : memref<1x128xf32, #tpu.memory_space<vmem>>, vector<1x128xf32>
    %123 = vector.broadcast %122 : vector<1x128xf32> to vector<2x128xf32>
    %124 = arith.addf %121, %123 : vector<2x128xf32>
    %c0_69 = arith.constant 0 : index
    %c0_70 = arith.constant 0 : index
    %c0_71 = arith.constant 0 : index
    %125 = vector.load %arg10[%c0_69, %c0_70, %c0_71] : memref<1x2x128xf32, #tpu.memory_space<vmem>>, vector<1x2x128xf32>
    %126 = vector.shape_cast %125 : vector<1x2x128xf32> to vector<2x128xf32>
    %127 = vector.shape_cast %124 : vector<2x128xf32> to vector<1x2x128xf32>
    tpu.vector_store %arg10[%c0_69, %c0_70, %c0_71], %127 {strides = array<i32>} : memref<1x2x128xf32, #tpu.memory_space<vmem>>, vector<1x2x128xf32>,
    return
  }
  func.func @transform_0(%arg0: i32) -> (i32, i32, i32) {
    %c0_i32 = arith.constant 0 : i32
    %c0_i32_0 = arith.constant 0 : i32
    %c0_i32_1 = arith.constant 0 : i32
    return %arg0, %c0_i32, %c0_i32_0 : i32, i32, i32
  }
  func.func @transform_1(%arg0: i32) -> (i32, i32) {
    %c0_i32 = arith.constant 0 : i32
    %c0_i32_0 = arith.constant 0 : i32
    %c0_i32_1 = arith.constant 0 : i32
    return %c0_i32, %c0_i32_0 : i32, i32
  }
  func.func @transform_2(%arg0: i32) -> (i32, i32) {
    %c0_i32 = arith.constant 0 : i32
    %c0_i32_0 = arith.constant 0 : i32
    %c0_i32_1 = arith.constant 0 : i32
    return %c0_i32, %c0_i32_0 : i32, i32
  }
  func.func @transform_3(%arg0: i32) -> (i32, i32) {
    %c0_i32 = arith.constant 0 : i32
    %c0_i32_0 = arith.constant 0 : i32
    %c0_i32_1 = arith.constant 0 : i32
    return %c0_i32, %c0_i32_0 : i32, i32
  }
  func.func @transform_4(%arg0: i32) -> (i32, i32) {
    %c0_i32 = arith.constant 0 : i32
    %c0_i32_0 = arith.constant 0 : i32
    %c0_i32_1 = arith.constant 0 : i32
    return %c0_i32, %c0_i32_0 : i32, i32
  }
  func.func @transform_5(%arg0: i32) -> (i32, i32, i32) {
    %c0_i32 = arith.constant 0 : i32
    %c0_i32_0 = arith.constant 0 : i32
    %c0_i32_1 = arith.constant 0 : i32
    %c0_i32_2 = arith.constant 0 : i32
    return %c0_i32, %c0_i32_0, %c0_i32_1 : i32, i32, i32
  }
  func.func @transform_6(%arg0: i32) -> (i32, i32) {
    %c0_i32 = arith.constant 0 : i32
    %c0_i32_0 = arith.constant 0 : i32
    %c0_i32_1 = arith.constant 0 : i32
    return %c0_i32, %c0_i32_0 : i32, i32
  }
  func.func @transform_7(%arg0: i32) -> (i32, i32) {
    %c0_i32 = arith.constant 0 : i32
    %c0_i32_0 = arith.constant 0 : i32
    %c0_i32_1 = arith.constant 0 : i32
    return %c0_i32, %c0_i32_0 : i32, i32
  }
  func.func @transform_8(%arg0: i32) -> (i32, i32) {
    %c0_i32 = arith.constant 0 : i32
    %c0_i32_0 = arith.constant 0 : i32
    %c0_i32_1 = arith.constant 0 : i32
    return %c0_i32, %c0_i32_0 : i32, i32
  }
  func.func @transform_9(%arg0: i32) -> (i32, i32, i32) {
    %c0_i32 = arith.constant 0 : i32
    %c0_i32_0 = arith.constant 0 : i32
    %c0_i32_1 = arith.constant 0 : i32
    return %arg0, %c0_i32, %c0_i32_0 : i32, i32, i32
  }
}

</mosaic_0001>

<llo_original>
// kernel: tpu_custom_call.1
$region0: #{tpu_custom_call.1}
  #allocation0 [shape = 'u32[]', space=smem, size = 0x4, offset = 0x4, fixed_abs, tag = 'smem constant byte address 0x4 - core index']
  #allocation1 [shape = 'u32[144,128]{1,0:T(1,128)}', space=vmem, size = 0x12000, scoped, tag = 'internal scratch']
  %s0 = inlined_call_operand.hbm [shape: f32[4,4,256], index: 0, kind: input, shape index: {}]
  %s1 = inlined_call_operand.hbm [shape: f32[16,256], index: 1, kind: input, shape index: {}]
  %s2 = inlined_call_operand.hbm [shape: bf16[4,512], index: 2, kind: input, shape index: {}]
  %s3 = inlined_call_operand.hbm [shape: f32[1,512], index: 3, kind: input, shape index: {}]
  %s4 = inlined_call_operand.hbm [shape: f32[1,512], index: 4, kind: input, shape index: {}]
  %s5 = inlined_call_operand.hbm [shape: bf16[16,512,128], index: 5, kind: input, shape index: {}]
  %s6 = inlined_call_operand.hbm [shape: f32[1,128], index: 6, kind: input, shape index: {}]
  %s7 = inlined_call_operand.hbm [shape: bf16[128,128], index: 7, kind: input, shape index: {}]
  %s8 = inlined_call_operand.hbm [shape: f32[1,128], index: 8, kind: input, shape index: {}]
  %s9 = inlined_call_operand.hbm [shape: f32[2,2,128], index: 9, kind: output, shape index: {}]
  %s10 = sld [smem:[#allocation0]]
  $region105: #{tpu_custom_call.1} parent=0
    _
  %s12 = ssub.s32 1, %s10
  %s13 = scalar_select 0, %s12, %s10
  $region1: #{tpu_custom_call.1} parent=0
    #allocation2 [shape = 'u8[16384]{0}', space=vmem, size = 0x4000, scoped, tag = 'input window, operand 0']
    #allocation3 [shape = 's32[2]{0}', space=sflag, size = 0x8, scoped, tag = 'scoped memory for tpu_custom_call.1']
    #allocation4 [shape = 's32[2]{0}', space=sflag, size = 0x8, scoped, tag = 'scoped memory for tpu_custom_call.1']
    #allocation5 [shape = 'u8[16384]{0}', space=vmem, size = 0x4000, scoped, tag = 'input window, operand 1, single buffered']
    #allocation6 [shape = 's32[1]{0}', space=sflag, size = 0x4, scoped, tag = 'scoped memory for tpu_custom_call.1']
    #allocation7 [shape = 'u8[4096]{0}', space=vmem, size = 0x1000, scoped, tag = 'input window, operand 2, single buffered']
    #allocation8 [shape = 'u8[2048]{0}', space=vmem, size = 0x800, scoped, tag = 'input window, operand 3, single buffered']
    #allocation9 [shape = 's32[1]{0}', space=sflag, size = 0x4, scoped, tag = 'scoped memory for tpu_custom_call.1']
    #allocation10 [shape = 'u8[2048]{0}', space=vmem, size = 0x800, scoped, tag = 'input window, operand 4, single buffered']
    #allocation11 [shape = 'u8[2097152]{0}', space=vmem, size = 0x200000, scoped, tag = 'input window, operand 5, single buffered']
    #allocation12 [shape = 's32[1]{0}', space=sflag, size = 0x4, scoped, tag = 'scoped memory for tpu_custom_call.1']
    #allocation13 [shape = 'u8[512]{0}', space=vmem, size = 0x400, scoped, tag = 'input window, operand 6, single buffered']
    #allocation14 [shape = 'u8[32768]{0}', space=vmem, size = 0x8000, scoped, tag = 'input window, operand 7, single buffered']
    #allocation15 [shape = 's32[1]{0}', space=sflag, size = 0x4, scoped, tag = 'scoped memory for tpu_custom_call.1']
    #allocation16 [shape = 'u8[512]{0}', space=vmem, size = 0x400, scoped, tag = 'input window, operand 8, single buffered']
    #allocation17 [shape = 'u8[2048]{0}', space=vmem, size = 0x800, scoped, tag = 'output window, operand 0']
    %14 = vsyncpa [#allocation3], 0
    %s15 = scalar_lea.sflag [#allocation3], 1
    %16 = vsyncpa %s15, 0
    %17 = vsyncpa [#allocation6], 0
    %18 = vsyncpa [#allocation9], 0
    %19 = vsyncpa [#allocation12], 0
    %20 = vsyncpa [#allocation15], 0
    %21 = vsyncpa [#allocation4], 0
    %s22 = scalar_lea.sflag [#allocation4], 1
    %23 = vsyncpa %s22, 0
    loop: start=0, step=1, limit=4
    $region2: #{tpu_custom_call.1} parent=1 // loop_pre_header
      _
    $region3: #{tpu_custom_call.1} parent=1 // loop_header
      %s25 = sphi 0, %s29
      %p26 = scmp.ge.s32.totalorder %s25, 4
      %s35 = sphi 0, %s37
      %s38 = sphi 0, %s35
      %s39 = sphi 0, %s38
      %s55 = sphi 0, %s39
      %s59 = sphi 0, %s59
      %s61 = sphi 0, %s59
      %s62 = sphi 0, %s61
      %s76 = sphi 0, %s62
      %s80 = sphi 0, %s80
      %s82 = sphi 0, %s80
      %s83 = sphi 0, %s82
      %s97 = sphi 0, %s83
      %s101 = sphi 0, %s101
      %s103 = sphi 0, %s101
      %s104 = sphi 0, %s103
      %s118 = sphi 0, %s104
      %s122 = sphi 0, %s122
      %s124 = sphi 0, %s122
      %s125 = sphi 0, %s124
      %s139 = sphi 0, %s125
      %s143 = sphi 0, %s143
      %s145 = sphi 0, %s143
      %s146 = sphi 0, %s145
      %s160 = sphi 0, %s146
      %s164 = sphi 0, %s164
      %s166 = sphi 0, %s164
      %s167 = sphi 0, %s166
      %s181 = sphi 0, %s167
      %s185 = sphi 0, %s185
      %s187 = sphi 0, %s185
      %s188 = sphi 0, %s187
      %s202 = sphi 0, %s188
      %s206 = sphi 0, %s206
      %s208 = sphi 0, %s206
      %s209 = sphi 0, %s208
      %s223 = sphi 0, %s209
      %s229 = sphi 0, %s231
      %s232 = sphi 0, %s229
      %s233 = sphi 0, %s232
      %s249 = sphi 0, %s233
    $region4: #{tpu_custom_call.1} parent=1 // loop_header_branch
      %28 = sbr.rel (%p26) target = $region8
    $region5: #{tpu_custom_call.1} parent=1 // loop_body
      %s30 = ssub.s32 %s25, 1
      %s31 = ssub.s32 %s25, 2
      %s32 = sadd.s32 %s25, 1
      %s33 = ssub.s32 %s25, %s32
      %p34 = scmp.eq.s32.totalorder %s33, 0
      %s36 = sadd.s32 %s35, 1
      %s37 = scalar_select %p34, %s35, %s36
      %p40 = pneg %p34
      %p41 = scmp.eq.s32.totalorder %s25, 1
      %p42 = por %p40, %p41
      %p43 = scmp.ne.s32.totalorder %s35, %s38
      %p44 = scmp.eq.s32.totalorder %s25, 0
      %p45 = por %p43, %p44
      %p46 = scmp.ne.s32.totalorder %s35, %s38
      %p47 = scmp.eq.s32.totalorder %s30, 1
      %p48 = por %p46, %p47
      %p49 = scmp.ne.s32.totalorder %s38, %s39
      %p50 = scmp.eq.s32.totalorder %s30, 0
      %p51 = por %p49, %p50
      %p52 = scmp.ne.s32.totalorder %s38, %s39
      %p53 = scmp.eq.s32.totalorder %s31, 1
      %p54 = por %p52, %p53
      %p56 = scmp.ne.s32.totalorder %s39, %s55
      %p57 = scmp.eq.s32.totalorder %s31, 0
      %p58 = por %p56, %p57
      %s60 = sadd.s32 %s59, 1
      %p63 = scmp.eq.s32.totalorder %s25, 1
      %p64 = scmp.ne.s32.totalorder %s59, %s61
      %p65 = scmp.eq.s32.totalorder %s25, 0
      %p66 = por %p64, %p65
      %p67 = scmp.ne.s32.totalorder %s59, %s61
      %p68 = scmp.eq.s32.totalorder %s30, 1
      %p69 = por %p67, %p68
      %p70 = scmp.ne.s32.totalorder %s61, %s62
      %p71 = scmp.eq.s32.totalorder %s30, 0
      %p72 = por %p70, %p71
      %p73 = scmp.ne.s32.totalorder %s61, %s62
      %p74 = scmp.eq.s32.totalorder %s31, 1
      %p75 = por %p73, %p74
      %p77 = scmp.ne.s32.totalorder %s62, %s76
      %p78 = scmp.eq.s32.totalorder %s31, 0
      %p79 = por %p77, %p78
      %s81 = sadd.s32 %s80, 1
      %p84 = scmp.eq.s32.totalorder %s25, 1
      %p85 = scmp.ne.s32.totalorder %s80, %s82
      %p86 = scmp.eq.s32.totalorder %s25, 0
      %p87 = por %p85, %p86
      %p88 = scmp.ne.s32.totalorder %s80, %s82
      %p89 = scmp.eq.s32.totalorder %s30, 1
      %p90 = por %p88, %p89
      %p91 = scmp.ne.s32.totalorder %s82, %s83
      %p92 = scmp.eq.s32.totalorder %s30, 0
      %p93 = por %p91, %p92
      %p94 = scmp.ne.s32.totalorder %s82, %s83
      %p95 = scmp.eq.s32.totalorder %s31, 1
      %p96 = por %p94, %p95
      %p98 = scmp.ne.s32.totalorder %s83, %s97
      %p99 = scmp.eq.s32.totalorder %s31, 0
      %p100 = por %p98, %p99
      %s102 = sadd.s32 %s101, 1
      %p105 = scmp.eq.s32.totalorder %s25, 1
      %p106 = scmp.ne.s32.totalorder %s101, %s103
      %p107 = scmp.eq.s32.totalorder %s25, 0
      %p108 = por %p106, %p107
      %p109 = scmp.ne.s32.totalorder %s101, %s103
      %p110 = scmp.eq.s32.totalorder %s30, 1
      %p111 = por %p109, %p110
      %p112 = scmp.ne.s32.totalorder %s103, %s104
      %p113 = scmp.eq.s32.totalorder %s30, 0
      %p114 = por %p112, %p113
      %p115 = scmp.ne.s32.totalorder %s103, %s104
      %p116 = scmp.eq.s32.totalorder %s31, 1
      %p117 = por %p115, %p116
      %p119 = scmp.ne.s32.totalorder %s104, %s118
      %p120 = scmp.eq.s32.totalorder %s31, 0
      %p121 = por %p119, %p120
      %s123 = sadd.s32 %s122, 1
      %p126 = scmp.eq.s32.totalorder %s25, 1
      %p127 = scmp.ne.s32.totalorder %s122, %s124
      %p128 = scmp.eq.s32.totalorder %s25, 0
      %p129 = por %p127, %p128
      %p130 = scmp.ne.s32.totalorder %s122, %s124
      %p131 = scmp.eq.s32.totalorder %s30, 1
      %p132 = por %p130, %p131
      %p133 = scmp.ne.s32.totalorder %s124, %s125
      %p134 = scmp.eq.s32.totalorder %s30, 0
      %p135 = por %p133, %p134
      %p136 = scmp.ne.s32.totalorder %s124, %s125
      %p137 = scmp.eq.s32.totalorder %s31, 1
      %p138 = por %p136, %p137
      %p140 = scmp.ne.s32.totalorder %s125, %s139
      %p141 = scmp.eq.s32.totalorder %s31, 0
      %p142 = por %p140, %p141
      %s144 = sadd.s32 %s143, 1
      %p147 = scmp.eq.s32.totalorder %s25, 1
      %p148 = scmp.ne.s32.totalorder %s143, %s145
      %p149 = scmp.eq.s32.totalorder %s25, 0
      %p150 = por %p148, %p149
      %p151 = scmp.ne.s32.totalorder %s143, %s145
      %p152 = scmp.eq.s32.totalorder %s30, 1
      %p153 = por %p151, %p152
      %p154 = scmp.ne.s32.totalorder %s145, %s146
      %p155 = scmp.eq.s32.totalorder %s30, 0
      %p156 = por %p154, %p155
      %p157 = scmp.ne.s32.totalorder %s145, %s146
      %p158 = scmp.eq.s32.totalorder %s31, 1
      %p159 = por %p157, %p158
      %p161 = scmp.ne.s32.totalorder %s146, %s160
      %p162 = scmp.eq.s32.totalorder %s31, 0
      %p163 = por %p161, %p162
      %s165 = sadd.s32 %s164, 1
      %p168 = scmp.eq.s32.totalorder %s25, 1
      %p169 = scmp.ne.s32.totalorder %s164, %s166
      %p170 = scmp.eq.s32.totalorder %s25, 0
      %p171 = por %p169, %p170
      %p172 = scmp.ne.s32.totalorder %s164, %s166
      %p173 = scmp.eq.s32.totalorder %s30, 1
      %p174 = por %p172, %p173
      %p175 = scmp.ne.s32.totalorder %s166, %s167
      %p176 = scmp.eq.s32.totalorder %s30, 0
      %p177 = por %p175, %p176
      %p178 = scmp.ne.s32.totalorder %s166, %s167
      %p179 = scmp.eq.s32.totalorder %s31, 1
      %p180 = por %p178, %p179
      %p182 = scmp.ne.s32.totalorder %s167, %s181
      %p183 = scmp.eq.s32.totalorder %s31, 0
      %p184 = por %p182, %p183
      %s186 = sadd.s32 %s185, 1
      %p189 = scmp.eq.s32.totalorder %s25, 1
      %p190 = scmp.ne.s32.totalorder %s185, %s187
      %p191 = scmp.eq.s32.totalorder %s25, 0
      %p192 = por %p190, %p191
      %p193 = scmp.ne.s32.totalorder %s185, %s187
      %p194 = scmp.eq.s32.totalorder %s30, 1
      %p195 = por %p193, %p194
      %p196 = scmp.ne.s32.totalorder %s187, %s188
      %p197 = scmp.eq.s32.totalorder %s30, 0
      %p198 = por %p196, %p197
      %p199 = scmp.ne.s32.totalorder %s187, %s188
      %p200 = scmp.eq.s32.totalorder %s31, 1
      %p201 = por %p199, %p200
      %p203 = scmp.ne.s32.totalorder %s188, %s202
      %p204 = scmp.eq.s32.totalorder %s31, 0
      %p205 = por %p203, %p204
      %s207 = sadd.s32 %s206, 1
      %p210 = scmp.eq.s32.totalorder %s25, 1
      %p211 = scmp.ne.s32.totalorder %s206, %s208
      %p212 = scmp.eq.s32.totalorder %s25, 0
      %p213 = por %p211, %p212
      %p214 = scmp.ne.s32.totalorder %s206, %s208
      %p215 = scmp.eq.s32.totalorder %s30, 1
      %p216 = por %p214, %p215
      %p217 = scmp.ne.s32.totalorder %s208, %s209
      %p218 = scmp.eq.s32.totalorder %s30, 0
      %p219 = por %p217, %p218
      %p220 = scmp.ne.s32.totalorder %s208, %s209
      %p221 = scmp.eq.s32.totalorder %s31, 1
      %p222 = por %p220, %p221
      %p224 = scmp.ne.s32.totalorder %s209, %s223
      %p225 = scmp.eq.s32.totalorder %s31, 0
      %p226 = por %p224, %p225
      %s227 = ssub.s32 %s25, %s32
      %p228 = scmp.eq.s32.totalorder %s227, 0
      %s230 = sadd.s32 %s229, 1
      %s231 = scalar_select %p228, %s229, %s230
      %p234 = pneg %p228
      %p235 = scmp.eq.s32.totalorder %s25, 1
      %p236 = por %p234, %p235
      %p237 = scmp.ne.s32.totalorder %s229, %s232
      %p238 = scmp.eq.s32.totalorder %s25, 0
      %p239 = por %p237, %p238
      %p240 = scmp.ne.s32.totalorder %s229, %s232
      %p241 = scmp.eq.s32.totalorder %s30, 1
      %p242 = por %p240, %p241
      %p243 = scmp.ne.s32.totalorder %s232, %s233
      %p244 = scmp.eq.s32.totalorder %s30, 0
      %p245 = por %p243, %p244
      %p246 = scmp.ne.s32.totalorder %s232, %s233
      %p247 = scmp.eq.s32.totalorder %s31, 1
      %p248 = por %p246, %p247
      %p250 = scmp.ne.s32.totalorder %s233, %s249
      %p251 = scmp.eq.s32.totalorder %s31, 0
      %p252 = por %p250, %p251
      %p253 = scmp.le.s32.totalorder 1, %s25
      %p254 = scmp.lt.s32.totalorder %s25, 3
      %p255 = pnand %p253, %p254
      %p256 = pneg %p255
      // Predicated region
      $region9: #{tpu_custom_call.1} parent=5 // pred_check
        _
      $region10: #{tpu_custom_call.1} parent=5 // pred_check_branch
        %258 = sbr.rel (%p255) target = $region12
      $region11: #{tpu_custom_call.1} parent=5 // pred_region
        %s259 = ssub.s32 %s25, 1
        // Predicated region
        $region13: #{tpu_custom_call.1} parent=11 // pred_check
          %p260 = pneg %p72
        $region14: #{tpu_custom_call.1} parent=11 // pred_check_branch
          %262 = sbr.rel (%p260) target = $region16
        $region15: #{tpu_custom_call.1} parent=11 // pred_region
          %s264 = ssub.s32 512, 512
          %265 = vsyncadd [#allocation6], %s264
          %s266 = sshll.u32 [#allocation5], 4
          %s267 = int_to_ptr.vmem [resolvable:$true] %s266
          %272 = dma.hbm_to_vmem [thread:$0]  %s1, 512, %s267, [#allocation6], 256, 256, 16
        $region16: #{tpu_custom_call.1} parent=11 // pred_fallthru
          _
        // Predicated region
        $region17: #{tpu_custom_call.1} parent=11 // pred_check
          %p273 = pneg %p93
        $region18: #{tpu_custom_call.1} parent=11 // pred_check_branch
          %275 = sbr.rel (%p273) target = $region20
        $region19: #{tpu_custom_call.1} parent=11 // pred_region
          %s277 = ssub.s32 128, 128
          %278 = vsyncadd [#allocation6], %s277
          %s280 = sshll.u32 [#allocation7], 4
          %s281 = int_to_ptr.vmem [resolvable:$true] %s280
          %283 = dma.hbm_to_vmem [thread:$0]  %s2, 128, %s281, [#allocation6]
        $region20: #{tpu_custom_call.1} parent=11 // pred_fallthru
          _
        // Predicated region
        $region21: #{tpu_custom_call.1} parent=11 // pred_check
          %p284 = pneg %p114
        $region22: #{tpu_custom_call.1} parent=11 // pred_check_branch
          %286 = sbr.rel (%p284) target = $region24
        $region23: #{tpu_custom_call.1} parent=11 // pred_region
          %s288 = ssub.s32 64, 64
          %289 = vsyncadd [#allocation9], %s288
          %s291 = sshll.u32 [#allocation8], 4
          %s292 = int_to_ptr.vmem [resolvable:$true] %s291
          %294 = dma.hbm_to_vmem [thread:$0]  %s3, 64, %s292, [#allocation9]
        $region24: #{tpu_custom_call.1} parent=11 // pred_fallthru
          _
        // Predicated region
        $region25: #{tpu_custom_call.1} parent=11 // pred_check
          %p295 = pneg %p135
        $region26: #{tpu_custom_call.1} parent=11 // pred_check_branch
          %297 = sbr.rel (%p295) target = $region28
        $region27: #{tpu_custom_call.1} parent=11 // pred_region
          %s299 = ssub.s32 64, 64
          %300 = vsyncadd [#allocation9], %s299
          %s302 = sshll.u32 [#allocation10], 4
          %s303 = int_to_ptr.vmem [resolvable:$true] %s302
          %305 = dma.hbm_to_vmem [thread:$0]  %s4, 64, %s303, [#allocation9]
        $region28: #{tpu_custom_call.1} parent=11 // pred_fallthru
          _
        // Predicated region
        $region29: #{tpu_custom_call.1} parent=11 // pred_check
          %p306 = pneg %p156
        $region30: #{tpu_custom_call.1} parent=11 // pred_check_branch
          %308 = sbr.rel (%p306) target = $region32
        $region31: #{tpu_custom_call.1} parent=11 // pred_region
          %s310 = ssub.s32 65536, 65536
          %311 = vsyncadd [#allocation12], %s310
          %s312 = sshll.u32 [#allocation11], 4
          %s313 = int_to_ptr.vmem [resolvable:$true] %s312
          %318 = dma.hbm_to_vmem [thread:$0]  %s5, 65536, %s313, [#allocation12], 64, 64, 4
        $region32: #{tpu_custom_call.1} parent=11 // pred_fallthru
          _
        // Predicated region
        $region33: #{tpu_custom_call.1} parent=11 // pred_check
          %p319 = pneg %p177
        $region34: #{tpu_custom_call.1} parent=11 // pred_check_branch
          %321 = sbr.rel (%p319) target = $region36
        $region35: #{tpu_custom_call.1} parent=11 // pred_region
          %s323 = ssub.s32 16, 16
          %324 = vsyncadd [#allocation12], %s323
          %s326 = sshll.u32 [#allocation13], 4
          %s327 = int_to_ptr.vmem [resolvable:$true] %s326
          %329 = dma.hbm_to_vmem [thread:$0]  %s6, 16, %s327, [#allocation12]
        $region36: #{tpu_custom_call.1} parent=11 // pred_fallthru
          _
        // Predicated region
        $region37: #{tpu_custom_call.1} parent=11 // pred_check
          %p330 = pneg %p198
        $region38: #{tpu_custom_call.1} parent=11 // pred_check_branch
          %332 = sbr.rel (%p330) target = $region40
        $region39: #{tpu_custom_call.1} parent=11 // pred_region
          %s334 = ssub.s32 1024, 1024
          %335 = vsyncadd [#allocation15], %s334
          %s336 = sshll.u32 [#allocation14], 4
          %s337 = int_to_ptr.vmem [resolvable:$true] %s336
          %342 = dma.hbm_to_vmem [thread:$0]  %s7, 1024, %s337, [#allocation15], 64, 64, 4
        $region40: #{tpu_custom_call.1} parent=11 // pred_fallthru
          _
        // Predicated region
        $region41: #{tpu_custom_call.1} parent=11 // pred_check
          %p343 = pneg %p219
        $region42: #{tpu_custom_call.1} parent=11 // pred_check_branch
          %345 = sbr.rel (%p343) target = $region44
        $region43: #{tpu_custom_call.1} parent=11 // pred_region
          %s347 = ssub.s32 16, 16
          %348 = vsyncadd [#allocation15], %s347
          %s350 = sshll.u32 [#allocation16], 4
          %s351 = int_to_ptr.vmem [resolvable:$true] %s350
          %353 = dma.hbm_to_vmem [thread:$0]  %s8, 16, %s351, [#allocation15]
        $region44: #{tpu_custom_call.1} parent=11 // pred_fallthru
          _
      $region12: #{tpu_custom_call.1} parent=5 // pred_fallthru
        _
      %p354 = scmp.lt.s32.totalorder %s25, 2
      // Predicated region
      $region45: #{tpu_custom_call.1} parent=5 // pred_check
        %p355 = pneg %p354
      $region46: #{tpu_custom_call.1} parent=5 // pred_check_branch
        %357 = sbr.rel (%p355) target = $region48
      $region47: #{tpu_custom_call.1} parent=5 // pred_region
        // Predicated region
        $region49: #{tpu_custom_call.1} parent=47 // pred_check
          %p358 = pneg %p45
        $region50: #{tpu_custom_call.1} parent=47 // pred_check_branch
          %360 = sbr.rel (%p358) target = $region52
        $region51: #{tpu_custom_call.1} parent=47 // pred_region
          %s361 = sand.u32 %s35, 1
          %s362 = scalar_lea.sflag [#allocation3], %s361
          %s363 = sand.u32 %s35, 1
          %s364 = smul.addr %s363, 16
          %s365 = scalar_lea.vmem [#allocation2], %s364
          %s366 = smul.u32 2, %s25
          %s368 = ssub.s32 256, 256
          %369 = vsyncadd %s362, %s368
          %s370 = smul.addr %s366, 2
          %s371 = smul.addr %s370, 64
          %s372 = scalar_lea.hbm %s0, %s371
          %s373 = sshll.u32 %s365, 4
          %s374 = int_to_ptr.vmem [resolvable:$true] %s373
          %379 = dma.hbm_to_vmem [thread:$0]  %s372, 256, %s374, %s362, 128, 128, 8
        $region52: #{tpu_custom_call.1} parent=47 // pred_fallthru
          _
      $region48: #{tpu_custom_call.1} parent=5 // pred_fallthru
        _
      %p380 = scmp.le.s32.totalorder 1, %s25
      %p381 = scmp.lt.s32.totalorder %s25, 3
      %p382 = pnand %p380, %p381
      %p383 = pneg %p382
      // Predicated region
      $region53: #{tpu_custom_call.1} parent=5 // pred_check
        _
      $region54: #{tpu_custom_call.1} parent=5 // pred_check_branch
        %385 = sbr.rel (%p382) target = $region56
      $region55: #{tpu_custom_call.1} parent=5 // pred_region
        %s386 = ssub.s32 %s25, 1
        %s387 = sand.u32 %s38, 1
        %s388 = scalar_lea.sflag [#allocation3], %s387
        %s389 = sand.u32 %s38, 1
        %s390 = smul.addr %s389, 16
        %s391 = scalar_lea.vmem [#allocation2], %s390
        // Predicated region
        $region57: #{tpu_custom_call.1} parent=55 // pred_check
          %p392 = pneg %p51
        $region58: #{tpu_custom_call.1} parent=55 // pred_check_branch
          %394 = sbr.rel (%p392) target = $region60
        $region59: #{tpu_custom_call.1} parent=55 // pred_region
          %395 = dma.done %s388, 256
        $region60: #{tpu_custom_call.1} parent=55 // pred_fallthru
          _
        // Predicated region
        $region61: #{tpu_custom_call.1} parent=55 // pred_check
          %p396 = pneg %p72
        $region62: #{tpu_custom_call.1} parent=55 // pred_check_branch
          %398 = sbr.rel (%p396) target = $region64
        $region63: #{tpu_custom_call.1} parent=55 // pred_region
          %399 = dma.done [#allocation6], 512
        $region64: #{tpu_custom_call.1} parent=55 // pred_fallthru
          _
        // Predicated region
        $region65: #{tpu_custom_call.1} parent=55 // pred_check
          %p400 = pneg %p93
        $region66: #{tpu_custom_call.1} parent=55 // pred_check_branch
          %402 = sbr.rel (%p400) target = $region68
        $region67: #{tpu_custom_call.1} parent=55 // pred_region
          %403 = dma.done [#allocation6], 128
        $region68: #{tpu_custom_call.1} parent=55 // pred_fallthru
          _
        // Predicated region
        $region69: #{tpu_custom_call.1} parent=55 // pred_check
          %p404 = pneg %p114
        $region70: #{tpu_custom_call.1} parent=55 // pred_check_branch
          %406 = sbr.rel (%p404) target = $region72
        $region71: #{tpu_custom_call.1} parent=55 // pred_region
          %407 = dma.done [#allocation9], 64
        $region72: #{tpu_custom_call.1} parent=55 // pred_fallthru
          _
        // Predicated region
        $region73: #{tpu_custom_call.1} parent=55 // pred_check
          %p408 = pneg %p135
        $region74: #{tpu_custom_call.1} parent=55 // pred_check_branch
          %410 = sbr.rel (%p408) target = $region76
        $region75: #{tpu_custom_call.1} parent=55 // pred_region
          %411 = dma.done [#allocation9], 64
        $region76: #{tpu_custom_call.1} parent=55 // pred_fallthru
          _
        // Predicated region
        $region77: #{tpu_custom_call.1} parent=55 // pred_check
          %p412 = pneg %p156
        $region78: #{tpu_custom_call.1} parent=55 // pred_check_branch
          %414 = sbr.rel (%p412) target = $region80
        $region79: #{tpu_custom_call.1} parent=55 // pred_region
          %415 = dma.done [#allocation12], 65536
        $region80: #{tpu_custom_call.1} parent=55 // pred_fallthru
          _
        // Predicated region
        $region81: #{tpu_custom_call.1} parent=55 // pred_check
          %p416 = pneg %p177
        $region82: #{tpu_custom_call.1} parent=55 // pred_check_branch
          %418 = sbr.rel (%p416) target = $region84
        $region83: #{tpu_custom_call.1} parent=55 // pred_region
          %419 = dma.done [#allocation12], 16
        $region84: #{tpu_custom_call.1} parent=55 // pred_fallthru
          _
        // Predicated region
        $region85: #{tpu_custom_call.1} parent=55 // pred_check
          %p420 = pneg %p198
        $region86: #{tpu_custom_call.1} parent=55 // pred_check_branch
          %422 = sbr.rel (%p420) target = $region88
        $region87: #{tpu_custom_call.1} parent=55 // pred_region
          %423 = dma.done [#allocation15], 1024
        $region88: #{tpu_custom_call.1} parent=55 // pred_fallthru
          _
        // Predicated region
        $region89: #{tpu_custom_call.1} parent=55 // pred_check
          %p424 = pneg %p219
        $region90: #{tpu_custom_call.1} parent=55 // pred_check_branch
          %426 = sbr.rel (%p424) target = $region92
        $region91: #{tpu_custom_call.1} parent=55 // pred_region
          %427 = dma.done [#allocation15], 16
        $region92: #{tpu_custom_call.1} parent=55 // pred_fallthru
          _
        %s428 = sand.u32 %s38, 1
        %s429 = scalar_lea.sflag [#allocation3], %s428
        %s430 = sand.u32 %s38, 1
        %s431 = smul.addr %s430, 16
        %s432 = scalar_lea.vmem [#allocation2], %s431
        %p433 = pneg %p51
        %p434 = pneg %p48
        %p435 = pneg %p72
        %p436 = pneg %p69
        %p437 = pneg %p93
        %p438 = pneg %p90
        %p439 = pneg %p114
        %p440 = pneg %p111
        %p441 = pneg %p135
        %p442 = pneg %p132
        %p443 = pneg %p156
        %p444 = pneg %p153
        %p445 = pneg %p177
        %p446 = pneg %p174
        %p447 = pneg %p198
        %p448 = pneg %p195
        %p449 = pneg %p219
        %p450 = pneg %p216
        %p451 = pneg %p245
        %p452 = pneg %p242
        %s453 = sand.u32 %s232, 1
        %s454 = scalar_lea.sflag [#allocation4], %s453
        %s455 = sand.u32 %s232, 1
        %s456 = smul.addr %s455, 2
        %s457 = scalar_lea.vmem [#allocation17], %s456
        %s458 = smul.u32 2, %s30
        %v460 = vld [vmem:[%s391] sm:$0xff]
        %v461 = vld [vmem:[%s391 + $0x8] sm:$0xff]
        %v462 = vld [vmem:[#allocation5] sm:$0xff]
        %v463 = vld [vmem:[#allocation5 + $0x8] sm:$0xff]
        %v464 = vld [vmem:[#allocation5 + $0x10] sm:$0xff]
        %v465 = vld [vmem:[#allocation5 + $0x18] sm:$0xff]
        %v467 = vcombine.high %v460, %v460
        %469 = vmatprep.subr.mxu0 %v467
        %470 = vmatpush1.xpose.msra.mxu0 %v460
        %471 = vmatprep.subr.mxu0 0.0
        %472 = vmatpush1.xpose.msra.mxu0 0.0
        %473 = vmatprep.subr.mxu0 0.0
        %474 = vmatpush1.xpose.msra.mxu0 0.0
        %475 = vmatprep.subr.mxu0 0.0
        %476 = vmatpush1.xpose.msra.mxu0 0.0
        %477 = vmatprep.subr.mxu0 0.0
        %478 = vmatpush1.xpose.msra.mxu0 0.0
        %479 = vmatprep.subr.mxu0 0.0
        %480 = vmatpush1.xpose.msra.mxu0 0.0
        %481 = vmatprep.subr.mxu0 0.0
        %482 = vmatpush1.xpose.msra.mxu0 0.0
        %483 = vmatprep.subr.mxu0 0.0
        %484 = vmatpush1.xpose.msra.mxu0 0.0
        %485 = vmatprep.subr.mxu0 0.0
        %486 = vmatpush1.xpose.msra.mxu0 0.0
        %487 = vmatprep.subr.mxu0 0.0
        %488 = vmatpush1.xpose.msra.mxu0 0.0
        %489 = vmatprep.subr.mxu0 0.0
        %490 = vmatpush1.xpose.msra.mxu0 0.0
        %491 = vmatprep.subr.mxu0 0.0
        %492 = vmatpush1.xpose.msra.mxu0 0.0
        %493 = vmatprep.subr.mxu0 0.0
        %494 = vmatpush1.xpose.msra.mxu0 0.0
        %495 = vmatprep.subr.mxu0 0.0
        %496 = vmatpush1.xpose.msra.mxu0 0.0
        %497 = vmatprep.subr.mxu0 0.0
        %498 = vmatpush1.xpose.msra.mxu0 0.0
        %499 = vmatprep.subr.mxu0 0.0
        %500 = vmatpush1.xpose.msra.mxu0 0.0
        %501 = vmatprep.subr.mxu0 0.0
        %502 = vmatpush1.xpose.msra.mxu0 0.0
        %503 = vmatprep.subr.mxu0 0.0
        %504 = vmatpush1.xpose.msra.mxu0 0.0
        %505 = vmatprep.subr.mxu0 0.0
        %506 = vmatpush1.xpose.msra.mxu0 0.0
        %507 = vmatprep.subr.mxu0 0.0
        %508 = vmatpush1.xpose.msra.mxu0 0.0
        %509 = vmatprep.subr.mxu0 0.0
        %510 = vmatpush1.xpose.msra.mxu0 0.0
        %511 = vmatprep.subr.mxu0 0.0
        %512 = vmatpush1.xpose.msra.mxu0 0.0
        %513 = vmatprep.subr.mxu0 0.0
        %514 = vmatpush1.xpose.msra.mxu0 0.0
        %515 = vmatprep.subr.mxu0 0.0
        %516 = vmatpush1.xpose.msra.mxu0 0.0
        %517 = vmatprep.subr.mxu0 0.0
        %518 = vmatpush1.xpose.msra.mxu0 0.0
        %519 = vmatprep.subr.mxu0 0.0
        %520 = vmatpush1.xpose.msra.mxu0 0.0
        %521 = vmatprep.subr.mxu0 0.0
        %522 = vmatpush1.xpose.msra.mxu0 0.0
        %523 = vmatprep.subr.mxu0 0.0
        %524 = vmatpush1.xpose.msra.mxu0 0.0
        %525 = vmatprep.subr.mxu0 0.0
        %526 = vmatpush1.xpose.msra.mxu0 0.0
        %527 = vmatprep.subr.mxu0 0.0
        %528 = vmatpush1.xpose.msra.mxu0 0.0
        %529 = vmatprep.subr.mxu0 0.0
        %530 = vmatpush1.xpose.msra.mxu0 0.0
        %531 = vmatprep.subr.mxu0 0.0
        %532 = vmatpush1.xpose.msra.mxu0 0.0
        %533 = vmatprep.mubr.f32.mxu0 %v463
        %534 = vmatmul.mubr.f32.gmra.mrb[0].mxu0 %v462
        %v535 = vpop.f32.mrb[0].mxu0
        %v536 = vadd.f32 0.0, %v535
        %v537 = vpop.f32.mrb[0].mxu0
        %538 = vmatprep.mubr.f32.mxu0 %v465
        %539 = vmatmul.mubr.f32.gmra.mrb[0].mxu0 %v464
        %v540 = vpop.f32.mrb[0].mxu0
        %v541 = vadd.f32 0.0, %v540
        %v542 = vpop.f32.mrb[0].mxu0
        %543 = vdwg.mxu0
        %v545 = vcombine.high %v461, %v461
        %547 = vmatprep.subr.mxu0 %v545
        %548 = vmatpush1.xpose.msra.mxu0 %v461
        %549 = vmatprep.subr.mxu0 0.0
        %550 = vmatpush1.xpose.msra.mxu0 0.0
        %551 = vmatprep.subr.mxu0 0.0
        %552 = vmatpush1.xpose.msra.mxu0 0.0
        %553 = vmatprep.subr.mxu0 0.0
        %554 = vmatpush1.xpose.msra.mxu0 0.0
        %555 = vmatprep.subr.mxu0 0.0
        %556 = vmatpush1.xpose.msra.mxu0 0.0
        %557 = vmatprep.subr.mxu0 0.0
        %558 = vmatpush1.xpose.msra.mxu0 0.0
        %559 = vmatprep.subr.mxu0 0.0
        %560 = vmatpush1.xpose.msra.mxu0 0.0
        %561 = vmatprep.subr.mxu0 0.0
        %562 = vmatpush1.xpose.msra.mxu0 0.0
        %563 = vmatprep.subr.mxu0 0.0
        %564 = vmatpush1.xpose.msra.mxu0 0.0
        %565 = vmatprep.subr.mxu0 0.0
        %566 = vmatpush1.xpose.msra.mxu0 0.0
        %567 = vmatprep.subr.mxu0 0.0
        %568 = vmatpush1.xpose.msra.mxu0 0.0
        %569 = vmatprep.subr.mxu0 0.0
        %570 = vmatpush1.xpose.msra.mxu0 0.0
        %571 = vmatprep.subr.mxu0 0.0
        %572 = vmatpush1.xpose.msra.mxu0 0.0
        %573 = vmatprep.subr.mxu0 0.0
        %574 = vmatpush1.xpose.msra.mxu0 0.0
        %575 = vmatprep.subr.mxu0 0.0
        %576 = vmatpush1.xpose.msra.mxu0 0.0
        %577 = vmatprep.subr.mxu0 0.0
        %578 = vmatpush1.xpose.msra.mxu0 0.0
        %579 = vmatprep.subr.mxu0 0.0
        %580 = vmatpush1.xpose.msra.mxu0 0.0
        %581 = vmatprep.subr.mxu0 0.0
        %582 = vmatpush1.xpose.msra.mxu0 0.0
        %583 = vmatprep.subr.mxu0 0.0
        %584 = vmatpush1.xpose.msra.mxu0 0.0
        %585 = vmatprep.subr.mxu0 0.0
        %586 = vmatpush1.xpose.msra.mxu0 0.0
        %587 = vmatprep.subr.mxu0 0.0
        %588 = vmatpush1.xpose.msra.mxu0 0.0
        %589 = vmatprep.subr.mxu0 0.0
        %590 = vmatpush1.xpose.msra.mxu0 0.0
        %591 = vmatprep.subr.mxu0 0.0
        %592 = vmatpush1.xpose.msra.mxu0 0.0
        %593 = vmatprep.subr.mxu0 0.0
        %594 = vmatpush1.xpose.msra.mxu0 0.0
        %595 = vmatprep.subr.mxu0 0.0
        %596 = vmatpush1.xpose.msra.mxu0 0.0
        %597 = vmatprep.subr.mxu0 0.0
        %598 = vmatpush1.xpose.msra.mxu0 0.0
        %599 = vmatprep.subr.mxu0 0.0
        %600 = vmatpush1.xpose.msra.mxu0 0.0
        %601 = vmatprep.subr.mxu0 0.0
        %602 = vmatpush1.xpose.msra.mxu0 0.0
        %603 = vmatprep.subr.mxu0 0.0
        %604 = vmatpush1.xpose.msra.mxu0 0.0
        %605 = vmatprep.subr.mxu0 0.0
        %606 = vmatpush1.xpose.msra.mxu0 0.0
        %607 = vmatprep.subr.mxu0 0.0
        %608 = vmatpush1.xpose.msra.mxu0 0.0
        %609 = vmatprep.subr.mxu0 0.0
        %610 = vmatpush1.xpose.msra.mxu0 0.0
        %611 = vmatprep.mubr.f32.mxu0 %v463
        %612 = vmatmul.mubr.f32.gmra.mrb[0].mxu0 %v462
        %v613 = vpop.f32.mrb[0].mxu0
        %v614 = vadd.f32 0.0, %v613
        %v615 = vpop.f32.mrb[0].mxu0
        %616 = vmatprep.mubr.f32.mxu0 %v465
        %617 = vmatmul.mubr.f32.gmra.mrb[0].mxu0 %v464
        %v618 = vpop.f32.mrb[0].mxu0
        %v619 = vadd.f32 0.0, %v618
        %v620 = vpop.f32.mrb[0].mxu0
        %621 = vdwg.mxu0
        %v622 = vpack.c.bf16 %v541, %v536
        %v623 = vpack.c.bf16 %v619, %v614
        %v624 = vld [vmem:[#allocation7] sm:$0xff]
        %v626 = vcombine.high %v624, %v624
        %v628 = vunpack.c.l.s4 1983009808
        %v629 = vunpack.c.0.s8 %v628
        %v630 = vlaneseq
        %v631 = vshrl.u32 %v630, 7
        %v632 = vsub.s32 %v629, %v631
        %v633 = vrot.slane %v624, %v632
        %v635 = vunpack.c.l.s4 1983009808
        %v636 = vunpack.c.0.s8 %v635
        %v637 = vlaneseq
        %v638 = vshrl.u32 %v637, 7
        %v639 = vsub.s32 %v636, %v638
        %v640 = vrot.slane %v626, %v639
        %v641 = vcombine.high %v633, %v633
        %v642 = vcombine.high %v640, %v640
        %vm643 = vcmask 31744
        %v645 = vsel %vm643, %v622, 0
        %v648 = vsel %vm643, %v623, 0
        %vm650 = vcmask 1041408
        %v652 = vsel %vm650, %v633, 0
        %v655 = vsel %vm650, %v641, 0
        %v658 = vsel %vm650, %v640, 0
        %v661 = vsel %vm650, %v642, 0
        %663 = vmatprep.subr.bf16.mxu0 %v655
        %664 = vmatpush1.bf16.msra.mxu0 %v652
        %665 = vmatprep.subr.bf16.mxu0 0
        %666 = vmatpush1.bf16.msra.mxu0 0
        %667 = vmatprep.subr.bf16.mxu0 0
        %668 = vmatpush1.bf16.msra.mxu0 0
        %669 = vmatprep.subr.bf16.mxu0 0
        %670 = vmatpush1.bf16.msra.mxu0 0
        %671 = vmatprep.subr.bf16.mxu0 0
        %672 = vmatpush1.bf16.msra.mxu0 0
        %673 = vmatprep.subr.bf16.mxu0 0
        %674 = vmatpush1.bf16.msra.mxu0 0
        %675 = vmatprep.subr.bf16.mxu0 0
        %676 = vmatpush1.bf16.msra.mxu0 0
        %677 = vmatprep.subr.bf16.mxu0 0
        %678 = vmatpush1.bf16.msra.mxu0 0
        %679 = vmatprep.subr.bf16.mxu0 0
        %680 = vmatpush1.bf16.msra.mxu0 0
        %681 = vmatprep.subr.bf16.mxu0 0
        %682 = vmatpush1.bf16.msra.mxu0 0
        %683 = vmatprep.subr.bf16.mxu0 0
        %684 = vmatpush1.bf16.msra.mxu0 0
        %685 = vmatprep.subr.bf16.mxu0 0
        %686 = vmatpush1.bf16.msra.mxu0 0
        %687 = vmatprep.subr.bf16.mxu0 0
        %688 = vmatpush1.bf16.msra.mxu0 0
        %689 = vmatprep.subr.bf16.mxu0 0
        %690 = vmatpush1.bf16.msra.mxu0 0
        %691 = vmatprep.subr.bf16.mxu0 0
        %692 = vmatpush1.bf16.msra.mxu0 0
        %693 = vmatprep.subr.bf16.mxu0 0
        %694 = vmatpush1.bf16.msra.mxu0 0
        %695 = vmatprep.mubr.bf16.mxu0 0
        %696 = vmatmul.mubr.bf16.gmra.mrb[0].mxu0 %v645
        %v697 = vpop.f32.mrb[0].mxu0
        %v698 = vadd.f32 0.0, %v697
        %v699 = vpop.f32.mrb[0].mxu0
        %v700 = vadd.f32 0.0, %v699
        %v701 = vpop.f32.mrb[0].mxu0
        %v702 = vadd.f32 0.0, %v701
        %v703 = vpop.f32.mrb[0].mxu0
        %v704 = vadd.f32 0.0, %v703
        %705 = vmatprep.mubr.bf16.mxu0 0
        %706 = vmatmul.mubr.bf16.gmra.mrb[0].mxu0 %v648
        %v707 = vpop.f32.mrb[0].mxu0
        %v708 = vadd.f32 0.0, %v707
        %v709 = vpop.f32.mrb[0].mxu0
        %v710 = vadd.f32 0.0, %v709
        %v711 = vpop.f32.mrb[0].mxu0
        %v712 = vadd.f32 0.0, %v711
        %v713 = vpop.f32.mrb[0].mxu0
        %v714 = vadd.f32 0.0, %v713
        %715 = vdwg.mxu0
        %716 = vmatprep.subr.bf16.mxu0 %v661
        %717 = vmatpush1.bf16.msra.mxu0 %v658
        %718 = vmatprep.subr.bf16.mxu0 0
        %719 = vmatpush1.bf16.msra.mxu0 0
        %720 = vmatprep.subr.bf16.mxu0 0
        %721 = vmatpush1.bf16.msra.mxu0 0
        %722 = vmatprep.subr.bf16.mxu0 0
        %723 = vmatpush1.bf16.msra.mxu0 0
        %724 = vmatprep.subr.bf16.mxu0 0
        %725 = vmatpush1.bf16.msra.mxu0 0
        %726 = vmatprep.subr.bf16.mxu0 0
        %727 = vmatpush1.bf16.msra.mxu0 0
        %728 = vmatprep.subr.bf16.mxu0 0
        %729 = vmatpush1.bf16.msra.mxu0 0
        %730 = vmatprep.subr.bf16.mxu0 0
        %731 = vmatpush1.bf16.msra.mxu0 0
        %732 = vmatprep.subr.bf16.mxu0 0
        %733 = vmatpush1.bf16.msra.mxu0 0
        %734 = vmatprep.subr.bf16.mxu0 0
        %735 = vmatpush1.bf16.msra.mxu0 0
        %736 = vmatprep.subr.bf16.mxu0 0
        %737 = vmatpush1.bf16.msra.mxu0 0
        %738 = vmatprep.subr.bf16.mxu0 0
        %739 = vmatpush1.bf16.msra.mxu0 0
        %740 = vmatprep.subr.bf16.mxu0 0
        %741 = vmatpush1.bf16.msra.mxu0 0
        %742 = vmatprep.subr.bf16.mxu0 0
        %743 = vmatpush1.bf16.msra.mxu0 0
        %744 = vmatprep.subr.bf16.mxu0 0
        %745 = vmatpush1.bf16.msra.mxu0 0
        %746 = vmatprep.subr.bf16.mxu0 0
        %747 = vmatpush1.bf16.msra.mxu0 0
        %748 = vmatprep.mubr.bf16.mxu0 0
        %749 = vmatmul.mubr.bf16.gmra.mrb[0].mxu0 %v645
        %v750 = vpop.f32.mrb[0].mxu0
        %v751 = vadd.f32 0.0, %v750
        %v752 = vpop.f32.mrb[0].mxu0
        %v753 = vadd.f32 0.0, %v752
        %v754 = vpop.f32.mrb[0].mxu0
        %v755 = vadd.f32 0.0, %v754
        %v756 = vpop.f32.mrb[0].mxu0
        %v757 = vadd.f32 0.0, %v756
        %758 = vmatprep.mubr.bf16.mxu0 0
        %759 = vmatmul.mubr.bf16.gmra.mrb[0].mxu0 %v648
        %v760 = vpop.f32.mrb[0].mxu0
        %v761 = vadd.f32 0.0, %v760
        %v762 = vpop.f32.mrb[0].mxu0
        %v763 = vadd.f32 0.0, %v762
        %v764 = vpop.f32.mrb[0].mxu0
        %v765 = vadd.f32 0.0, %v764
        %v766 = vpop.f32.mrb[0].mxu0
        %v767 = vadd.f32 0.0, %v766
        %768 = vdwg.mxu0
        %v769 = vld [vmem:[#allocation8] sm:$0xf]
        %v771 = vlaneseq
        %v772 = vshrl.u32 %v771, 7
        %v773 = vsub.s32 0, %v772
        %v774 = vrot.slane %v769, %v773
        %v775 = vlaneseq
        %v776 = vshrl.u32 %v775, 7
        %v777 = vsub.s32 1, %v776
        %v778 = vrot.slane %v769, %v777
        %v779 = vlaneseq
        %v780 = vshrl.u32 %v779, 7
        %v781 = vsub.s32 2, %v780
        %v782 = vrot.slane %v769, %v781
        %v783 = vlaneseq
        %v784 = vshrl.u32 %v783, 7
        %v785 = vsub.s32 3, %v784
        %v786 = vrot.slane %v769, %v785
        %v791 = vmul.f32 %v698, %v774
        %v792 = vmul.f32 %v700, %v778
        %v793 = vmul.f32 %v751, %v782
        %v794 = vmul.f32 %v753, %v786
        %v795 = vmul.f32 %v702, %v774
        %v796 = vmul.f32 %v704, %v778
        %v797 = vmul.f32 %v755, %v782
        %v798 = vmul.f32 %v757, %v786
        %v799 = vmul.f32 %v708, %v774
        %v800 = vmul.f32 %v710, %v778
        %v801 = vmul.f32 %v761, %v782
        %v802 = vmul.f32 %v763, %v786
        %v803 = vmul.f32 %v712, %v774
        %v804 = vmul.f32 %v714, %v778
        %v805 = vmul.f32 %v765, %v782
        %v806 = vmul.f32 %v767, %v786
        %v807 = vld [vmem:[#allocation10] sm:$0xf]
        %v809 = vlaneseq
        %v810 = vshrl.u32 %v809, 7
        %v811 = vsub.s32 0, %v810
        %v812 = vrot.slane %v807, %v811
        %v813 = vlaneseq
        %v814 = vshrl.u32 %v813, 7
        %v815 = vsub.s32 1, %v814
        %v816 = vrot.slane %v807, %v815
        %v817 = vlaneseq
        %v818 = vshrl.u32 %v817, 7
        %v819 = vsub.s32 2, %v818
        %v820 = vrot.slane %v807, %v819
        %v821 = vlaneseq
        %v822 = vshrl.u32 %v821, 7
        %v823 = vsub.s32 3, %v822
        %v824 = vrot.slane %v807, %v823
        %v829 = vadd.f32 %v791, %v812
        %v830 = vadd.f32 %v792, %v816
        %v831 = vadd.f32 %v793, %v820
        %v832 = vadd.f32 %v794, %v824
        %v833 = vadd.f32 %v795, %v812
        %v834 = vadd.f32 %v796, %v816
        %v835 = vadd.f32 %v797, %v820
        %v836 = vadd.f32 %v798, %v824
        %v837 = vadd.f32 %v799, %v812
        %v838 = vadd.f32 %v800, %v816
        %v839 = vadd.f32 %v801, %v820
        %v840 = vadd.f32 %v802, %v824
        %v841 = vadd.f32 %v803, %v812
        %v842 = vadd.f32 %v804, %v816
        %v843 = vadd.f32 %v805, %v820
        %v844 = vadd.f32 %v806, %v824
        %v845 = vmax.f32 %v829, 0.0
        %v846 = vmax.f32 %v830, 0.0
        %v847 = vmax.f32 %v831, 0.0
        %v848 = vmax.f32 %v832, 0.0
        %v849 = vmax.f32 %v833, 0.0
        %v850 = vmax.f32 %v834, 0.0
        %v851 = vmax.f32 %v835, 0.0
        %v852 = vmax.f32 %v836, 0.0
        %v853 = vmax.f32 %v837, 0.0
        %v854 = vmax.f32 %v838, 0.0
        %v855 = vmax.f32 %v839, 0.0
        %v856 = vmax.f32 %v840, 0.0
        %v857 = vmax.f32 %v841, 0.0
        %v858 = vmax.f32 %v842, 0.0
        %v859 = vmax.f32 %v843, 0.0
        %v860 = vmax.f32 %v844, 0.0
        %v861 = vpack.c.bf16 %v849, %v845
        %v862 = vpack.c.bf16 %v850, %v846
        %v863 = vpack.c.bf16 %v851, %v847
        %v864 = vpack.c.bf16 %v852, %v848
        %v865 = vpack.c.bf16 %v857, %v853
        %v866 = vpack.c.bf16 %v858, %v854
        %v867 = vpack.c.bf16 %v859, %v855
        %v868 = vpack.c.bf16 %v860, %v856
        %v869 = vld [vmem:[#allocation11] sm:$0xf]
        %v870 = vld [vmem:[#allocation11 + $0x4] sm:$0xf]
        %v871 = vld [vmem:[#allocation11 + $0x8] sm:$0xf]
        %v872 = vld [vmem:[#allocation11 + $0xc] sm:$0xf]
        %v873 = vld [vmem:[#allocation11 + $0x10] sm:$0xf]
        %v874 = vld [vmem:[#allocation11 + $0x14] sm:$0xf]
        %v875 = vld [vmem:[#allocation11 + $0x18] sm:$0xf]
        %v876 = vld [vmem:[#allocation11 + $0x1c] sm:$0xf]
        %v877 = vld [vmem:[#allocation11 + $0x20] sm:$0xf]
        %v878 = vld [vmem:[#allocation11 + $0x24] sm:$0xf]
        %v879 = vld [vmem:[#allocation11 + $0x28] sm:$0xf]
        %v880 = vld [vmem:[#allocation11 + $0x2c] sm:$0xf]
        %v881 = vld [vmem:[#allocation11 + $0x30] sm:$0xf]
        %v882 = vld [vmem:[#allocation11 + $0x34] sm:$0xf]
        %v883 = vld [vmem:[#allocation11 + $0x38] sm:$0xf]
        %v884 = vld [vmem:[#allocation11 + $0x3c] sm:$0xf]
        %v885 = vld [vmem:[#allocation11 + $0x40] sm:$0xf]
        %v886 = vld [vmem:[#allocation11 + $0x44] sm:$0xf]
        %v887 = vld [vmem:[#allocation11 + $0x48] sm:$0xf]
        %v888 = vld [vmem:[#allocation11 + $0x4c] sm:$0xf]
        %v889 = vld [vmem:[#allocation11 + $0x50] sm:$0xf]
        %v890 = vld [vmem:[#allocation11 + $0x54] sm:$0xf]
        %v891 = vld [vmem:[#allocation11 + $0x58] sm:$0xf]
        %v892 = vld [vmem:[#allocation11 + $0x5c] sm:$0xf]
        %v893 = vld [vmem:[#allocation11 + $0x60] sm:$0xf]
        %v894 = vld [vmem:[#allocation11 + $0x64] sm:$0xf]
        %v895 = vld [vmem:[#allocation11 + $0x68] sm:$0xf]
        %v896 = vld [vmem:[#allocation11 + $0x6c] sm:$0xf]
        %v897 = vld [vmem:[#allocation11 + $0x70] sm:$0xf]
        %v898 = vld [vmem:[#allocation11 + $0x74] sm:$0xf]
        %v899 = vld [vmem:[#allocation11 + $0x78] sm:$0xf]
        %v900 = vld [vmem:[#allocation11 + $0x7c] sm:$0xf]
        %v901 = vld [vmem:[#allocation11 + $0x80] sm:$0xf]
        %v902 = vld [vmem:[#allocation11 + $0x84] sm:$0xf]
        %v903 = vld [vmem:[#allocation11 + $0x88] sm:$0xf]
        %v904 = vld [vmem:[#allocation11 + $0x8c] sm:$0xf]
        %v905 = vld [vmem:[#allocation11 + $0x90] sm:$0xf]
        %v906 = vld [vmem:[#allocation11 + $0x94] sm:$0xf]
        %v907 = vld [vmem:[#allocation11 + $0x98] sm:$0xf]
        %v908 = vld [vmem:[#allocation11 + $0x9c] sm:$0xf]
        %v909 = vld [vmem:[#allocation11 + $0xa0] sm:$0xf]
        %v910 = vld [vmem:[#allocation11 + $0xa4] sm:$0xf]
        %v911 = vld [vmem:[#allocation11 + $0xa8] sm:$0xf]
        %v912 = vld [vmem:[#allocation11 + $0xac] sm:$0xf]
        %v913 = vld [vmem:[#allocation11 + $0xb0] sm:$0xf]
        %v914 = vld [vmem:[#allocation11 + $0xb4] sm:$0xf]
        %v915 = vld [vmem:[#allocation11 + $0xb8] sm:$0xf]
        %v916 = vld [vmem:[#allocation11 + $0xbc] sm:$0xf]
        %v917 = vld [vmem:[#allocation11 + $0xc0] sm:$0xf]
        %v918 = vld [vmem:[#allocation11 + $0xc4] sm:$0xf]
        %v919 = vld [vmem:[#allocation11 + $0xc8] sm:$0xf]
        %v920 = vld [vmem:[#allocation11 + $0xcc] sm:$0xf]
        %v921 = vld [vmem:[#allocation11 + $0xd0] sm:$0xf]
        %v922 = vld [vmem:[#allocation11 + $0xd4] sm:$0xf]
        %v923 = vld [vmem:[#allocation11 + $0xd8] sm:$0xf]
        %v924 = vld [vmem:[#allocation11 + $0xdc] sm:$0xf]
        %v925 = vld [vmem:[#allocation11 + $0xe0] sm:$0xf]
        %v926 = vld [vmem:[#allocation11 + $0xe4] sm:$0xf]
        %v927 = vld [vmem:[#allocation11 + $0xe8] sm:$0xf]
        %v928 = vld [vmem:[#allocation11 + $0xec] sm:$0xf]
        %v929 = vld [vmem:[#allocation11 + $0xf0] sm:$0xf]
        %v930 = vld [vmem:[#allocation11 + $0xf4] sm:$0xf]
        %v931 = vld [vmem:[#allocation11 + $0xf8] sm:$0xf]
        %v932 = vld [vmem:[#allocation11 + $0xfc] sm:$0xf]
        %s933 = scalar_lea.vmem [#allocation11], 256
        %v934 = vld [vmem:[%s933] sm:$0xf]
        %v935 = vld [vmem:[%s933 + $0x4] sm:$0xf]
        %v936 = vld [vmem:[%s933 + $0x8] sm:$0xf]
        %v937 = vld [vmem:[%s933 + $0xc] sm:$0xf]
        %v938 = vld [vmem:[%s933 + $0x10] sm:$0xf]
        %v939 = vld [vmem:[%s933 + $0x14] sm:$0xf]
        %v940 = vld [vmem:[%s933 + $0x18] sm:$0xf]
        %v941 = vld [vmem:[%s933 + $0x1c] sm:$0xf]
        %v942 = vld [vmem:[%s933 + $0x20] sm:$0xf]
        %v943 = vld [vmem:[%s933 + $0x24] sm:$0xf]
        %v944 = vld [vmem:[%s933 + $0x28] sm:$0xf]
        %v945 = vld [vmem:[%s933 + $0x2c] sm:$0xf]
        %v946 = vld [vmem:[%s933 + $0x30] sm:$0xf]
        %v947 = vld [vmem:[%s933 + $0x34] sm:$0xf]
        %v948 = vld [vmem:[%s933 + $0x38] sm:$0xf]
        %v949 = vld [vmem:[%s933 + $0x3c] sm:$0xf]
        %v950 = vld [vmem:[%s933 + $0x40] sm:$0xf]
        %v951 = vld [vmem:[%s933 + $0x44] sm:$0xf]
        %v952 = vld [vmem:[%s933 + $0x48] sm:$0xf]
        %v953 = vld [vmem:[%s933 + $0x4c] sm:$0xf]
        %v954 = vld [vmem:[%s933 + $0x50] sm:$0xf]
        %v955 = vld [vmem:[%s933 + $0x54] sm:$0xf]
        %v956 = vld [vmem:[%s933 + $0x58] sm:$0xf]
        %v957 = vld [vmem:[%s933 + $0x5c] sm:$0xf]
        %v958 = vld [vmem:[%s933 + $0x60] sm:$0xf]
        %v959 = vld [vmem:[%s933 + $0x64] sm:$0xf]
        %v960 = vld [vmem:[%s933 + $0x68] sm:$0xf]
        %v961 = vld [vmem:[%s933 + $0x6c] sm:$0xf]
        %v962 = vld [vmem:[%s933 + $0x70] sm:$0xf]
        %v963 = vld [vmem:[%s933 + $0x74] sm:$0xf]
        %v964 = vld [vmem:[%s933 + $0x78] sm:$0xf]
        %v965 = vld [vmem:[%s933 + $0x7c] sm:$0xf]
        %v966 = vld [vmem:[%s933 + $0x80] sm:$0xf]
        %v967 = vld [vmem:[%s933 + $0x84] sm:$0xf]
        %v968 = vld [vmem:[%s933 + $0x88] sm:$0xf]
        %v969 = vld [vmem:[%s933 + $0x8c] sm:$0xf]
        %v970 = vld [vmem:[%s933 + $0x90] sm:$0xf]
        %v971 = vld [vmem:[%s933 + $0x94] sm:$0xf]
        %v972 = vld [vmem:[%s933 + $0x98] sm:$0xf]
        %v973 = vld [vmem:[%s933 + $0x9c] sm:$0xf]
        %v974 = vld [vmem:[%s933 + $0xa0] sm:$0xf]
        %v975 = vld [vmem:[%s933 + $0xa4] sm:$0xf]
        %v976 = vld [vmem:[%s933 + $0xa8] sm:$0xf]
        %v977 = vld [vmem:[%s933 + $0xac] sm:$0xf]
        %v978 = vld [vmem:[%s933 + $0xb0] sm:$0xf]
        %v979 = vld [vmem:[%s933 + $0xb4] sm:$0xf]
        %v980 = vld [vmem:[%s933 + $0xb8] sm:$0xf]
        %v981 = vld [vmem:[%s933 + $0xbc] sm:$0xf]
        %v982 = vld [vmem:[%s933 + $0xc0] sm:$0xf]
        %v983 = vld [vmem:[%s933 + $0xc4] sm:$0xf]
        %v984 = vld [vmem:[%s933 + $0xc8] sm:$0xf]
        %v985 = vld [vmem:[%s933 + $0xcc] sm:$0xf]
        %v986 = vld [vmem:[%s933 + $0xd0] sm:$0xf]
        %v987 = vld [vmem:[%s933 + $0xd4] sm:$0xf]
        %v988 = vld [vmem:[%s933 + $0xd8] sm:$0xf]
        %v989 = vld [vmem:[%s933 + $0xdc] sm:$0xf]
        %v990 = vld [vmem:[%s933 + $0xe0] sm:$0xf]
        %v991 = vld [vmem:[%s933 + $0xe4] sm:$0xf]
        %v992 = vld [vmem:[%s933 + $0xe8] sm:$0xf]
        %v993 = vld [vmem:[%s933 + $0xec] sm:$0xf]
        %v994 = vld [vmem:[%s933 + $0xf0] sm:$0xf]
        %v995 = vld [vmem:[%s933 + $0xf4] sm:$0xf]
        %v996 = vld [vmem:[%s933 + $0xf8] sm:$0xf]
        %v997 = vld [vmem:[%s933 + $0xfc] sm:$0xf]
        %v1006 = vunpack.c.l.b16 %v861
        %v1007 = vunpack.c.l.b16 %v862
        %v1008 = vunpack.c.l.b16 %v863
        %v1009 = vunpack.c.l.b16 %v864
        %v1010 = vunpack.c.l.b16 %v865
        %v1011 = vunpack.c.l.b16 %v866
        %v1012 = vunpack.c.l.b16 %v867
        %v1013 = vunpack.c.l.b16 %v868
        %v1014 = vrot.slane %v1006, 1
        %vm1015 = vcmask 1041409
        %v1016 = vsel %vm1015, %v1010, %v1014
        %v1017 = vrot.slane %v1007, 1
        %v1018 = vsel %vm1015, %v1011, %v1017
        %v1019 = vrot.slane %v1008, 1
        %v1020 = vsel %vm1015, %v1012, %v1019
        %v1021 = vrot.slane %v1009, 1
        %v1022 = vsel %vm1015, %v1013, %v1021
        %v1023 = vpack.c.b16 %v1016, %v1016
        %v1024 = vpack.c.b16 %v1018, %v1018
        %v1025 = vpack.c.b16 %v1020, %v1020
        %v1026 = vpack.c.b16 %v1022, %v1022
        %v1095 = vunpack.c.l.b16 %v934
        %v1096 = vunpack.c.l.b16 %v935
        %v1097 = vunpack.c.l.b16 %v936
        %v1098 = vunpack.c.l.b16 %v937
        %v1099 = vunpack.c.l.b16 %v938
        %v1100 = vunpack.c.l.b16 %v939
        %v1101 = vunpack.c.l.b16 %v940
        %v1102 = vunpack.c.l.b16 %v941
        %v1103 = vunpack.c.l.b16 %v942
        %v1104 = vunpack.c.l.b16 %v943
        %v1105 = vunpack.c.l.b16 %v944
        %v1106 = vunpack.c.l.b16 %v945
        %v1107 = vunpack.c.l.b16 %v946
        %v1108 = vunpack.c.l.b16 %v947
        %v1109 = vunpack.c.l.b16 %v948
        %v1110 = vunpack.c.l.b16 %v949
        %v1111 = vunpack.c.l.b16 %v950
        %v1112 = vunpack.c.l.b16 %v951
        %v1113 = vunpack.c.l.b16 %v952
        %v1114 = vunpack.c.l.b16 %v953
        %v1115 = vunpack.c.l.b16 %v954
        %v1116 = vunpack.c.l.b16 %v955
        %v1117 = vunpack.c.l.b16 %v956
        %v1118 = vunpack.c.l.b16 %v957
        %v1119 = vunpack.c.l.b16 %v958
        %v1120 = vunpack.c.l.b16 %v959
        %v1121 = vunpack.c.l.b16 %v960
        %v1122 = vunpack.c.l.b16 %v961
        %v1123 = vunpack.c.l.b16 %v962
        %v1124 = vunpack.c.l.b16 %v963
        %v1125 = vunpack.c.l.b16 %v964
        %v1126 = vunpack.c.l.b16 %v965
        %v1127 = vunpack.c.l.b16 %v966
        %v1128 = vunpack.c.l.b16 %v967
        %v1129 = vunpack.c.l.b16 %v968
        %v1130 = vunpack.c.l.b16 %v969
        %v1131 = vunpack.c.l.b16 %v970
        %v1132 = vunpack.c.l.b16 %v971
        %v1133 = vunpack.c.l.b16 %v972
        %v1134 = vunpack.c.l.b16 %v973
        %v1135 = vunpack.c.l.b16 %v974
        %v1136 = vunpack.c.l.b16 %v975
        %v1137 = vunpack.c.l.b16 %v976
        %v1138 = vunpack.c.l.b16 %v977
        %v1139 = vunpack.c.l.b16 %v978
        %v1140 = vunpack.c.l.b16 %v979
        %v1141 = vunpack.c.l.b16 %v980
        %v1142 = vunpack.c.l.b16 %v981
        %v1143 = vunpack.c.l.b16 %v982
        %v1144 = vunpack.c.l.b16 %v983
        %v1145 = vunpack.c.l.b16 %v984
        %v1146 = vunpack.c.l.b16 %v985
        %v1147 = vunpack.c.l.b16 %v986
        %v1148 = vunpack.c.l.b16 %v987
        %v1149 = vunpack.c.l.b16 %v988
        %v1150 = vunpack.c.l.b16 %v989
        %v1151 = vunpack.c.l.b16 %v990
        %v1152 = vunpack.c.l.b16 %v991
        %v1153 = vunpack.c.l.b16 %v992
        %v1154 = vunpack.c.l.b16 %v993
        %v1155 = vunpack.c.l.b16 %v994
        %v1156 = vunpack.c.l.b16 %v995
        %v1157 = vunpack.c.l.b16 %v996
        %v1158 = vunpack.c.l.b16 %v997
        %v1159 = vpack.c.b16 %v1096, %v1095
        %v1160 = vpack.c.b16 %v1098, %v1097
        %v1161 = vpack.c.b16 %v1100, %v1099
        %v1162 = vpack.c.b16 %v1102, %v1101
        %v1163 = vpack.c.b16 %v1104, %v1103
        %v1164 = vpack.c.b16 %v1106, %v1105
        %v1165 = vpack.c.b16 %v1108, %v1107
        %v1166 = vpack.c.b16 %v1110, %v1109
        %v1167 = vpack.c.b16 %v1112, %v1111
        %v1168 = vpack.c.b16 %v1114, %v1113
        %v1169 = vpack.c.b16 %v1116, %v1115
        %v1170 = vpack.c.b16 %v1118, %v1117
        %v1171 = vpack.c.b16 %v1120, %v1119
        %v1172 = vpack.c.b16 %v1122, %v1121
        %v1173 = vpack.c.b16 %v1124, %v1123
        %v1174 = vpack.c.b16 %v1126, %v1125
        %v1175 = vpack.c.b16 %v1128, %v1127
        %v1176 = vpack.c.b16 %v1130, %v1129
        %v1177 = vpack.c.b16 %v1132, %v1131
        %v1178 = vpack.c.b16 %v1134, %v1133
        %v1179 = vpack.c.b16 %v1136, %v1135
        %v1180 = vpack.c.b16 %v1138, %v1137
        %v1181 = vpack.c.b16 %v1140, %v1139
        %v1182 = vpack.c.b16 %v1142, %v1141
        %v1183 = vpack.c.b16 %v1144, %v1143
        %v1184 = vpack.c.b16 %v1146, %v1145
        %v1185 = vpack.c.b16 %v1148, %v1147
        %v1186 = vpack.c.b16 %v1150, %v1149
        %v1187 = vpack.c.b16 %v1152, %v1151
        %v1188 = vpack.c.b16 %v1154, %v1153
        %v1189 = vpack.c.b16 %v1156, %v1155
        %v1190 = vpack.c.b16 %v1158, %v1157
        %1223 = vmatprep.subr.bf16.mxu0 0
        %1224 = vmatpush1.bf16.msra.mxu0 %v1159
        %1225 = vmatprep.subr.bf16.mxu0 0
        %1226 = vmatpush1.bf16.msra.mxu0 %v1160
        %1227 = vmatprep.subr.bf16.mxu0 0
        %1228 = vmatpush1.bf16.msra.mxu0 %v1161
        %1229 = vmatprep.subr.bf16.mxu0 0
        %1230 = vmatpush1.bf16.msra.mxu0 %v1162
        %1231 = vmatprep.subr.bf16.mxu0 0
        %1232 = vmatpush1.bf16.msra.mxu0 %v1163
        %1233 = vmatprep.subr.bf16.mxu0 0
        %1234 = vmatpush1.bf16.msra.mxu0 %v1164
        %1235 = vmatprep.subr.bf16.mxu0 0
        %1236 = vmatpush1.bf16.msra.mxu0 %v1165
        %1237 = vmatprep.subr.bf16.mxu0 0
        %1238 = vmatpush1.bf16.msra.mxu0 %v1166
        %1239 = vmatprep.subr.bf16.mxu0 0
        %1240 = vmatpush1.bf16.msra.mxu0 %v1167
        %1241 = vmatprep.subr.bf16.mxu0 0
        %1242 = vmatpush1.bf16.msra.mxu0 %v1168
        %1243 = vmatprep.subr.bf16.mxu0 0
        %1244 = vmatpush1.bf16.msra.mxu0 %v1169
        %1245 = vmatprep.subr.bf16.mxu0 0
        %1246 = vmatpush1.bf16.msra.mxu0 %v1170
        %1247 = vmatprep.subr.bf16.mxu0 0
        %1248 = vmatpush1.bf16.msra.mxu0 %v1171
        %1249 = vmatprep.subr.bf16.mxu0 0
        %1250 = vmatpush1.bf16.msra.mxu0 %v1172
        %1251 = vmatprep.subr.bf16.mxu0 0
        %1252 = vmatpush1.bf16.msra.mxu0 %v1173
        %1253 = vmatprep.subr.bf16.mxu0 0
        %1254 = vmatpush1.bf16.msra.mxu0 %v1174
        %1255 = vmatprep.mubr.bf16.mxu0 %v1024
        %1256 = vmatmul.mubr.bf16.gmra.mrb[0].mxu0 %v1023
        %v1257 = vpop.f32.mrb[0].mxu0
        %v1258 = vadd.f32 0.0, %v1257
        %v1259 = vpop.f32.mrb[0].mxu0
        %v1260 = vpop.f32.mrb[0].mxu0
        %v1261 = vpop.f32.mrb[0].mxu0
        %1262 = vdwg.mxu0
        %1263 = vmatprep.subr.bf16.mxu0 0
        %1264 = vmatpush1.bf16.msra.mxu0 %v1175
        %1265 = vmatprep.subr.bf16.mxu0 0
        %1266 = vmatpush1.bf16.msra.mxu0 %v1176
        %1267 = vmatprep.subr.bf16.mxu0 0
        %1268 = vmatpush1.bf16.msra.mxu0 %v1177
        %1269 = vmatprep.subr.bf16.mxu0 0
        %1270 = vmatpush1.bf16.msra.mxu0 %v1178
        %1271 = vmatprep.subr.bf16.mxu0 0
        %1272 = vmatpush1.bf16.msra.mxu0 %v1179
        %1273 = vmatprep.subr.bf16.mxu0 0
        %1274 = vmatpush1.bf16.msra.mxu0 %v1180
        %1275 = vmatprep.subr.bf16.mxu0 0
        %1276 = vmatpush1.bf16.msra.mxu0 %v1181
        %1277 = vmatprep.subr.bf16.mxu0 0
        %1278 = vmatpush1.bf16.msra.mxu0 %v1182
        %1279 = vmatprep.subr.bf16.mxu0 0
        %1280 = vmatpush1.bf16.msra.mxu0 %v1183
        %1281 = vmatprep.subr.bf16.mxu0 0
        %1282 = vmatpush1.bf16.msra.mxu0 %v1184
        %1283 = vmatprep.subr.bf16.mxu0 0
        %1284 = vmatpush1.bf16.msra.mxu0 %v1185
        %1285 = vmatprep.subr.bf16.mxu0 0
        %1286 = vmatpush1.bf16.msra.mxu0 %v1186
        %1287 = vmatprep.subr.bf16.mxu0 0
        %1288 = vmatpush1.bf16.msra.mxu0 %v1187
        %1289 = vmatprep.subr.bf16.mxu0 0
        %1290 = vmatpush1.bf16.msra.mxu0 %v1188
        %1291 = vmatprep.subr.bf16.mxu0 0
        %1292 = vmatpush1.bf16.msra.mxu0 %v1189
        %1293 = vmatprep.subr.bf16.mxu0 0
        %1294 = vmatpush1.bf16.msra.mxu0 %v1190
        %1295 = vmatprep.mubr.bf16.mxu0 %v1026
        %1296 = vmatmul.mubr.bf16.gmra.mrb[0].mxu0 %v1025
        %v1297 = vpop.f32.mrb[0].mxu0
        %v1298 = vadd.f32 %v1258, %v1297
        %v1299 = vpop.f32.mrb[0].mxu0
        %v1300 = vpop.f32.mrb[0].mxu0
        %v1301 = vpop.f32.mrb[0].mxu0
        %1302 = vdwg.mxu0
        %v1303 = vrot.slane %v1010, 7
        %v1304 = vsel %vm1015, %v1303, %v1006
        %v1305 = vrot.slane %v1011, 7
        %v1306 = vsel %vm1015, %v1305, %v1007
        %v1307 = vrot.slane %v1012, 7
        %v1308 = vsel %vm1015, %v1307, %v1008
        %v1309 = vrot.slane %v1013, 7
        %v1310 = vsel %vm1015, %v1309, %v1009
        %v1311 = vpack.c.b16 %v1304, %v1304
        %v1312 = vpack.c.b16 %v1306, %v1306
        %v1313 = vpack.c.b16 %v1308, %v1308
        %v1314 = vpack.c.b16 %v1310, %v1310
        %v1383 = vunpack.c.l.b16 %v869
        %v1384 = vunpack.c.l.b16 %v870
        %v1385 = vunpack.c.l.b16 %v871
        %v1386 = vunpack.c.l.b16 %v872
        %v1387 = vunpack.c.l.b16 %v873
        %v1388 = vunpack.c.l.b16 %v874
        %v1389 = vunpack.c.l.b16 %v875
        %v1390 = vunpack.c.l.b16 %v876
        %v1391 = vunpack.c.l.b16 %v877
        %v1392 = vunpack.c.l.b16 %v878
        %v1393 = vunpack.c.l.b16 %v879
        %v1394 = vunpack.c.l.b16 %v880
        %v1395 = vunpack.c.l.b16 %v881
        %v1396 = vunpack.c.l.b16 %v882
        %v1397 = vunpack.c.l.b16 %v883
        %v1398 = vunpack.c.l.b16 %v884
        %v1399 = vunpack.c.l.b16 %v885
        %v1400 = vunpack.c.l.b16 %v886
        %v1401 = vunpack.c.l.b16 %v887
        %v1402 = vunpack.c.l.b16 %v888
        %v1403 = vunpack.c.l.b16 %v889
        %v1404 = vunpack.c.l.b16 %v890
        %v1405 = vunpack.c.l.b16 %v891
        %v1406 = vunpack.c.l.b16 %v892
        %v1407 = vunpack.c.l.b16 %v893
        %v1408 = vunpack.c.l.b16 %v894
        %v1409 = vunpack.c.l.b16 %v895
        %v1410 = vunpack.c.l.b16 %v896
        %v1411 = vunpack.c.l.b16 %v897
        %v1412 = vunpack.c.l.b16 %v898
        %v1413 = vunpack.c.l.b16 %v899
        %v1414 = vunpack.c.l.b16 %v900
        %v1415 = vunpack.c.l.b16 %v901
        %v1416 = vunpack.c.l.b16 %v902
        %v1417 = vunpack.c.l.b16 %v903
        %v1418 = vunpack.c.l.b16 %v904
        %v1419 = vunpack.c.l.b16 %v905
        %v1420 = vunpack.c.l.b16 %v906
        %v1421 = vunpack.c.l.b16 %v907
        %v1422 = vunpack.c.l.b16 %v908
        %v1423 = vunpack.c.l.b16 %v909
        %v1424 = vunpack.c.l.b16 %v910
        %v1425 = vunpack.c.l.b16 %v911
        %v1426 = vunpack.c.l.b16 %v912
        %v1427 = vunpack.c.l.b16 %v913
        %v1428 = vunpack.c.l.b16 %v914
        %v1429 = vunpack.c.l.b16 %v915
        %v1430 = vunpack.c.l.b16 %v916
        %v1431 = vunpack.c.l.b16 %v917
        %v1432 = vunpack.c.l.b16 %v918
        %v1433 = vunpack.c.l.b16 %v919
        %v1434 = vunpack.c.l.b16 %v920
        %v1435 = vunpack.c.l.b16 %v921
        %v1436 = vunpack.c.l.b16 %v922
        %v1437 = vunpack.c.l.b16 %v923
        %v1438 = vunpack.c.l.b16 %v924
        %v1439 = vunpack.c.l.b16 %v925
        %v1440 = vunpack.c.l.b16 %v926
        %v1441 = vunpack.c.l.b16 %v927
        %v1442 = vunpack.c.l.b16 %v928
        %v1443 = vunpack.c.l.b16 %v929
        %v1444 = vunpack.c.l.b16 %v930
        %v1445 = vunpack.c.l.b16 %v931
        %v1446 = vunpack.c.l.b16 %v932
        %v1447 = vpack.c.b16 %v1384, %v1383
        %v1448 = vpack.c.b16 %v1386, %v1385
        %v1449 = vpack.c.b16 %v1388, %v1387
        %v1450 = vpack.c.b16 %v1390, %v1389
        %v1451 = vpack.c.b16 %v1392, %v1391
        %v1452 = vpack.c.b16 %v1394, %v1393
        %v1453 = vpack.c.b16 %v1396, %v1395
        %v1454 = vpack.c.b16 %v1398, %v1397
        %v1455 = vpack.c.b16 %v1400, %v1399
        %v1456 = vpack.c.b16 %v1402, %v1401
        %v1457 = vpack.c.b16 %v1404, %v1403
        %v1458 = vpack.c.b16 %v1406, %v1405
        %v1459 = vpack.c.b16 %v1408, %v1407
        %v1460 = vpack.c.b16 %v1410, %v1409
        %v1461 = vpack.c.b16 %v1412, %v1411
        %v1462 = vpack.c.b16 %v1414, %v1413
        %v1463 = vpack.c.b16 %v1416, %v1415
        %v1464 = vpack.c.b16 %v1418, %v1417
        %v1465 = vpack.c.b16 %v1420, %v1419
        %v1466 = vpack.c.b16 %v1422, %v1421
        %v1467 = vpack.c.b16 %v1424, %v1423
        %v1468 = vpack.c.b16 %v1426, %v1425
        %v1469 = vpack.c.b16 %v1428, %v1427
        %v1470 = vpack.c.b16 %v1430, %v1429
        %v1471 = vpack.c.b16 %v1432, %v1431
        %v1472 = vpack.c.b16 %v1434, %v1433
        %v1473 = vpack.c.b16 %v1436, %v1435
        %v1474 = vpack.c.b16 %v1438, %v1437
        %v1475 = vpack.c.b16 %v1440, %v1439
        %v1476 = vpack.c.b16 %v1442, %v1441
        %v1477 = vpack.c.b16 %v1444, %v1443
        %v1478 = vpack.c.b16 %v1446, %v1445
        %1511 = vmatprep.subr.bf16.mxu0 0
        %1512 = vmatpush1.bf16.msra.mxu0 %v1447
        %1513 = vmatprep.subr.bf16.mxu0 0
        %1514 = vmatpush1.bf16.msra.mxu0 %v1448
        %1515 = vmatprep.subr.bf16.mxu0 0
        %1516 = vmatpush1.bf16.msra.mxu0 %v1449
        %1517 = vmatprep.subr.bf16.mxu0 0
        %1518 = vmatpush1.bf16.msra.mxu0 %v1450
        %1519 = vmatprep.subr.bf16.mxu0 0
        %1520 = vmatpush1.bf16.msra.mxu0 %v1451
        %1521 = vmatprep.subr.bf16.mxu0 0
        %1522 = vmatpush1.bf16.msra.mxu0 %v1452
        %1523 = vmatprep.subr.bf16.mxu0 0
        %1524 = vmatpush1.bf16.msra.mxu0 %v1453
        %1525 = vmatprep.subr.bf16.mxu0 0
        %1526 = vmatpush1.bf16.msra.mxu0 %v1454
        %1527 = vmatprep.subr.bf16.mxu0 0
        %1528 = vmatpush1.bf16.msra.mxu0 %v1455
        %1529 = vmatprep.subr.bf16.mxu0 0
        %1530 = vmatpush1.bf16.msra.mxu0 %v1456
        %1531 = vmatprep.subr.bf16.mxu0 0
        %1532 = vmatpush1.bf16.msra.mxu0 %v1457
        %1533 = vmatprep.subr.bf16.mxu0 0
        %1534 = vmatpush1.bf16.msra.mxu0 %v1458
        %1535 = vmatprep.subr.bf16.mxu0 0
        %1536 = vmatpush1.bf16.msra.mxu0 %v1459
        %1537 = vmatprep.subr.bf16.mxu0 0
        %1538 = vmatpush1.bf16.msra.mxu0 %v1460
        %1539 = vmatprep.subr.bf16.mxu0 0
        %1540 = vmatpush1.bf16.msra.mxu0 %v1461
        %1541 = vmatprep.subr.bf16.mxu0 0
        %1542 = vmatpush1.bf16.msra.mxu0 %v1462
        %1543 = vmatprep.mubr.bf16.mxu0 %v1312
        %1544 = vmatmul.mubr.bf16.gmra.mrb[0].mxu0 %v1311
        %v1545 = vpop.f32.mrb[0].mxu0
        %v1546 = vadd.f32 %v1298, %v1545
        %v1547 = vpop.f32.mrb[0].mxu0
        %v1548 = vpop.f32.mrb[0].mxu0
        %v1549 = vpop.f32.mrb[0].mxu0
        %1550 = vdwg.mxu0
        %1551 = vmatprep.subr.bf16.mxu0 0
        %1552 = vmatpush1.bf16.msra.mxu0 %v1463
        %1553 = vmatprep.subr.bf16.mxu0 0
        %1554 = vmatpush1.bf16.msra.mxu0 %v1464
        %1555 = vmatprep.subr.bf16.mxu0 0
        %1556 = vmatpush1.bf16.msra.mxu0 %v1465
        %1557 = vmatprep.subr.bf16.mxu0 0
        %1558 = vmatpush1.bf16.msra.mxu0 %v1466
        %1559 = vmatprep.subr.bf16.mxu0 0
        %1560 = vmatpush1.bf16.msra.mxu0 %v1467
        %1561 = vmatprep.subr.bf16.mxu0 0
        %1562 = vmatpush1.bf16.msra.mxu0 %v1468
        %1563 = vmatprep.subr.bf16.mxu0 0
        %1564 = vmatpush1.bf16.msra.mxu0 %v1469
        %1565 = vmatprep.subr.bf16.mxu0 0
        %1566 = vmatpush1.bf16.msra.mxu0 %v1470
        %1567 = vmatprep.subr.bf16.mxu0 0
        %1568 = vmatpush1.bf16.msra.mxu0 %v1471
        %1569 = vmatprep.subr.bf16.mxu0 0
        %1570 = vmatpush1.bf16.msra.mxu0 %v1472
        %1571 = vmatprep.subr.bf16.mxu0 0
        %1572 = vmatpush1.bf16.msra.mxu0 %v1473
        %1573 = vmatprep.subr.bf16.mxu0 0
        %1574 = vmatpush1.bf16.msra.mxu0 %v1474
        %1575 = vmatprep.subr.bf16.mxu0 0
        %1576 = vmatpush1.bf16.msra.mxu0 %v1475
        %1577 = vmatprep.subr.bf16.mxu0 0
        %1578 = vmatpush1.bf16.msra.mxu0 %v1476
        %1579 = vmatprep.subr.bf16.mxu0 0
        %1580 = vmatpush1.bf16.msra.mxu0 %v1477
        %1581 = vmatprep.subr.bf16.mxu0 0
        %1582 = vmatpush1.bf16.msra.mxu0 %v1478
        %1583 = vmatprep.mubr.bf16.mxu0 %v1314
        %1584 = vmatmul.mubr.bf16.gmra.mrb[0].mxu0 %v1313
        %v1585 = vpop.f32.mrb[0].mxu0
        %v1586 = vadd.f32 %v1546, %v1585
        %v1587 = vpop.f32.mrb[0].mxu0
        %v1588 = vpop.f32.mrb[0].mxu0
        %v1589 = vpop.f32.mrb[0].mxu0
        %1590 = vdwg.mxu0
        %s1591 = scalar_lea.vmem [#allocation11], 512
        %v1592 = vld [vmem:[%s1591] sm:$0xf]
        %v1593 = vld [vmem:[%s1591 + $0x4] sm:$0xf]
        %v1594 = vld [vmem:[%s1591 + $0x8] sm:$0xf]
        %v1595 = vld [vmem:[%s1591 + $0xc] sm:$0xf]
        %v1596 = vld [vmem:[%s1591 + $0x10] sm:$0xf]
        %v1597 = vld [vmem:[%s1591 + $0x14] sm:$0xf]
        %v1598 = vld [vmem:[%s1591 + $0x18] sm:$0xf]
        %v1599 = vld [vmem:[%s1591 + $0x1c] sm:$0xf]
        %v1600 = vld [vmem:[%s1591 + $0x20] sm:$0xf]
        %v1601 = vld [vmem:[%s1591 + $0x24] sm:$0xf]
        %v1602 = vld [vmem:[%s1591 + $0x28] sm:$0xf]
        %v1603 = vld [vmem:[%s1591 + $0x2c] sm:$0xf]
        %v1604 = vld [vmem:[%s1591 + $0x30] sm:$0xf]
        %v1605 = vld [vmem:[%s1591 + $0x34] sm:$0xf]
        %v1606 = vld [vmem:[%s1591 + $0x38] sm:$0xf]
        %v1607 = vld [vmem:[%s1591 + $0x3c] sm:$0xf]
        %v1608 = vld [vmem:[%s1591 + $0x40] sm:$0xf]
        %v1609 = vld [vmem:[%s1591 + $0x44] sm:$0xf]
        %v1610 = vld [vmem:[%s1591 + $0x48] sm:$0xf]
        %v1611 = vld [vmem:[%s1591 + $0x4c] sm:$0xf]
        %v1612 = vld [vmem:[%s1591 + $0x50] sm:$0xf]
        %v1613 = vld [vmem:[%s1591 + $0x54] sm:$0xf]
        %v1614 = vld [vmem:[%s1591 + $0x58] sm:$0xf]
        %v1615 = vld [vmem:[%s1591 + $0x5c] sm:$0xf]
        %v1616 = vld [vmem:[%s1591 + $0x60] sm:$0xf]
        %v1617 = vld [vmem:[%s1591 + $0x64] sm:$0xf]
        %v1618 = vld [vmem:[%s1591 + $0x68] sm:$0xf]
        %v1619 = vld [vmem:[%s1591 + $0x6c] sm:$0xf]
        %v1620 = vld [vmem:[%s1591 + $0x70] sm:$0xf]
        %v1621 = vld [vmem:[%s1591 + $0x74] sm:$0xf]
        %v1622 = vld [vmem:[%s1591 + $0x78] sm:$0xf]
        %v1623 = vld [vmem:[%s1591 + $0x7c] sm:$0xf]
        %v1624 = vld [vmem:[%s1591 + $0x80] sm:$0xf]
        %v1625 = vld [vmem:[%s1591 + $0x84] sm:$0xf]
        %v1626 = vld [vmem:[%s1591 + $0x88] sm:$0xf]
        %v1627 = vld [vmem:[%s1591 + $0x8c] sm:$0xf]
        %v1628 = vld [vmem:[%s1591 + $0x90] sm:$0xf]
        %v1629 = vld [vmem:[%s1591 + $0x94] sm:$0xf]
        %v1630 = vld [vmem:[%s1591 + $0x98] sm:$0xf]
        %v1631 = vld [vmem:[%s1591 + $0x9c] sm:$0xf]
        %v1632 = vld [vmem:[%s1591 + $0xa0] sm:$0xf]
        %v1633 = vld [vmem:[%s1591 + $0xa4] sm:$0xf]
        %v1634 = vld [vmem:[%s1591 + $0xa8] sm:$0xf]
        %v1635 = vld [vmem:[%s1591 + $0xac] sm:$0xf]
        %v1636 = vld [vmem:[%s1591 + $0xb0] sm:$0xf]
        %v1637 = vld [vmem:[%s1591 + $0xb4] sm:$0xf]
        %v1638 = vld [vmem:[%s1591 + $0xb8] sm:$0xf]
        %v1639 = vld [vmem:[%s1591 + $0xbc] sm:$0xf]
        %v1640 = vld [vmem:[%s1591 + $0xc0] sm:$0xf]
        %v1641 = vld [vmem:[%s1591 + $0xc4] sm:$0xf]
        %v1642 = vld [vmem:[%s1591 + $0xc8] sm:$0xf]
        %v1643 = vld [vmem:[%s1591 + $0xcc] sm:$0xf]
        %v1644 = vld [vmem:[%s1591 + $0xd0] sm:$0xf]
        %v1645 = vld [vmem:[%s1591 + $0xd4] sm:$0xf]
        %v1646 = vld [vmem:[%s1591 + $0xd8] sm:$0xf]
        %v1647 = vld [vmem:[%s1591 + $0xdc] sm:$0xf]
        %v1648 = vld [vmem:[%s1591 + $0xe0] sm:$0xf]
        %v1649 = vld [vmem:[%s1591 + $0xe4] sm:$0xf]
        %v1650 = vld [vmem:[%s1591 + $0xe8] sm:$0xf]
        %v1651 = vld [vmem:[%s1591 + $0xec] sm:$0xf]
        %v1652 = vld [vmem:[%s1591 + $0xf0] sm:$0xf]
        %v1653 = vld [vmem:[%s1591 + $0xf4] sm:$0xf]
        %v1654 = vld [vmem:[%s1591 + $0xf8] sm:$0xf]
        %v1655 = vld [vmem:[%s1591 + $0xfc] sm:$0xf]
        %v1656 = vrot.slane %v1006, 2
        %v1657 = vrot.slane %v1010, 1
        %v1658 = vsel %vm1015, %v1657, %v1656
        %v1659 = vrot.slane %v1007, 2
        %v1660 = vrot.slane %v1011, 1
        %v1661 = vsel %vm1015, %v1660, %v1659
        %v1662 = vrot.slane %v1008, 2
        %v1663 = vrot.slane %v1012, 1
        %v1664 = vsel %vm1015, %v1663, %v1662
        %v1665 = vrot.slane %v1009, 2
        %v1666 = vrot.slane %v1013, 1
        %v1667 = vsel %vm1015, %v1666, %v1665
        %v1668 = vpack.c.b16 %v1658, %v1658
        %v1669 = vpack.c.b16 %v1661, %v1661
        %v1670 = vpack.c.b16 %v1664, %v1664
        %v1671 = vpack.c.b16 %v1667, %v1667
        %v1740 = vunpack.c.l.b16 %v1592
        %v1741 = vunpack.c.l.b16 %v1593
        %v1742 = vunpack.c.l.b16 %v1594
        %v1743 = vunpack.c.l.b16 %v1595
        %v1744 = vunpack.c.l.b16 %v1596
        %v1745 = vunpack.c.l.b16 %v1597
        %v1746 = vunpack.c.l.b16 %v1598
        %v1747 = vunpack.c.l.b16 %v1599
        %v1748 = vunpack.c.l.b16 %v1600
        %v1749 = vunpack.c.l.b16 %v1601
        %v1750 = vunpack.c.l.b16 %v1602
        %v1751 = vunpack.c.l.b16 %v1603
        %v1752 = vunpack.c.l.b16 %v1604
        %v1753 = vunpack.c.l.b16 %v1605
        %v1754 = vunpack.c.l.b16 %v1606
        %v1755 = vunpack.c.l.b16 %v1607
        %v1756 = vunpack.c.l.b16 %v1608
        %v1757 = vunpack.c.l.b16 %v1609
        %v1758 = vunpack.c.l.b16 %v1610
        %v1759 = vunpack.c.l.b16 %v1611
        %v1760 = vunpack.c.l.b16 %v1612
        %v1761 = vunpack.c.l.b16 %v1613
        %v1762 = vunpack.c.l.b16 %v1614
        %v1763 = vunpack.c.l.b16 %v1615
        %v1764 = vunpack.c.l.b16 %v1616
        %v1765 = vunpack.c.l.b16 %v1617
        %v1766 = vunpack.c.l.b16 %v1618
        %v1767 = vunpack.c.l.b16 %v1619
        %v1768 = vunpack.c.l.b16 %v1620
        %v1769 = vunpack.c.l.b16 %v1621
        %v1770 = vunpack.c.l.b16 %v1622
        %v1771 = vunpack.c.l.b16 %v1623
        %v1772 = vunpack.c.l.b16 %v1624
        %v1773 = vunpack.c.l.b16 %v1625
        %v1774 = vunpack.c.l.b16 %v1626
        %v1775 = vunpack.c.l.b16 %v1627
        %v1776 = vunpack.c.l.b16 %v1628
        %v1777 = vunpack.c.l.b16 %v1629
        %v1778 = vunpack.c.l.b16 %v1630
        %v1779 = vunpack.c.l.b16 %v1631
        %v1780 = vunpack.c.l.b16 %v1632
        %v1781 = vunpack.c.l.b16 %v1633
        %v1782 = vunpack.c.l.b16 %v1634
        %v1783 = vunpack.c.l.b16 %v1635
        %v1784 = vunpack.c.l.b16 %v1636
        %v1785 = vunpack.c.l.b16 %v1637
        %v1786 = vunpack.c.l.b16 %v1638
        %v1787 = vunpack.c.l.b16 %v1639
        %v1788 = vunpack.c.l.b16 %v1640
        %v1789 = vunpack.c.l.b16 %v1641
        %v1790 = vunpack.c.l.b16 %v1642
        %v1791 = vunpack.c.l.b16 %v1643
        %v1792 = vunpack.c.l.b16 %v1644
        %v1793 = vunpack.c.l.b16 %v1645
        %v1794 = vunpack.c.l.b16 %v1646
        %v1795 = vunpack.c.l.b16 %v1647
        %v1796 = vunpack.c.l.b16 %v1648
        %v1797 = vunpack.c.l.b16 %v1649
        %v1798 = vunpack.c.l.b16 %v1650
        %v1799 = vunpack.c.l.b16 %v1651
        %v1800 = vunpack.c.l.b16 %v1652
        %v1801 = vunpack.c.l.b16 %v1653
        %v1802 = vunpack.c.l.b16 %v1654
        %v1803 = vunpack.c.l.b16 %v1655
        %v1804 = vpack.c.b16 %v1741, %v1740
        %v1805 = vpack.c.b16 %v1743, %v1742
        %v1806 = vpack.c.b16 %v1745, %v1744
        %v1807 = vpack.c.b16 %v1747, %v1746
        %v1808 = vpack.c.b16 %v1749, %v1748
        %v1809 = vpack.c.b16 %v1751, %v1750
        %v1810 = vpack.c.b16 %v1753, %v1752
        %v1811 = vpack.c.b16 %v1755, %v1754
        %v1812 = vpack.c.b16 %v1757, %v1756
        %v1813 = vpack.c.b16 %v1759, %v1758
        %v1814 = vpack.c.b16 %v1761, %v1760
        %v1815 = vpack.c.b16 %v1763, %v1762
        %v1816 = vpack.c.b16 %v1765, %v1764
        %v1817 = vpack.c.b16 %v1767, %v1766
        %v1818 = vpack.c.b16 %v1769, %v1768
        %v1819 = vpack.c.b16 %v1771, %v1770
        %v1820 = vpack.c.b16 %v1773, %v1772
        %v1821 = vpack.c.b16 %v1775, %v1774
        %v1822 = vpack.c.b16 %v1777, %v1776
        %v1823 = vpack.c.b16 %v1779, %v1778
        %v1824 = vpack.c.b16 %v1781, %v1780
        %v1825 = vpack.c.b16 %v1783, %v1782
        %v1826 = vpack.c.b16 %v1785, %v1784
        %v1827 = vpack.c.b16 %v1787, %v1786
        %v1828 = vpack.c.b16 %v1789, %v1788
        %v1829 = vpack.c.b16 %v1791, %v1790
        %v1830 = vpack.c.b16 %v1793, %v1792
        %v1831 = vpack.c.b16 %v1795, %v1794
        %v1832 = vpack.c.b16 %v1797, %v1796
        %v1833 = vpack.c.b16 %v1799, %v1798
        %v1834 = vpack.c.b16 %v1801, %v1800
        %v1835 = vpack.c.b16 %v1803, %v1802
        %1868 = vmatprep.subr.bf16.mxu0 0
        %1869 = vmatpush1.bf16.msra.mxu0 %v1804
        %1870 = vmatprep.subr.bf16.mxu0 0
        %1871 = vmatpush1.bf16.msra.mxu0 %v1805
        %1872 = vmatprep.subr.bf16.mxu0 0
        %1873 = vmatpush1.bf16.msra.mxu0 %v1806
        %1874 = vmatprep.subr.bf16.mxu0 0
        %1875 = vmatpush1.bf16.msra.mxu0 %v1807
        %1876 = vmatprep.subr.bf16.mxu0 0
        %1877 = vmatpush1.bf16.msra.mxu0 %v1808
        %1878 = vmatprep.subr.bf16.mxu0 0
        %1879 = vmatpush1.bf16.msra.mxu0 %v1809
        %1880 = vmatprep.subr.bf16.mxu0 0
        %1881 = vmatpush1.bf16.msra.mxu0 %v1810
        %1882 = vmatprep.subr.bf16.mxu0 0
        %1883 = vmatpush1.bf16.msra.mxu0 %v1811
        %1884 = vmatprep.subr.bf16.mxu0 0
        %1885 = vmatpush1.bf16.msra.mxu0 %v1812
        %1886 = vmatprep.subr.bf16.mxu0 0
        %1887 = vmatpush1.bf16.msra.mxu0 %v1813
        %1888 = vmatprep.subr.bf16.mxu0 0
        %1889 = vmatpush1.bf16.msra.mxu0 %v1814
        %1890 = vmatprep.subr.bf16.mxu0 0
        %1891 = vmatpush1.bf16.msra.mxu0 %v1815
        %1892 = vmatprep.subr.bf16.mxu0 0
        %1893 = vmatpush1.bf16.msra.mxu0 %v1816
        %1894 = vmatprep.subr.bf16.mxu0 0
        %1895 = vmatpush1.bf16.msra.mxu0 %v1817
        %1896 = vmatprep.subr.bf16.mxu0 0
        %1897 = vmatpush1.bf16.msra.mxu0 %v1818
        %1898 = vmatprep.subr.bf16.mxu0 0
        %1899 = vmatpush1.bf16.msra.mxu0 %v1819
        %1900 = vmatprep.mubr.bf16.mxu0 %v1669
        %1901 = vmatmul.mubr.bf16.gmra.mrb[0].mxu0 %v1668
        %v1902 = vpop.f32.mrb[0].mxu0
        %v1903 = vadd.f32 0.0, %v1902
        %v1904 = vpop.f32.mrb[0].mxu0
        %v1905 = vpop.f32.mrb[0].mxu0
        %v1906 = vpop.f32.mrb[0].mxu0
        %1907 = vdwg.mxu0
        %1908 = vmatprep.subr.bf16.mxu0 0
        %1909 = vmatpush1.bf16.msra.mxu0 %v1820
        %1910 = vmatprep.subr.bf16.mxu0 0
        %1911 = vmatpush1.bf16.msra.mxu0 %v1821
        %1912 = vmatprep.subr.bf16.mxu0 0
        %1913 = vmatpush1.bf16.msra.mxu0 %v1822
        %1914 = vmatprep.subr.bf16.mxu0 0
        %1915 = vmatpush1.bf16.msra.mxu0 %v1823
        %1916 = vmatprep.subr.bf16.mxu0 0
        %1917 = vmatpush1.bf16.msra.mxu0 %v1824
        %1918 = vmatprep.subr.bf16.mxu0 0
        %1919 = vmatpush1.bf16.msra.mxu0 %v1825
        %1920 = vmatprep.subr.bf16.mxu0 0
        %1921 = vmatpush1.bf16.msra.mxu0 %v1826
        %1922 = vmatprep.subr.bf16.mxu0 0
        %1923 = vmatpush1.bf16.msra.mxu0 %v1827
        %1924 = vmatprep.subr.bf16.mxu0 0
        %1925 = vmatpush1.bf16.msra.mxu0 %v1828
        %1926 = vmatprep.subr.bf16.mxu0 0
        %1927 = vmatpush1.bf16.msra.mxu0 %v1829
        %1928 = vmatprep.subr.bf16.mxu0 0
        %1929 = vmatpush1.bf16.msra.mxu0 %v1830
        %1930 = vmatprep.subr.bf16.mxu0 0
        %1931 = vmatpush1.bf16.msra.mxu0 %v1831
        %1932 = vmatprep.subr.bf16.mxu0 0
        %1933 = vmatpush1.bf16.msra.mxu0 %v1832
        %1934 = vmatprep.subr.bf16.mxu0 0
        %1935 = vmatpush1.bf16.msra.mxu0 %v1833
        %1936 = vmatprep.subr.bf16.mxu0 0
        %1937 = vmatpush1.bf16.msra.mxu0 %v1834
        %1938 = vmatprep.subr.bf16.mxu0 0
        %1939 = vmatpush1.bf16.msra.mxu0 %v1835
        %1940 = vmatprep.mubr.bf16.mxu0 %v1671
        %1941 = vmatmul.mubr.bf16.gmra.mrb[0].mxu0 %v1670
        %v1942 = vpop.f32.mrb[0].mxu0
        %v1943 = vadd.f32 %v1903, %v1942
        %v1944 = vpop.f32.mrb[0].mxu0
        %v1945 = vpop.f32.mrb[0].mxu0
        %v1946 = vpop.f32.mrb[0].mxu0
        %1947 = vdwg.mxu0
        %v1948 = vadd.f32 %v1586, %v1943
        %s1949 = scalar_lea.vmem [#allocation11], 768
        %v1950 = vld [vmem:[%s1949] sm:$0xf]
        %v1951 = vld [vmem:[%s1949 + $0x4] sm:$0xf]
        %v1952 = vld [vmem:[%s1949 + $0x8] sm:$0xf]
        %v1953 = vld [vmem:[%s1949 + $0xc] sm:$0xf]
        %v1954 = vld [vmem:[%s1949 + $0x10] sm:$0xf]
        %v1955 = vld [vmem:[%s1949 + $0x14] sm:$0xf]
        %v1956 = vld [vmem:[%s1949 + $0x18] sm:$0xf]
        %v1957 = vld [vmem:[%s1949 + $0x1c] sm:$0xf]
        %v1958 = vld [vmem:[%s1949 + $0x20] sm:$0xf]
        %v1959 = vld [vmem:[%s1949 + $0x24] sm:$0xf]
        %v1960 = vld [vmem:[%s1949 + $0x28] sm:$0xf]
        %v1961 = vld [vmem:[%s1949 + $0x2c] sm:$0xf]
        %v1962 = vld [vmem:[%s1949 + $0x30] sm:$0xf]
        %v1963 = vld [vmem:[%s1949 + $0x34] sm:$0xf]
        %v1964 = vld [vmem:[%s1949 + $0x38] sm:$0xf]
        %v1965 = vld [vmem:[%s1949 + $0x3c] sm:$0xf]
        %v1966 = vld [vmem:[%s1949 + $0x40] sm:$0xf]
        %v1967 = vld [vmem:[%s1949 + $0x44] sm:$0xf]
        %v1968 = vld [vmem:[%s1949 + $0x48] sm:$0xf]
        %v1969 = vld [vmem:[%s1949 + $0x4c] sm:$0xf]
        %v1970 = vld [vmem:[%s1949 + $0x50] sm:$0xf]
        %v1971 = vld [vmem:[%s1949 + $0x54] sm:$0xf]
        %v1972 = vld [vmem:[%s1949 + $0x58] sm:$0xf]
        %v1973 = vld [vmem:[%s1949 + $0x5c] sm:$0xf]
        %v1974 = vld [vmem:[%s1949 + $0x60] sm:$0xf]
        %v1975 = vld [vmem:[%s1949 + $0x64] sm:$0xf]
        %v1976 = vld [vmem:[%s1949 + $0x68] sm:$0xf]
        %v1977 = vld [vmem:[%s1949 + $0x6c] sm:$0xf]
        %v1978 = vld [vmem:[%s1949 + $0x70] sm:$0xf]
        %v1979 = vld [vmem:[%s1949 + $0x74] sm:$0xf]
        %v1980 = vld [vmem:[%s1949 + $0x78] sm:$0xf]
        %v1981 = vld [vmem:[%s1949 + $0x7c] sm:$0xf]
        %v1982 = vld [vmem:[%s1949 + $0x80] sm:$0xf]
        %v1983 = vld [vmem:[%s1949 + $0x84] sm:$0xf]
        %v1984 = vld [vmem:[%s1949 + $0x88] sm:$0xf]
        %v1985 = vld [vmem:[%s1949 + $0x8c] sm:$0xf]
        %v1986 = vld [vmem:[%s1949 + $0x90] sm:$0xf]
        %v1987 = vld [vmem:[%s1949 + $0x94] sm:$0xf]
        %v1988 = vld [vmem:[%s1949 + $0x98] sm:$0xf]
        %v1989 = vld [vmem:[%s1949 + $0x9c] sm:$0xf]
        %v1990 = vld [vmem:[%s1949 + $0xa0] sm:$0xf]
        %v1991 = vld [vmem:[%s1949 + $0xa4] sm:$0xf]
        %v1992 = vld [vmem:[%s1949 + $0xa8] sm:$0xf]
        %v1993 = vld [vmem:[%s1949 + $0xac] sm:$0xf]
        %v1994 = vld [vmem:[%s1949 + $0xb0] sm:$0xf]
        %v1995 = vld [vmem:[%s1949 + $0xb4] sm:$0xf]
        %v1996 = vld [vmem:[%s1949 + $0xb8] sm:$0xf]
        %v1997 = vld [vmem:[%s1949 + $0xbc] sm:$0xf]
        %v1998 = vld [vmem:[%s1949 + $0xc0] sm:$0xf]
        %v1999 = vld [vmem:[%s1949 + $0xc4] sm:$0xf]
        %v2000 = vld [vmem:[%s1949 + $0xc8] sm:$0xf]
        %v2001 = vld [vmem:[%s1949 + $0xcc] sm:$0xf]
        %v2002 = vld [vmem:[%s1949 + $0xd0] sm:$0xf]
        %v2003 = vld [vmem:[%s1949 + $0xd4] sm:$0xf]
        %v2004 = vld [vmem:[%s1949 + $0xd8] sm:$0xf]
        %v2005 = vld [vmem:[%s1949 + $0xdc] sm:$0xf]
        %v2006 = vld [vmem:[%s1949 + $0xe0] sm:$0xf]
        %v2007 = vld [vmem:[%s1949 + $0xe4] sm:$0xf]
        %v2008 = vld [vmem:[%s1949 + $0xe8] sm:$0xf]
        %v2009 = vld [vmem:[%s1949 + $0xec] sm:$0xf]
        %v2010 = vld [vmem:[%s1949 + $0xf0] sm:$0xf]
        %v2011 = vld [vmem:[%s1949 + $0xf4] sm:$0xf]
        %v2012 = vld [vmem:[%s1949 + $0xf8] sm:$0xf]
        %v2013 = vld [vmem:[%s1949 + $0xfc] sm:$0xf]
        %v2014 = vrot.slane %v1006, 3
        %v2015 = vrot.slane %v1010, 2
        %v2016 = vsel %vm1015, %v2015, %v2014
        %v2017 = vrot.slane %v1007, 3
        %v2018 = vrot.slane %v1011, 2
        %v2019 = vsel %vm1015, %v2018, %v2017
        %v2020 = vrot.slane %v1008, 3
        %v2021 = vrot.slane %v1012, 2
        %v2022 = vsel %vm1015, %v2021, %v2020
        %v2023 = vrot.slane %v1009, 3
        %v2024 = vrot.slane %v1013, 2
        %v2025 = vsel %vm1015, %v2024, %v2023
        %v2026 = vpack.c.b16 %v2016, %v2016
        %v2027 = vpack.c.b16 %v2019, %v2019
        %v2028 = vpack.c.b16 %v2022, %v2022
        %v2029 = vpack.c.b16 %v2025, %v2025
        %v2098 = vunpack.c.l.b16 %v1950
        %v2099 = vunpack.c.l.b16 %v1951
        %v2100 = vunpack.c.l.b16 %v1952
        %v2101 = vunpack.c.l.b16 %v1953
        %v2102 = vunpack.c.l.b16 %v1954
        %v2103 = vunpack.c.l.b16 %v1955
        %v2104 = vunpack.c.l.b16 %v1956
        %v2105 = vunpack.c.l.b16 %v1957
        %v2106 = vunpack.c.l.b16 %v1958
        %v2107 = vunpack.c.l.b16 %v1959
        %v2108 = vunpack.c.l.b16 %v1960
        %v2109 = vunpack.c.l.b16 %v1961
        %v2110 = vunpack.c.l.b16 %v1962
        %v2111 = vunpack.c.l.b16 %v1963
        %v2112 = vunpack.c.l.b16 %v1964
        %v2113 = vunpack.c.l.b16 %v1965
        %v2114 = vunpack.c.l.b16 %v1966
        %v2115 = vunpack.c.l.b16 %v1967
        %v2116 = vunpack.c.l.b16 %v1968
        %v2117 = vunpack.c.l.b16 %v1969
        %v2118 = vunpack.c.l.b16 %v1970
        %v2119 = vunpack.c.l.b16 %v1971
        %v2120 = vunpack.c.l.b16 %v1972
        %v2121 = vunpack.c.l.b16 %v1973
        %v2122 = vunpack.c.l.b16 %v1974
        %v2123 = vunpack.c.l.b16 %v1975
        %v2124 = vunpack.c.l.b16 %v1976
        %v2125 = vunpack.c.l.b16 %v1977
        %v2126 = vunpack.c.l.b16 %v1978
        %v2127 = vunpack.c.l.b16 %v1979
        %v2128 = vunpack.c.l.b16 %v1980
        %v2129 = vunpack.c.l.b16 %v1981
        %v2130 = vunpack.c.l.b16 %v1982
        %v2131 = vunpack.c.l.b16 %v1983
        %v2132 = vunpack.c.l.b16 %v1984
        %v2133 = vunpack.c.l.b16 %v1985
        %v2134 = vunpack.c.l.b16 %v1986
        %v2135 = vunpack.c.l.b16 %v1987
        %v2136 = vunpack.c.l.b16 %v1988
        %v2137 = vunpack.c.l.b16 %v1989
        %v2138 = vunpack.c.l.b16 %v1990
        %v2139 = vunpack.c.l.b16 %v1991
        %v2140 = vunpack.c.l.b16 %v1992
        %v2141 = vunpack.c.l.b16 %v1993
        %v2142 = vunpack.c.l.b16 %v1994
        %v2143 = vunpack.c.l.b16 %v1995
        %v2144 = vunpack.c.l.b16 %v1996
        %v2145 = vunpack.c.l.b16 %v1997
        %v2146 = vunpack.c.l.b16 %v1998
        %v2147 = vunpack.c.l.b16 %v1999
        %v2148 = vunpack.c.l.b16 %v2000
        %v2149 = vunpack.c.l.b16 %v2001
        %v2150 = vunpack.c.l.b16 %v2002
        %v2151 = vunpack.c.l.b16 %v2003
        %v2152 = vunpack.c.l.b16 %v2004
        %v2153 = vunpack.c.l.b16 %v2005
        %v2154 = vunpack.c.l.b16 %v2006
        %v2155 = vunpack.c.l.b16 %v2007
        %v2156 = vunpack.c.l.b16 %v2008
        %v2157 = vunpack.c.l.b16 %v2009
        %v2158 = vunpack.c.l.b16 %v2010
        %v2159 = vunpack.c.l.b16 %v2011
        %v2160 = vunpack.c.l.b16 %v2012
        %v2161 = vunpack.c.l.b16 %v2013
        %v2162 = vpack.c.b16 %v2099, %v2098
        %v2163 = vpack.c.b16 %v2101, %v2100
        %v2164 = vpack.c.b16 %v2103, %v2102
        %v2165 = vpack.c.b16 %v2105, %v2104
        %v2166 = vpack.c.b16 %v2107, %v2106
        %v2167 = vpack.c.b16 %v2109, %v2108
        %v2168 = vpack.c.b16 %v2111, %v2110
        %v2169 = vpack.c.b16 %v2113, %v2112
        %v2170 = vpack.c.b16 %v2115, %v2114
        %v2171 = vpack.c.b16 %v2117, %v2116
        %v2172 = vpack.c.b16 %v2119, %v2118
        %v2173 = vpack.c.b16 %v2121, %v2120
        %v2174 = vpack.c.b16 %v2123, %v2122
        %v2175 = vpack.c.b16 %v2125, %v2124
        %v2176 = vpack.c.b16 %v2127, %v2126
        %v2177 = vpack.c.b16 %v2129, %v2128
        %v2178 = vpack.c.b16 %v2131, %v2130
        %v2179 = vpack.c.b16 %v2133, %v2132
        %v2180 = vpack.c.b16 %v2135, %v2134
        %v2181 = vpack.c.b16 %v2137, %v2136
        %v2182 = vpack.c.b16 %v2139, %v2138
        %v2183 = vpack.c.b16 %v2141, %v2140
        %v2184 = vpack.c.b16 %v2143, %v2142
        %v2185 = vpack.c.b16 %v2145, %v2144
        %v2186 = vpack.c.b16 %v2147, %v2146
        %v2187 = vpack.c.b16 %v2149, %v2148
        %v2188 = vpack.c.b16 %v2151, %v2150
        %v2189 = vpack.c.b16 %v2153, %v2152
        %v2190 = vpack.c.b16 %v2155, %v2154
        %v2191 = vpack.c.b16 %v2157, %v2156
        %v2192 = vpack.c.b16 %v2159, %v2158
        %v2193 = vpack.c.b16 %v2161, %v2160
        %2226 = vmatprep.subr.bf16.mxu0 0
        %2227 = vmatpush1.bf16.msra.mxu0 %v2162
        %2228 = vmatprep.subr.bf16.mxu0 0
        %2229 = vmatpush1.bf16.msra.mxu0 %v2163
        %2230 = vmatprep.subr.bf16.mxu0 0
        %2231 = vmatpush1.bf16.msra.mxu0 %v2164
        %2232 = vmatprep.subr.bf16.mxu0 0
        %2233 = vmatpush1.bf16.msra.mxu0 %v2165
        %2234 = vmatprep.subr.bf16.mxu0 0
        %2235 = vmatpush1.bf16.msra.mxu0 %v2166
        %2236 = vmatprep.subr.bf16.mxu0 0
        %2237 = vmatpush1.bf16.msra.mxu0 %v2167
        %2238 = vmatprep.subr.bf16.mxu0 0
        %2239 = vmatpush1.bf16.msra.mxu0 %v2168
        %2240 = vmatprep.subr.bf16.mxu0 0
        %2241 = vmatpush1.bf16.msra.mxu0 %v2169
        %2242 = vmatprep.subr.bf16.mxu0 0
        %2243 = vmatpush1.bf16.msra.mxu0 %v2170
        %2244 = vmatprep.subr.bf16.mxu0 0
        %2245 = vmatpush1.bf16.msra.mxu0 %v2171
        %2246 = vmatprep.subr.bf16.mxu0 0
        %2247 = vmatpush1.bf16.msra.mxu0 %v2172
        %2248 = vmatprep.subr.bf16.mxu0 0
        %2249 = vmatpush1.bf16.msra.mxu0 %v2173
        %2250 = vmatprep.subr.bf16.mxu0 0
        %2251 = vmatpush1.bf16.msra.mxu0 %v2174
        %2252 = vmatprep.subr.bf16.mxu0 0
        %2253 = vmatpush1.bf16.msra.mxu0 %v2175
        %2254 = vmatprep.subr.bf16.mxu0 0
        %2255 = vmatpush1.bf16.msra.mxu0 %v2176
        %2256 = vmatprep.subr.bf16.mxu0 0
        %2257 = vmatpush1.bf16.msra.mxu0 %v2177
        %2258 = vmatprep.mubr.bf16.mxu0 %v2027
        %2259 = vmatmul.mubr.bf16.gmra.mrb[0].mxu0 %v2026
        %v2260 = vpop.f32.mrb[0].mxu0
        %v2261 = vadd.f32 0.0, %v2260
        %v2262 = vpop.f32.mrb[0].mxu0
        %v2263 = vpop.f32.mrb[0].mxu0
        %v2264 = vpop.f32.mrb[0].mxu0
        %2265 = vdwg.mxu0
        %2266 = vmatprep.subr.bf16.mxu0 0
        %2267 = vmatpush1.bf16.msra.mxu0 %v2178
        %2268 = vmatprep.subr.bf16.mxu0 0
        %2269 = vmatpush1.bf16.msra.mxu0 %v2179
        %2270 = vmatprep.subr.bf16.mxu0 0
        %2271 = vmatpush1.bf16.msra.mxu0 %v2180
        %2272 = vmatprep.subr.bf16.mxu0 0
        %2273 = vmatpush1.bf16.msra.mxu0 %v2181
        %2274 = vmatprep.subr.bf16.mxu0 0
        %2275 = vmatpush1.bf16.msra.mxu0 %v2182
        %2276 = vmatprep.subr.bf16.mxu0 0
        %2277 = vmatpush1.bf16.msra.mxu0 %v2183
        %2278 = vmatprep.subr.bf16.mxu0 0
        %2279 = vmatpush1.bf16.msra.mxu0 %v2184
        %2280 = vmatprep.subr.bf16.mxu0 0
        %2281 = vmatpush1.bf16.msra.mxu0 %v2185
        %2282 = vmatprep.subr.bf16.mxu0 0
        %2283 = vmatpush1.bf16.msra.mxu0 %v2186
        %2284 = vmatprep.subr.bf16.mxu0 0
        %2285 = vmatpush1.bf16.msra.mxu0 %v2187
        %2286 = vmatprep.subr.bf16.mxu0 0
        %2287 = vmatpush1.bf16.msra.mxu0 %v2188
        %2288 = vmatprep.subr.bf16.mxu0 0
        %2289 = vmatpush1.bf16.msra.mxu0 %v2189
        %2290 = vmatprep.subr.bf16.mxu0 0
        %2291 = vmatpush1.bf16.msra.mxu0 %v2190
        %2292 = vmatprep.subr.bf16.mxu0 0
        %2293 = vmatpush1.bf16.msra.mxu0 %v2191
        %2294 = vmatprep.subr.bf16.mxu0 0
        %2295 = vmatpush1.bf16.msra.mxu0 %v2192
        %2296 = vmatprep.subr.bf16.mxu0 0
        %2297 = vmatpush1.bf16.msra.mxu0 %v2193
        %2298 = vmatprep.mubr.bf16.mxu0 %v2029
        %2299 = vmatmul.mubr.bf16.gmra.mrb[0].mxu0 %v2028
        %v2300 = vpop.f32.mrb[0].mxu0
        %v2301 = vadd.f32 %v2261, %v2300
        %v2302 = vpop.f32.mrb[0].mxu0
        %v2303 = vpop.f32.mrb[0].mxu0
        %v2304 = vpop.f32.mrb[0].mxu0
        %2305 = vdwg.mxu0
        %v2306 = vadd.f32 %v1948, %v2301
        %s2307 = scalar_lea.vmem [#allocation11], 1024
        %v2308 = vld [vmem:[%s2307] sm:$0xf]
        %v2309 = vld [vmem:[%s2307 + $0x4] sm:$0xf]
        %v2310 = vld [vmem:[%s2307 + $0x8] sm:$0xf]
        %v2311 = vld [vmem:[%s2307 + $0xc] sm:$0xf]
        %v2312 = vld [vmem:[%s2307 + $0x10] sm:$0xf]
        %v2313 = vld [vmem:[%s2307 + $0x14] sm:$0xf]
        %v2314 = vld [vmem:[%s2307 + $0x18] sm:$0xf]
        %v2315 = vld [vmem:[%s2307 + $0x1c] sm:$0xf]
        %v2316 = vld [vmem:[%s2307 + $0x20] sm:$0xf]
        %v2317 = vld [vmem:[%s2307 + $0x24] sm:$0xf]
        %v2318 = vld [vmem:[%s2307 + $0x28] sm:$0xf]
        %v2319 = vld [vmem:[%s2307 + $0x2c] sm:$0xf]
        %v2320 = vld [vmem:[%s2307 + $0x30] sm:$0xf]
        %v2321 = vld [vmem:[%s2307 + $0x34] sm:$0xf]
        %v2322 = vld [vmem:[%s2307 + $0x38] sm:$0xf]
        %v2323 = vld [vmem:[%s2307 + $0x3c] sm:$0xf]
        %v2324 = vld [vmem:[%s2307 + $0x40] sm:$0xf]
        %v2325 = vld [vmem:[%s2307 + $0x44] sm:$0xf]
        %v2326 = vld [vmem:[%s2307 + $0x48] sm:$0xf]
        %v2327 = vld [vmem:[%s2307 + $0x4c] sm:$0xf]
        %v2328 = vld [vmem:[%s2307 + $0x50] sm:$0xf]
        %v2329 = vld [vmem:[%s2307 + $0x54] sm:$0xf]
        %v2330 = vld [vmem:[%s2307 + $0x58] sm:$0xf]
        %v2331 = vld [vmem:[%s2307 + $0x5c] sm:$0xf]
        %v2332 = vld [vmem:[%s2307 + $0x60] sm:$0xf]
        %v2333 = vld [vmem:[%s2307 + $0x64] sm:$0xf]
        %v2334 = vld [vmem:[%s2307 + $0x68] sm:$0xf]
        %v2335 = vld [vmem:[%s2307 + $0x6c] sm:$0xf]
        %v2336 = vld [vmem:[%s2307 + $0x70] sm:$0xf]
        %v2337 = vld [vmem:[%s2307 + $0x74] sm:$0xf]
        %v2338 = vld [vmem:[%s2307 + $0x78] sm:$0xf]
        %v2339 = vld [vmem:[%s2307 + $0x7c] sm:$0xf]
        %v2340 = vld [vmem:[%s2307 + $0x80] sm:$0xf]
        %v2341 = vld [vmem:[%s2307 + $0x84] sm:$0xf]
        %v2342 = vld [vmem:[%s2307 + $0x88] sm:$0xf]
        %v2343 = vld [vmem:[%s2307 + $0x8c] sm:$0xf]
        %v2344 = vld [vmem:[%s2307 + $0x90] sm:$0xf]
        %v2345 = vld [vmem:[%s2307 + $0x94] sm:$0xf]
        %v2346 = vld [vmem:[%s2307 + $0x98] sm:$0xf]
        %v2347 = vld [vmem:[%s2307 + $0x9c] sm:$0xf]
        %v2348 = vld [vmem:[%s2307 + $0xa0] sm:$0xf]
        %v2349 = vld [vmem:[%s2307 + $0xa4] sm:$0xf]
        %v2350 = vld [vmem:[%s2307 + $0xa8] sm:$0xf]
        %v2351 = vld [vmem:[%s2307 + $0xac] sm:$0xf]
        %v2352 = vld [vmem:[%s2307 + $0xb0] sm:$0xf]
        %v2353 = vld [vmem:[%s2307 + $0xb4] sm:$0xf]
        %v2354 = vld [vmem:[%s2307 + $0xb8] sm:$0xf]
        %v2355 = vld [vmem:[%s2307 + $0xbc] sm:$0xf]
        %v2356 = vld [vmem:[%s2307 + $0xc0] sm:$0xf]
        %v2357 = vld [vmem:[%s2307 + $0xc4] sm:$0xf]
        %v2358 = vld [vmem:[%s2307 + $0xc8] sm:$0xf]
        %v2359 = vld [vmem:[%s2307 + $0xcc] sm:$0xf]
        %v2360 = vld [vmem:[%s2307 + $0xd0] sm:$0xf]
        %v2361 = vld [vmem:[%s2307 + $0xd4] sm:$0xf]
        %v2362 = vld [vmem:[%s2307 + $0xd8] sm:$0xf]
        %v2363 = vld [vmem:[%s2307 + $0xdc] sm:$0xf]
        %v2364 = vld [vmem:[%s2307 + $0xe0] sm:$0xf]
        %v2365 = vld [vmem:[%s2307 + $0xe4] sm:$0xf]
        %v2366 = vld [vmem:[%s2307 + $0xe8] sm:$0xf]
        %v2367 = vld [vmem:[%s2307 + $0xec] sm:$0xf]
        %v2368 = vld [vmem:[%s2307 + $0xf0] sm:$0xf]
        %v2369 = vld [vmem:[%s2307 + $0xf4] sm:$0xf]
        %v2370 = vld [vmem:[%s2307 + $0xf8] sm:$0xf]
        %v2371 = vld [vmem:[%s2307 + $0xfc] sm:$0xf]
        %v2372 = vrot.slane %v1006, 4
        %v2373 = vrot.slane %v1010, 3
        %v2374 = vsel %vm1015, %v2373, %v2372
        %v2375 = vrot.slane %v1007, 4
        %v2376 = vrot.slane %v1011, 3
        %v2377 = vsel %vm1015, %v2376, %v2375
        %v2378 = vrot.slane %v1008, 4
        %v2379 = vrot.slane %v1012, 3
        %v2380 = vsel %vm1015, %v2379, %v2378
        %v2381 = vrot.slane %v1009, 4
        %v2382 = vrot.slane %v1013, 3
        %v2383 = vsel %vm1015, %v2382, %v2381
        %v2384 = vpack.c.b16 %v2374, %v2374
        %v2385 = vpack.c.b16 %v2377, %v2377
        %v2386 = vpack.c.b16 %v2380, %v2380
        %v2387 = vpack.c.b16 %v2383, %v2383
        %v2456 = vunpack.c.l.b16 %v2308
        %v2457 = vunpack.c.l.b16 %v2309
        %v2458 = vunpack.c.l.b16 %v2310
        %v2459 = vunpack.c.l.b16 %v2311
        %v2460 = vunpack.c.l.b16 %v2312
        %v2461 = vunpack.c.l.b16 %v2313
        %v2462 = vunpack.c.l.b16 %v2314
        %v2463 = vunpack.c.l.b16 %v2315
        %v2464 = vunpack.c.l.b16 %v2316
        %v2465 = vunpack.c.l.b16 %v2317
        %v2466 = vunpack.c.l.b16 %v2318
        %v2467 = vunpack.c.l.b16 %v2319
        %v2468 = vunpack.c.l.b16 %v2320
        %v2469 = vunpack.c.l.b16 %v2321
        %v2470 = vunpack.c.l.b16 %v2322
        %v2471 = vunpack.c.l.b16 %v2323
        %v2472 = vunpack.c.l.b16 %v2324
        %v2473 = vunpack.c.l.b16 %v2325
        %v2474 = vunpack.c.l.b16 %v2326
        %v2475 = vunpack.c.l.b16 %v2327
        %v2476 = vunpack.c.l.b16 %v2328
        %v2477 = vunpack.c.l.b16 %v2329
        %v2478 = vunpack.c.l.b16 %v2330
        %v2479 = vunpack.c.l.b16 %v2331
        %v2480 = vunpack.c.l.b16 %v2332
        %v2481 = vunpack.c.l.b16 %v2333
        %v2482 = vunpack.c.l.b16 %v2334
        %v2483 = vunpack.c.l.b16 %v2335
        %v2484 = vunpack.c.l.b16 %v2336
        %v2485 = vunpack.c.l.b16 %v2337
        %v2486 = vunpack.c.l.b16 %v2338
        %v2487 = vunpack.c.l.b16 %v2339
        %v2488 = vunpack.c.l.b16 %v2340
        %v2489 = vunpack.c.l.b16 %v2341
        %v2490 = vunpack.c.l.b16 %v2342
        %v2491 = vunpack.c.l.b16 %v2343
        %v2492 = vunpack.c.l.b16 %v2344
        %v2493 = vunpack.c.l.b16 %v2345
        %v2494 = vunpack.c.l.b16 %v2346
        %v2495 = vunpack.c.l.b16 %v2347
        %v2496 = vunpack.c.l.b16 %v2348
        %v2497 = vunpack.c.l.b16 %v2349
        %v2498 = vunpack.c.l.b16 %v2350
        %v2499 = vunpack.c.l.b16 %v2351
        %v2500 = vunpack.c.l.b16 %v2352
        %v2501 = vunpack.c.l.b16 %v2353
        %v2502 = vunpack.c.l.b16 %v2354
        %v2503 = vunpack.c.l.b16 %v2355
        %v2504 = vunpack.c.l.b16 %v2356
        %v2505 = vunpack.c.l.b16 %v2357
        %v2506 = vunpack.c.l.b16 %v2358
        %v2507 = vunpack.c.l.b16 %v2359
        %v2508 = vunpack.c.l.b16 %v2360
        %v2509 = vunpack.c.l.b16 %v2361
        %v2510 = vunpack.c.l.b16 %v2362
        %v2511 = vunpack.c.l.b16 %v2363
        %v2512 = vunpack.c.l.b16 %v2364
        %v2513 = vunpack.c.l.b16 %v2365
        %v2514 = vunpack.c.l.b16 %v2366
        %v2515 = vunpack.c.l.b16 %v2367
        %v2516 = vunpack.c.l.b16 %v2368
        %v2517 = vunpack.c.l.b16 %v2369
        %v2518 = vunpack.c.l.b16 %v2370
        %v2519 = vunpack.c.l.b16 %v2371
        %v2520 = vpack.c.b16 %v2457, %v2456
        %v2521 = vpack.c.b16 %v2459, %v2458
        %v2522 = vpack.c.b16 %v2461, %v2460
        %v2523 = vpack.c.b16 %v2463, %v2462
        %v2524 = vpack.c.b16 %v2465, %v2464
        %v2525 = vpack.c.b16 %v2467, %v2466
        %v2526 = vpack.c.b16 %v2469, %v2468
        %v2527 = vpack.c.b16 %v2471, %v2470
        %v2528 = vpack.c.b16 %v2473, %v2472
        %v2529 = vpack.c.b16 %v2475, %v2474
        %v2530 = vpack.c.b16 %v2477, %v2476
        %v2531 = vpack.c.b16 %v2479, %v2478
        %v2532 = vpack.c.b16 %v2481, %v2480
        %v2533 = vpack.c.b16 %v2483, %v2482
        %v2534 = vpack.c.b16 %v2485, %v2484
        %v2535 = vpack.c.b16 %v2487, %v2486
        %v2536 = vpack.c.b16 %v2489, %v2488
        %v2537 = vpack.c.b16 %v2491, %v2490
        %v2538 = vpack.c.b16 %v2493, %v2492
        %v2539 = vpack.c.b16 %v2495, %v2494
        %v2540 = vpack.c.b16 %v2497, %v2496
        %v2541 = vpack.c.b16 %v2499, %v2498
        %v2542 = vpack.c.b16 %v2501, %v2500
        %v2543 = vpack.c.b16 %v2503, %v2502
        %v2544 = vpack.c.b16 %v2505, %v2504
        %v2545 = vpack.c.b16 %v2507, %v2506
        %v2546 = vpack.c.b16 %v2509, %v2508
        %v2547 = vpack.c.b16 %v2511, %v2510
        %v2548 = vpack.c.b16 %v2513, %v2512
        %v2549 = vpack.c.b16 %v2515, %v2514
        %v2550 = vpack.c.b16 %v2517, %v2516
        %v2551 = vpack.c.b16 %v2519, %v2518
        %2584 = vmatprep.subr.bf16.mxu0 0
        %2585 = vmatpush1.bf16.msra.mxu0 %v2520
        %2586 = vmatprep.subr.bf16.mxu0 0
        %2587 = vmatpush1.bf16.msra.mxu0 %v2521
        %2588 = vmatprep.subr.bf16.mxu0 0
        %2589 = vmatpush1.bf16.msra.mxu0 %v2522
        %2590 = vmatprep.subr.bf16.mxu0 0
        %2591 = vmatpush1.bf16.msra.mxu0 %v2523
        %2592 = vmatprep.subr.bf16.mxu0 0
        %2593 = vmatpush1.bf16.msra.mxu0 %v2524
        %2594 = vmatprep.subr.bf16.mxu0 0
        %2595 = vmatpush1.bf16.msra.mxu0 %v2525
        %2596 = vmatprep.subr.bf16.mxu0 0
        %2597 = vmatpush1.bf16.msra.mxu0 %v2526
        %2598 = vmatprep.subr.bf16.mxu0 0
        %2599 = vmatpush1.bf16.msra.mxu0 %v2527
        %2600 = vmatprep.subr.bf16.mxu0 0
        %2601 = vmatpush1.bf16.msra.mxu0 %v2528
        %2602 = vmatprep.subr.bf16.mxu0 0
        %2603 = vmatpush1.bf16.msra.mxu0 %v2529
        %2604 = vmatprep.subr.bf16.mxu0 0
        %2605 = vmatpush1.bf16.msra.mxu0 %v2530
        %2606 = vmatprep.subr.bf16.mxu0 0
        %2607 = vmatpush1.bf16.msra.mxu0 %v2531
        %2608 = vmatprep.subr.bf16.mxu0 0
        %2609 = vmatpush1.bf16.msra.mxu0 %v2532
        %2610 = vmatprep.subr.bf16.mxu0 0
        %2611 = vmatpush1.bf16.msra.mxu0 %v2533
        %2612 = vmatprep.subr.bf16.mxu0 0
        %2613 = vmatpush1.bf16.msra.mxu0 %v2534
        %2614 = vmatprep.subr.bf16.mxu0 0
        %2615 = vmatpush1.bf16.msra.mxu0 %v2535
        %2616 = vmatprep.mubr.bf16.mxu0 %v2385
        %2617 = vmatmul.mubr.bf16.gmra.mrb[0].mxu0 %v2384
        %v2618 = vpop.f32.mrb[0].mxu0
        %v2619 = vadd.f32 0.0, %v2618
        %v2620 = vpop.f32.mrb[0].mxu0
        %v2621 = vpop.f32.mrb[0].mxu0
        %v2622 = vpop.f32.mrb[0].mxu0
        %2623 = vdwg.mxu0
        %2624 = vmatprep.subr.bf16.mxu0 0
        %2625 = vmatpush1.bf16.msra.mxu0 %v2536
        %2626 = vmatprep.subr.bf16.mxu0 0
        %2627 = vmatpush1.bf16.msra.mxu0 %v2537
        %2628 = vmatprep.subr.bf16.mxu0 0
        %2629 = vmatpush1.bf16.msra.mxu0 %v2538
        %2630 = vmatprep.subr.bf16.mxu0 0
        %2631 = vmatpush1.bf16.msra.mxu0 %v2539
        %2632 = vmatprep.subr.bf16.mxu0 0
        %2633 = vmatpush1.bf16.msra.mxu0 %v2540
        %2634 = vmatprep.subr.bf16.mxu0 0
        %2635 = vmatpush1.bf16.msra.mxu0 %v2541
        %2636 = vmatprep.subr.bf16.mxu0 0
        %2637 = vmatpush1.bf16.msra.mxu0 %v2542
        %2638 = vmatprep.subr.bf16.mxu0 0
        %2639 = vmatpush1.bf16.msra.mxu0 %v2543
        %2640 = vmatprep.subr.bf16.mxu0 0
        %2641 = vmatpush1.bf16.msra.mxu0 %v2544
        %2642 = vmatprep.subr.bf16.mxu0 0
        %2643 = vmatpush1.bf16.msra.mxu0 %v2545
        %2644 = vmatprep.subr.bf16.mxu0 0
        %2645 = vmatpush1.bf16.msra.mxu0 %v2546
        %2646 = vmatprep.subr.bf16.mxu0 0
        %2647 = vmatpush1.bf16.msra.mxu0 %v2547
        %2648 = vmatprep.subr.bf16.mxu0 0
        %2649 = vmatpush1.bf16.msra.mxu0 %v2548
        %2650 = vmatprep.subr.bf16.mxu0 0
        %2651 = vmatpush1.bf16.msra.mxu0 %v2549
        %2652 = vmatprep.subr.bf16.mxu0 0
        %2653 = vmatpush1.bf16.msra.mxu0 %v2550
        %2654 = vmatprep.subr.bf16.mxu0 0
        %2655 = vmatpush1.bf16.msra.mxu0 %v2551
        %2656 = vmatprep.mubr.bf16.mxu0 %v2387
        %2657 = vmatmul.mubr.bf16.gmra.mrb[0].mxu0 %v2386
        %v2658 = vpop.f32.mrb[0].mxu0
        %v2659 = vadd.f32 %v2619, %v2658
        %v2660 = vpop.f32.mrb[0].mxu0
        %v2661 = vpop.f32.mrb[0].mxu0
        %v2662 = vpop.f32.mrb[0].mxu0
        %2663 = vdwg.mxu0
        %v2664 = vadd.f32 %v2306, %v2659
        %s2665 = scalar_lea.vmem [#allocation11], 1280
        %v2666 = vld [vmem:[%s2665] sm:$0xf]
        %v2667 = vld [vmem:[%s2665 + $0x4] sm:$0xf]
        %v2668 = vld [vmem:[%s2665 + $0x8] sm:$0xf]
        %v2669 = vld [vmem:[%s2665 + $0xc] sm:$0xf]
        %v2670 = vld [vmem:[%s2665 + $0x10] sm:$0xf]
        %v2671 = vld [vmem:[%s2665 + $0x14] sm:$0xf]
        %v2672 = vld [vmem:[%s2665 + $0x18] sm:$0xf]
        %v2673 = vld [vmem:[%s2665 + $0x1c] sm:$0xf]
        %v2674 = vld [vmem:[%s2665 + $0x20] sm:$0xf]
        %v2675 = vld [vmem:[%s2665 + $0x24] sm:$0xf]
        %v2676 = vld [vmem:[%s2665 + $0x28] sm:$0xf]
        %v2677 = vld [vmem:[%s2665 + $0x2c] sm:$0xf]
        %v2678 = vld [vmem:[%s2665 + $0x30] sm:$0xf]
        %v2679 = vld [vmem:[%s2665 + $0x34] sm:$0xf]
        %v2680 = vld [vmem:[%s2665 + $0x38] sm:$0xf]
        %v2681 = vld [vmem:[%s2665 + $0x3c] sm:$0xf]
        %v2682 = vld [vmem:[%s2665 + $0x40] sm:$0xf]
        %v2683 = vld [vmem:[%s2665 + $0x44] sm:$0xf]
        %v2684 = vld [vmem:[%s2665 + $0x48] sm:$0xf]
        %v2685 = vld [vmem:[%s2665 + $0x4c] sm:$0xf]
        %v2686 = vld [vmem:[%s2665 + $0x50] sm:$0xf]
        %v2687 = vld [vmem:[%s2665 + $0x54] sm:$0xf]
        %v2688 = vld [vmem:[%s2665 + $0x58] sm:$0xf]
        %v2689 = vld [vmem:[%s2665 + $0x5c] sm:$0xf]
        %v2690 = vld [vmem:[%s2665 + $0x60] sm:$0xf]
        %v2691 = vld [vmem:[%s2665 + $0x64] sm:$0xf]
        %v2692 = vld [vmem:[%s2665 + $0x68] sm:$0xf]
        %v2693 = vld [vmem:[%s2665 + $0x6c] sm:$0xf]
        %v2694 = vld [vmem:[%s2665 + $0x70] sm:$0xf]
        %v2695 = vld [vmem:[%s2665 + $0x74] sm:$0xf]
        %v2696 = vld [vmem:[%s2665 + $0x78] sm:$0xf]
        %v2697 = vld [vmem:[%s2665 + $0x7c] sm:$0xf]
        %v2698 = vld [vmem:[%s2665 + $0x80] sm:$0xf]
        %v2699 = vld [vmem:[%s2665 + $0x84] sm:$0xf]
        %v2700 = vld [vmem:[%s2665 + $0x88] sm:$0xf]
        %v2701 = vld [vmem:[%s2665 + $0x8c] sm:$0xf]
        %v2702 = vld [vmem:[%s2665 + $0x90] sm:$0xf]
        %v2703 = vld [vmem:[%s2665 + $0x94] sm:$0xf]
        %v2704 = vld [vmem:[%s2665 + $0x98] sm:$0xf]
        %v2705 = vld [vmem:[%s2665 + $0x9c] sm:$0xf]
        %v2706 = vld [vmem:[%s2665 + $0xa0] sm:$0xf]
        %v2707 = vld [vmem:[%s2665 + $0xa4] sm:$0xf]
        %v2708 = vld [vmem:[%s2665 + $0xa8] sm:$0xf]
        %v2709 = vld [vmem:[%s2665 + $0xac] sm:$0xf]
        %v2710 = vld [vmem:[%s2665 + $0xb0] sm:$0xf]
        %v2711 = vld [vmem:[%s2665 + $0xb4] sm:$0xf]
        %v2712 = vld [vmem:[%s2665 + $0xb8] sm:$0xf]
        %v2713 = vld [vmem:[%s2665 + $0xbc] sm:$0xf]
        %v2714 = vld [vmem:[%s2665 + $0xc0] sm:$0xf]
        %v2715 = vld [vmem:[%s2665 + $0xc4] sm:$0xf]
        %v2716 = vld [vmem:[%s2665 + $0xc8] sm:$0xf]
        %v2717 = vld [vmem:[%s2665 + $0xcc] sm:$0xf]
        %v2718 = vld [vmem:[%s2665 + $0xd0] sm:$0xf]
        %v2719 = vld [vmem:[%s2665 + $0xd4] sm:$0xf]
        %v2720 = vld [vmem:[%s2665 + $0xd8] sm:$0xf]
        %v2721 = vld [vmem:[%s2665 + $0xdc] sm:$0xf]
        %v2722 = vld [vmem:[%s2665 + $0xe0] sm:$0xf]
        %v2723 = vld [vmem:[%s2665 + $0xe4] sm:$0xf]
        %v2724 = vld [vmem:[%s2665 + $0xe8] sm:$0xf]
        %v2725 = vld [vmem:[%s2665 + $0xec] sm:$0xf]
        %v2726 = vld [vmem:[%s2665 + $0xf0] sm:$0xf]
        %v2727 = vld [vmem:[%s2665 + $0xf4] sm:$0xf]
        %v2728 = vld [vmem:[%s2665 + $0xf8] sm:$0xf]
        %v2729 = vld [vmem:[%s2665 + $0xfc] sm:$0xf]
        %v2730 = vrot.slane %v1006, 5
        %v2731 = vrot.slane %v1010, 4
        %v2732 = vsel %vm1015, %v2731, %v2730
        %v2733 = vrot.slane %v1007, 5
        %v2734 = vrot.slane %v1011, 4
        %v2735 = vsel %vm1015, %v2734, %v2733
        %v2736 = vrot.slane %v1008, 5
        %v2737 = vrot.slane %v1012, 4
        %v2738 = vsel %vm1015, %v2737, %v2736
        %v2739 = vrot.slane %v1009, 5
        %v2740 = vrot.slane %v1013, 4
        %v2741 = vsel %vm1015, %v2740, %v2739
        %v2742 = vpack.c.b16 %v2732, %v2732
        %v2743 = vpack.c.b16 %v2735, %v2735
        %v2744 = vpack.c.b16 %v2738, %v2738
        %v2745 = vpack.c.b16 %v2741, %v2741
        %v2814 = vunpack.c.l.b16 %v2666
        %v2815 = vunpack.c.l.b16 %v2667
        %v2816 = vunpack.c.l.b16 %v2668
        %v2817 = vunpack.c.l.b16 %v2669
        %v2818 = vunpack.c.l.b16 %v2670
        %v2819 = vunpack.c.l.b16 %v2671
        %v2820 = vunpack.c.l.b16 %v2672
        %v2821 = vunpack.c.l.b16 %v2673
        %v2822 = vunpack.c.l.b16 %v2674
        %v2823 = vunpack.c.l.b16 %v2675
        %v2824 = vunpack.c.l.b16 %v2676
        %v2825 = vunpack.c.l.b16 %v2677
        %v2826 = vunpack.c.l.b16 %v2678
        %v2827 = vunpack.c.l.b16 %v2679
        %v2828 = vunpack.c.l.b16 %v2680
        %v2829 = vunpack.c.l.b16 %v2681
        %v2830 = vunpack.c.l.b16 %v2682
        %v2831 = vunpack.c.l.b16 %v2683
        %v2832 = vunpack.c.l.b16 %v2684
        %v2833 = vunpack.c.l.b16 %v2685
        %v2834 = vunpack.c.l.b16 %v2686
        %v2835 = vunpack.c.l.b16 %v2687
        %v2836 = vunpack.c.l.b16 %v2688
        %v2837 = vunpack.c.l.b16 %v2689
        %v2838 = vunpack.c.l.b16 %v2690
        %v2839 = vunpack.c.l.b16 %v2691
        %v2840 = vunpack.c.l.b16 %v2692
        %v2841 = vunpack.c.l.b16 %v2693
        %v2842 = vunpack.c.l.b16 %v2694
        %v2843 = vunpack.c.l.b16 %v2695
        %v2844 = vunpack.c.l.b16 %v2696
        %v2845 = vunpack.c.l.b16 %v2697
        %v2846 = vunpack.c.l.b16 %v2698
        %v2847 = vunpack.c.l.b16 %v2699
        %v2848 = vunpack.c.l.b16 %v2700
        %v2849 = vunpack.c.l.b16 %v2701
        %v2850 = vunpack.c.l.b16 %v2702
        %v2851 = vunpack.c.l.b16 %v2703
        %v2852 = vunpack.c.l.b16 %v2704
        %v2853 = vunpack.c.l.b16 %v2705
        %v2854 = vunpack.c.l.b16 %v2706
        %v2855 = vunpack.c.l.b16 %v2707
        %v2856 = vunpack.c.l.b16 %v2708
        %v2857 = vunpack.c.l.b16 %v2709
        %v2858 = vunpack.c.l.b16 %v2710
        %v2859 = vunpack.c.l.b16 %v2711
        %v2860 = vunpack.c.l.b16 %v2712
        %v2861 = vunpack.c.l.b16 %v2713
        %v2862 = vunpack.c.l.b16 %v2714
        %v2863 = vunpack.c.l.b16 %v2715
        %v2864 = vunpack.c.l.b16 %v2716
        %v2865 = vunpack.c.l.b16 %v2717
        %v2866 = vunpack.c.l.b16 %v2718
        %v2867 = vunpack.c.l.b16 %v2719
        %v2868 = vunpack.c.l.b16 %v2720
        %v2869 = vunpack.c.l.b16 %v2721
        %v2870 = vunpack.c.l.b16 %v2722
        %v2871 = vunpack.c.l.b16 %v2723
        %v2872 = vunpack.c.l.b16 %v2724
        %v2873 = vunpack.c.l.b16 %v2725
        %v2874 = vunpack.c.l.b16 %v2726
        %v2875 = vunpack.c.l.b16 %v2727
        %v2876 = vunpack.c.l.b16 %v2728
        %v2877 = vunpack.c.l.b16 %v2729
        %v2878 = vpack.c.b16 %v2815, %v2814
        %v2879 = vpack.c.b16 %v2817, %v2816
        %v2880 = vpack.c.b16 %v2819, %v2818
        %v2881 = vpack.c.b16 %v2821, %v2820
        %v2882 = vpack.c.b16 %v2823, %v2822
        %v2883 = vpack.c.b16 %v2825, %v2824
        %v2884 = vpack.c.b16 %v2827, %v2826
        %v2885 = vpack.c.b16 %v2829, %v2828
        %v2886 = vpack.c.b16 %v2831, %v2830
        %v2887 = vpack.c.b16 %v2833, %v2832
        %v2888 = vpack.c.b16 %v2835, %v2834
        %v2889 = vpack.c.b16 %v2837, %v2836
        %v2890 = vpack.c.b16 %v2839, %v2838
        %v2891 = vpack.c.b16 %v2841, %v2840
        %v2892 = vpack.c.b16 %v2843, %v2842
        %v2893 = vpack.c.b16 %v2845, %v2844
        %v2894 = vpack.c.b16 %v2847, %v2846
        %v2895 = vpack.c.b16 %v2849, %v2848
        %v2896 = vpack.c.b16 %v2851, %v2850
        %v2897 = vpack.c.b16 %v2853, %v2852
        %v2898 = vpack.c.b16 %v2855, %v2854
        %v2899 = vpack.c.b16 %v2857, %v2856
        %v2900 = vpack.c.b16 %v2859, %v2858
        %v2901 = vpack.c.b16 %v2861, %v2860
        %v2902 = vpack.c.b16 %v2863, %v2862
        %v2903 = vpack.c.b16 %v2865, %v2864
        %v2904 = vpack.c.b16 %v2867, %v2866
        %v2905 = vpack.c.b16 %v2869, %v2868
        %v2906 = vpack.c.b16 %v2871, %v2870
        %v2907 = vpack.c.b16 %v2873, %v2872
        %v2908 = vpack.c.b16 %v2875, %v2874
        %v2909 = vpack.c.b16 %v2877, %v2876
        %2942 = vmatprep.subr.bf16.mxu0 0
        %2943 = vmatpush1.bf16.msra.mxu0 %v2878
        %2944 = vmatprep.subr.bf16.mxu0 0
        %2945 = vmatpush1.bf16.msra.mxu0 %v2879
        %2946 = vmatprep.subr.bf16.mxu0 0
        %2947 = vmatpush1.bf16.msra.mxu0 %v2880
        %2948 = vmatprep.subr.bf16.mxu0 0
        %2949 = vmatpush1.bf16.msra.mxu0 %v2881
        %2950 = vmatprep.subr.bf16.mxu0 0
        %2951 = vmatpush1.bf16.msra.mxu0 %v2882
        %2952 = vmatprep.subr.bf16.mxu0 0
        %2953 = vmatpush1.bf16.msra.mxu0 %v2883
        %2954 = vmatprep.subr.bf16.mxu0 0
        %2955 = vmatpush1.bf16.msra.mxu0 %v2884
        %2956 = vmatprep.subr.bf16.mxu0 0
        %2957 = vmatpush1.bf16.msra.mxu0 %v2885
        %2958 = vmatprep.subr.bf16.mxu0 0
        %2959 = vmatpush1.bf16.msra.mxu0 %v2886
        %2960 = vmatprep.subr.bf16.mxu0 0
        %2961 = vmatpush1.bf16.msra.mxu0 %v2887
        %2962 = vmatprep.subr.bf16.mxu0 0
        %2963 = vmatpush1.bf16.msra.mxu0 %v2888
        %2964 = vmatprep.subr.bf16.mxu0 0
        %2965 = vmatpush1.bf16.msra.mxu0 %v2889
        %2966 = vmatprep.subr.bf16.mxu0 0
        %2967 = vmatpush1.bf16.msra.mxu0 %v2890
        %2968 = vmatprep.subr.bf16.mxu0 0
        %2969 = vmatpush1.bf16.msra.mxu0 %v2891
        %2970 = vmatprep.subr.bf16.mxu0 0
        %2971 = vmatpush1.bf16.msra.mxu0 %v2892
        %2972 = vmatprep.subr.bf16.mxu0 0
        %2973 = vmatpush1.bf16.msra.mxu0 %v2893
        %2974 = vmatprep.mubr.bf16.mxu0 %v2743
        %2975 = vmatmul.mubr.bf16.gmra.mrb[0].mxu0 %v2742
        %v2976 = vpop.f32.mrb[0].mxu0
        %v2977 = vadd.f32 0.0, %v2976
        %v2978 = vpop.f32.mrb[0].mxu0
        %v2979 = vpop.f32.mrb[0].mxu0
        %v2980 = vpop.f32.mrb[0].mxu0
        %2981 = vdwg.mxu0
        %2982 = vmatprep.subr.bf16.mxu0 0
        %2983 = vmatpush1.bf16.msra.mxu0 %v2894
        %2984 = vmatprep.subr.bf16.mxu0 0
        %2985 = vmatpush1.bf16.msra.mxu0 %v2895
        %2986 = vmatprep.subr.bf16.mxu0 0
        %2987 = vmatpush1.bf16.msra.mxu0 %v2896
        %2988 = vmatprep.subr.bf16.mxu0 0
        %2989 = vmatpush1.bf16.msra.mxu0 %v2897
        %2990 = vmatprep.subr.bf16.mxu0 0
        %2991 = vmatpush1.bf16.msra.mxu0 %v2898
        %2992 = vmatprep.subr.bf16.mxu0 0
        %2993 = vmatpush1.bf16.msra.mxu0 %v2899
        %2994 = vmatprep.subr.bf16.mxu0 0
        %2995 = vmatpush1.bf16.msra.mxu0 %v2900
        %2996 = vmatprep.subr.bf16.mxu0 0
        %2997 = vmatpush1.bf16.msra.mxu0 %v2901
        %2998 = vmatprep.subr.bf16.mxu0 0
        %2999 = vmatpush1.bf16.msra.mxu0 %v2902
        %3000 = vmatprep.subr.bf16.mxu0 0
        %3001 = vmatpush1.bf16.msra.mxu0 %v2903
        %3002 = vmatprep.subr.bf16.mxu0 0
        %3003 = vmatpush1.bf16.msra.mxu0 %v2904
        %3004 = vmatprep.subr.bf16.mxu0 0
        %3005 = vmatpush1.bf16.msra.mxu0 %v2905
        %3006 = vmatprep.subr.bf16.mxu0 0
        %3007 = vmatpush1.bf16.msra.mxu0 %v2906
        %3008 = vmatprep.subr.bf16.mxu0 0
        %3009 = vmatpush1.bf16.msra.mxu0 %v2907
        %3010 = vmatprep.subr.bf16.mxu0 0
        %3011 = vmatpush1.bf16.msra.mxu0 %v2908
        %3012 = vmatprep.subr.bf16.mxu0 0
        %3013 = vmatpush1.bf16.msra.mxu0 %v2909
        %3014 = vmatprep.mubr.bf16.mxu0 %v2745
        %3015 = vmatmul.mubr.bf16.gmra.mrb[0].mxu0 %v2744
        %v3016 = vpop.f32.mrb[0].mxu0
        %v3017 = vadd.f32 %v2977, %v3016
        %v3018 = vpop.f32.mrb[0].mxu0
        %v3019 = vpop.f32.mrb[0].mxu0
        %v3020 = vpop.f32.mrb[0].mxu0
        %3021 = vdwg.mxu0
        %v3022 = vadd.f32 %v2664, %v3017
        %s3023 = scalar_lea.vmem [#allocation11], 1536
        %v3024 = vld [vmem:[%s3023] sm:$0xf]
        %v3025 = vld [vmem:[%s3023 + $0x4] sm:$0xf]
        %v3026 = vld [vmem:[%s3023 + $0x8] sm:$0xf]
        %v3027 = vld [vmem:[%s3023 + $0xc] sm:$0xf]
        %v3028 = vld [vmem:[%s3023 + $0x10] sm:$0xf]
        %v3029 = vld [vmem:[%s3023 + $0x14] sm:$0xf]
        %v3030 = vld [vmem:[%s3023 + $0x18] sm:$0xf]
        %v3031 = vld [vmem:[%s3023 + $0x1c] sm:$0xf]
        %v3032 = vld [vmem:[%s3023 + $0x20] sm:$0xf]
        %v3033 = vld [vmem:[%s3023 + $0x24] sm:$0xf]
        %v3034 = vld [vmem:[%s3023 + $0x28] sm:$0xf]
        %v3035 = vld [vmem:[%s3023 + $0x2c] sm:$0xf]
        %v3036 = vld [vmem:[%s3023 + $0x30] sm:$0xf]
        %v3037 = vld [vmem:[%s3023 + $0x34] sm:$0xf]
        %v3038 = vld [vmem:[%s3023 + $0x38] sm:$0xf]
        %v3039 = vld [vmem:[%s3023 + $0x3c] sm:$0xf]
        %v3040 = vld [vmem:[%s3023 + $0x40] sm:$0xf]
        %v3041 = vld [vmem:[%s3023 + $0x44] sm:$0xf]
        %v3042 = vld [vmem:[%s3023 + $0x48] sm:$0xf]
        %v3043 = vld [vmem:[%s3023 + $0x4c] sm:$0xf]
        %v3044 = vld [vmem:[%s3023 + $0x50] sm:$0xf]
        %v3045 = vld [vmem:[%s3023 + $0x54] sm:$0xf]
        %v3046 = vld [vmem:[%s3023 + $0x58] sm:$0xf]
        %v3047 = vld [vmem:[%s3023 + $0x5c] sm:$0xf]
        %v3048 = vld [vmem:[%s3023 + $0x60] sm:$0xf]
        %v3049 = vld [vmem:[%s3023 + $0x64] sm:$0xf]
        %v3050 = vld [vmem:[%s3023 + $0x68] sm:$0xf]
        %v3051 = vld [vmem:[%s3023 + $0x6c] sm:$0xf]
        %v3052 = vld [vmem:[%s3023 + $0x70] sm:$0xf]
        %v3053 = vld [vmem:[%s3023 + $0x74] sm:$0xf]
        %v3054 = vld [vmem:[%s3023 + $0x78] sm:$0xf]
        %v3055 = vld [vmem:[%s3023 + $0x7c] sm:$0xf]
        %v3056 = vld [vmem:[%s3023 + $0x80] sm:$0xf]
        %v3057 = vld [vmem:[%s3023 + $0x84] sm:$0xf]
        %v3058 = vld [vmem:[%s3023 + $0x88] sm:$0xf]
        %v3059 = vld [vmem:[%s3023 + $0x8c] sm:$0xf]
        %v3060 = vld [vmem:[%s3023 + $0x90] sm:$0xf]
        %v3061 = vld [vmem:[%s3023 + $0x94] sm:$0xf]
        %v3062 = vld [vmem:[%s3023 + $0x98] sm:$0xf]
        %v3063 = vld [vmem:[%s3023 + $0x9c] sm:$0xf]
        %v3064 = vld [vmem:[%s3023 + $0xa0] sm:$0xf]
        %v3065 = vld [vmem:[%s3023 + $0xa4] sm:$0xf]
        %v3066 = vld [vmem:[%s3023 + $0xa8] sm:$0xf]
        %v3067 = vld [vmem:[%s3023 + $0xac] sm:$0xf]
        %v3068 = vld [vmem:[%s3023 + $0xb0] sm:$0xf]
        %v3069 = vld [vmem:[%s3023 + $0xb4] sm:$0xf]
        %v3070 = vld [vmem:[%s3023 + $0xb8] sm:$0xf]
        %v3071 = vld [vmem:[%s3023 + $0xbc] sm:$0xf]
        %v3072 = vld [vmem:[%s3023 + $0xc0] sm:$0xf]
        %v3073 = vld [vmem:[%s3023 + $0xc4] sm:$0xf]
        %v3074 = vld [vmem:[%s3023 + $0xc8] sm:$0xf]
        %v3075 = vld [vmem:[%s3023 + $0xcc] sm:$0xf]
        %v3076 = vld [vmem:[%s3023 + $0xd0] sm:$0xf]
        %v3077 = vld [vmem:[%s3023 + $0xd4] sm:$0xf]
        %v3078 = vld [vmem:[%s3023 + $0xd8] sm:$0xf]
        %v3079 = vld [vmem:[%s3023 + $0xdc] sm:$0xf]
        %v3080 = vld [vmem:[%s3023 + $0xe0] sm:$0xf]
        %v3081 = vld [vmem:[%s3023 + $0xe4] sm:$0xf]
        %v3082 = vld [vmem:[%s3023 + $0xe8] sm:$0xf]
        %v3083 = vld [vmem:[%s3023 + $0xec] sm:$0xf]
        %v3084 = vld [vmem:[%s3023 + $0xf0] sm:$0xf]
        %v3085 = vld [vmem:[%s3023 + $0xf4] sm:$0xf]
        %v3086 = vld [vmem:[%s3023 + $0xf8] sm:$0xf]
        %v3087 = vld [vmem:[%s3023 + $0xfc] sm:$0xf]
        %v3088 = vrot.slane %v1006, 6
        %v3089 = vrot.slane %v1010, 5
        %v3090 = vsel %vm1015, %v3089, %v3088
        %v3091 = vrot.slane %v1007, 6
        %v3092 = vrot.slane %v1011, 5
        %v3093 = vsel %vm1015, %v3092, %v3091
        %v3094 = vrot.slane %v1008, 6
        %v3095 = vrot.slane %v1012, 5
        %v3096 = vsel %vm1015, %v3095, %v3094
        %v3097 = vrot.slane %v1009, 6
        %v3098 = vrot.slane %v1013, 5
        %v3099 = vsel %vm1015, %v3098, %v3097
        %v3100 = vpack.c.b16 %v3090, %v3090
        %v3101 = vpack.c.b16 %v3093, %v3093
        %v3102 = vpack.c.b16 %v3096, %v3096
        %v3103 = vpack.c.b16 %v3099, %v3099
        %v3172 = vunpack.c.l.b16 %v3024
        %v3173 = vunpack.c.l.b16 %v3025
        %v3174 = vunpack.c.l.b16 %v3026
        %v3175 = vunpack.c.l.b16 %v3027
        %v3176 = vunpack.c.l.b16 %v3028
        %v3177 = vunpack.c.l.b16 %v3029
        %v3178 = vunpack.c.l.b16 %v3030
        %v3179 = vunpack.c.l.b16 %v3031
        %v3180 = vunpack.c.l.b16 %v3032
        %v3181 = vunpack.c.l.b16 %v3033
        %v3182 = vunpack.c.l.b16 %v3034
        %v3183 = vunpack.c.l.b16 %v3035
        %v3184 = vunpack.c.l.b16 %v3036
        %v3185 = vunpack.c.l.b16 %v3037
        %v3186 = vunpack.c.l.b16 %v3038
        %v3187 = vunpack.c.l.b16 %v3039
        %v3188 = vunpack.c.l.b16 %v3040
        %v3189 = vunpack.c.l.b16 %v3041
        %v3190 = vunpack.c.l.b16 %v3042
        %v3191 = vunpack.c.l.b16 %v3043
        %v3192 = vunpack.c.l.b16 %v3044
        %v3193 = vunpack.c.l.b16 %v3045
        %v3194 = vunpack.c.l.b16 %v3046
        %v3195 = vunpack.c.l.b16 %v3047
        %v3196 = vunpack.c.l.b16 %v3048
        %v3197 = vunpack.c.l.b16 %v3049
        %v3198 = vunpack.c.l.b16 %v3050
        %v3199 = vunpack.c.l.b16 %v3051
        %v3200 = vunpack.c.l.b16 %v3052
        %v3201 = vunpack.c.l.b16 %v3053
        %v3202 = vunpack.c.l.b16 %v3054
        %v3203 = vunpack.c.l.b16 %v3055
        %v3204 = vunpack.c.l.b16 %v3056
        %v3205 = vunpack.c.l.b16 %v3057
        %v3206 = vunpack.c.l.b16 %v3058
        %v3207 = vunpack.c.l.b16 %v3059
        %v3208 = vunpack.c.l.b16 %v3060
        %v3209 = vunpack.c.l.b16 %v3061
        %v3210 = vunpack.c.l.b16 %v3062
        %v3211 = vunpack.c.l.b16 %v3063
        %v3212 = vunpack.c.l.b16 %v3064
        %v3213 = vunpack.c.l.b16 %v3065
        %v3214 = vunpack.c.l.b16 %v3066
        %v3215 = vunpack.c.l.b16 %v3067
        %v3216 = vunpack.c.l.b16 %v3068
        %v3217 = vunpack.c.l.b16 %v3069
        %v3218 = vunpack.c.l.b16 %v3070
        %v3219 = vunpack.c.l.b16 %v3071
        %v3220 = vunpack.c.l.b16 %v3072
        %v3221 = vunpack.c.l.b16 %v3073
        %v3222 = vunpack.c.l.b16 %v3074
        %v3223 = vunpack.c.l.b16 %v3075
        %v3224 = vunpack.c.l.b16 %v3076
        %v3225 = vunpack.c.l.b16 %v3077
        %v3226 = vunpack.c.l.b16 %v3078
        %v3227 = vunpack.c.l.b16 %v3079
        %v3228 = vunpack.c.l.b16 %v3080
        %v3229 = vunpack.c.l.b16 %v3081
        %v3230 = vunpack.c.l.b16 %v3082
        %v3231 = vunpack.c.l.b16 %v3083
        %v3232 = vunpack.c.l.b16 %v3084
        %v3233 = vunpack.c.l.b16 %v3085
        %v3234 = vunpack.c.l.b16 %v3086
        %v3235 = vunpack.c.l.b16 %v3087
        %v3236 = vpack.c.b16 %v3173, %v3172
        %v3237 = vpack.c.b16 %v3175, %v3174
        %v3238 = vpack.c.b16 %v3177, %v3176
        %v3239 = vpack.c.b16 %v3179, %v3178
        %v3240 = vpack.c.b16 %v3181, %v3180
        %v3241 = vpack.c.b16 %v3183, %v3182
        %v3242 = vpack.c.b16 %v3185, %v3184
        %v3243 = vpack.c.b16 %v3187, %v3186
        %v3244 = vpack.c.b16 %v3189, %v3188
        %v3245 = vpack.c.b16 %v3191, %v3190
        %v3246 = vpack.c.b16 %v3193, %v3192
        %v3247 = vpack.c.b16 %v3195, %v3194
        %v3248 = vpack.c.b16 %v3197, %v3196
        %v3249 = vpack.c.b16 %v3199, %v3198
        %v3250 = vpack.c.b16 %v3201, %v3200
        %v3251 = vpack.c.b16 %v3203, %v3202
        %v3252 = vpack.c.b16 %v3205, %v3204
        %v3253 = vpack.c.b16 %v3207, %v3206
        %v3254 = vpack.c.b16 %v3209, %v3208
        %v3255 = vpack.c.b16 %v3211, %v3210
        %v3256 = vpack.c.b16 %v3213, %v3212
        %v3257 = vpack.c.b16 %v3215, %v3214
        %v3258 = vpack.c.b16 %v3217, %v3216
        %v3259 = vpack.c.b16 %v3219, %v3218
        %v3260 = vpack.c.b16 %v3221, %v3220
        %v3261 = vpack.c.b16 %v3223, %v3222
        %v3262 = vpack.c.b16 %v3225, %v3224
        %v3263 = vpack.c.b16 %v3227, %v3226
        %v3264 = vpack.c.b16 %v3229, %v3228
        %v3265 = vpack.c.b16 %v3231, %v3230
        %v3266 = vpack.c.b16 %v3233, %v3232
        %v3267 = vpack.c.b16 %v3235, %v3234
        %3300 = vmatprep.subr.bf16.mxu0 0
        %3301 = vmatpush1.bf16.msra.mxu0 %v3236
        %3302 = vmatprep.subr.bf16.mxu0 0
        %3303 = vmatpush1.bf16.msra.mxu0 %v3237
        %3304 = vmatprep.subr.bf16.mxu0 0
        %3305 = vmatpush1.bf16.msra.mxu0 %v3238
        %3306 = vmatprep.subr.bf16.mxu0 0
        %3307 = vmatpush1.bf16.msra.mxu0 %v3239
        %3308 = vmatprep.subr.bf16.mxu0 0
        %3309 = vmatpush1.bf16.msra.mxu0 %v3240
        %3310 = vmatprep.subr.bf16.mxu0 0
        %3311 = vmatpush1.bf16.msra.mxu0 %v3241
        %3312 = vmatprep.subr.bf16.mxu0 0
        %3313 = vmatpush1.bf16.msra.mxu0 %v3242
        %3314 = vmatprep.subr.bf16.mxu0 0
        %3315 = vmatpush1.bf16.msra.mxu0 %v3243
        %3316 = vmatprep.subr.bf16.mxu0 0
        %3317 = vmatpush1.bf16.msra.mxu0 %v3244
        %3318 = vmatprep.subr.bf16.mxu0 0
        %3319 = vmatpush1.bf16.msra.mxu0 %v3245
        %3320 = vmatprep.subr.bf16.mxu0 0
        %3321 = vmatpush1.bf16.msra.mxu0 %v3246
        %3322 = vmatprep.subr.bf16.mxu0 0
        %3323 = vmatpush1.bf16.msra.mxu0 %v3247
        %3324 = vmatprep.subr.bf16.mxu0 0
        %3325 = vmatpush1.bf16.msra.mxu0 %v3248
        %3326 = vmatprep.subr.bf16.mxu0 0
        %3327 = vmatpush1.bf16.msra.mxu0 %v3249
        %3328 = vmatprep.subr.bf16.mxu0 0
        %3329 = vmatpush1.bf16.msra.mxu0 %v3250
        %3330 = vmatprep.subr.bf16.mxu0 0
        %3331 = vmatpush1.bf16.msra.mxu0 %v3251
        %3332 = vmatprep.mubr.bf16.mxu0 %v3101
        %3333 = vmatmul.mubr.bf16.gmra.mrb[0].mxu0 %v3100
        %v3334 = vpop.f32.mrb[0].mxu0
        %v3335 = vadd.f32 0.0, %v3334
        %v3336 = vpop.f32.mrb[0].mxu0
        %v3337 = vpop.f32.mrb[0].mxu0
        %v3338 = vpop.f32.mrb[0].mxu0
        %3339 = vdwg.mxu0
        %3340 = vmatprep.subr.bf16.mxu0 0
        %3341 = vmatpush1.bf16.msra.mxu0 %v3252
        %3342 = vmatprep.subr.bf16.mxu0 0
        %3343 = vmatpush1.bf16.msra.mxu0 %v3253
        %3344 = vmatprep.subr.bf16.mxu0 0
        %3345 = vmatpush1.bf16.msra.mxu0 %v3254
        %3346 = vmatprep.subr.bf16.mxu0 0
        %3347 = vmatpush1.bf16.msra.mxu0 %v3255
        %3348 = vmatprep.subr.bf16.mxu0 0
        %3349 = vmatpush1.bf16.msra.mxu0 %v3256
        %3350 = vmatprep.subr.bf16.mxu0 0
        %3351 = vmatpush1.bf16.msra.mxu0 %v3257
        %3352 = vmatprep.subr.bf16.mxu0 0
        %3353 = vmatpush1.bf16.msra.mxu0 %v3258
        %3354 = vmatprep.subr.bf16.mxu0 0
        %3355 = vmatpush1.bf16.msra.mxu0 %v3259
        %3356 = vmatprep.subr.bf16.mxu0 0
        %3357 = vmatpush1.bf16.msra.mxu0 %v3260
        %3358 = vmatprep.subr.bf16.mxu0 0
        %3359 = vmatpush1.bf16.msra.mxu0 %v3261
        %3360 = vmatprep.subr.bf16.mxu0 0
        %3361 = vmatpush1.bf16.msra.mxu0 %v3262
        %3362 = vmatprep.subr.bf16.mxu0 0
        %3363 = vmatpush1.bf16.msra.mxu0 %v3263
        %3364 = vmatprep.subr.bf16.mxu0 0
        %3365 = vmatpush1.bf16.msra.mxu0 %v3264
        %3366 = vmatprep.subr.bf16.mxu0 0
        %3367 = vmatpush1.bf16.msra.mxu0 %v3265
        %3368 = vmatprep.subr.bf16.mxu0 0
        %3369 = vmatpush1.bf16.msra.mxu0 %v3266
        %3370 = vmatprep.subr.bf16.mxu0 0
        %3371 = vmatpush1.bf16.msra.mxu0 %v3267
        %3372 = vmatprep.mubr.bf16.mxu0 %v3103
        %3373 = vmatmul.mubr.bf16.gmra.mrb[0].mxu0 %v3102
        %v3374 = vpop.f32.mrb[0].mxu0
        %v3375 = vadd.f32 %v3335, %v3374
        %v3376 = vpop.f32.mrb[0].mxu0
        %v3377 = vpop.f32.mrb[0].mxu0
        %v3378 = vpop.f32.mrb[0].mxu0
        %3379 = vdwg.mxu0
        %v3380 = vadd.f32 %v3022, %v3375
        %s3381 = scalar_lea.vmem [#allocation11], 1792
        %v3382 = vld [vmem:[%s3381] sm:$0xf]
        %v3383 = vld [vmem:[%s3381 + $0x4] sm:$0xf]
        %v3384 = vld [vmem:[%s3381 + $0x8] sm:$0xf]
        %v3385 = vld [vmem:[%s3381 + $0xc] sm:$0xf]
        %v3386 = vld [vmem:[%s3381 + $0x10] sm:$0xf]
        %v3387 = vld [vmem:[%s3381 + $0x14] sm:$0xf]
        %v3388 = vld [vmem:[%s3381 + $0x18] sm:$0xf]
        %v3389 = vld [vmem:[%s3381 + $0x1c] sm:$0xf]
        %v3390 = vld [vmem:[%s3381 + $0x20] sm:$0xf]
        %v3391 = vld [vmem:[%s3381 + $0x24] sm:$0xf]
        %v3392 = vld [vmem:[%s3381 + $0x28] sm:$0xf]
        %v3393 = vld [vmem:[%s3381 + $0x2c] sm:$0xf]
        %v3394 = vld [vmem:[%s3381 + $0x30] sm:$0xf]
        %v3395 = vld [vmem:[%s3381 + $0x34] sm:$0xf]
        %v3396 = vld [vmem:[%s3381 + $0x38] sm:$0xf]
        %v3397 = vld [vmem:[%s3381 + $0x3c] sm:$0xf]
        %v3398 = vld [vmem:[%s3381 + $0x40] sm:$0xf]
        %v3399 = vld [vmem:[%s3381 + $0x44] sm:$0xf]
        %v3400 = vld [vmem:[%s3381 + $0x48] sm:$0xf]
        %v3401 = vld [vmem:[%s3381 + $0x4c] sm:$0xf]
        %v3402 = vld [vmem:[%s3381 + $0x50] sm:$0xf]
        %v3403 = vld [vmem:[%s3381 + $0x54] sm:$0xf]
        %v3404 = vld [vmem:[%s3381 + $0x58] sm:$0xf]
        %v3405 = vld [vmem:[%s3381 + $0x5c] sm:$0xf]
        %v3406 = vld [vmem:[%s3381 + $0x60] sm:$0xf]
        %v3407 = vld [vmem:[%s3381 + $0x64] sm:$0xf]
        %v3408 = vld [vmem:[%s3381 + $0x68] sm:$0xf]
        %v3409 = vld [vmem:[%s3381 + $0x6c] sm:$0xf]
        %v3410 = vld [vmem:[%s3381 + $0x70] sm:$0xf]
        %v3411 = vld [vmem:[%s3381 + $0x74] sm:$0xf]
        %v3412 = vld [vmem:[%s3381 + $0x78] sm:$0xf]
        %v3413 = vld [vmem:[%s3381 + $0x7c] sm:$0xf]
        %v3414 = vld [vmem:[%s3381 + $0x80] sm:$0xf]
        %v3415 = vld [vmem:[%s3381 + $0x84] sm:$0xf]
        %v3416 = vld [vmem:[%s3381 + $0x88] sm:$0xf]
        %v3417 = vld [vmem:[%s3381 + $0x8c] sm:$0xf]
        %v3418 = vld [vmem:[%s3381 + $0x90] sm:$0xf]
        %v3419 = vld [vmem:[%s3381 + $0x94] sm:$0xf]
        %v3420 = vld [vmem:[%s3381 + $0x98] sm:$0xf]
        %v3421 = vld [vmem:[%s3381 + $0x9c] sm:$0xf]
        %v3422 = vld [vmem:[%s3381 + $0xa0] sm:$0xf]
        %v3423 = vld [vmem:[%s3381 + $0xa4] sm:$0xf]
        %v3424 = vld [vmem:[%s3381 + $0xa8] sm:$0xf]
        %v3425 = vld [vmem:[%s3381 + $0xac] sm:$0xf]
        %v3426 = vld [vmem:[%s3381 + $0xb0] sm:$0xf]
        %v3427 = vld [vmem:[%s3381 + $0xb4] sm:$0xf]
        %v3428 = vld [vmem:[%s3381 + $0xb8] sm:$0xf]
        %v3429 = vld [vmem:[%s3381 + $0xbc] sm:$0xf]
        %v3430 = vld [vmem:[%s3381 + $0xc0] sm:$0xf]
        %v3431 = vld [vmem:[%s3381 + $0xc4] sm:$0xf]
        %v3432 = vld [vmem:[%s3381 + $0xc8] sm:$0xf]
        %v3433 = vld [vmem:[%s3381 + $0xcc] sm:$0xf]
        %v3434 = vld [vmem:[%s3381 + $0xd0] sm:$0xf]
        %v3435 = vld [vmem:[%s3381 + $0xd4] sm:$0xf]
        %v3436 = vld [vmem:[%s3381 + $0xd8] sm:$0xf]
        %v3437 = vld [vmem:[%s3381 + $0xdc] sm:$0xf]
        %v3438 = vld [vmem:[%s3381 + $0xe0] sm:$0xf]
        %v3439 = vld [vmem:[%s3381 + $0xe4] sm:$0xf]
        %v3440 = vld [vmem:[%s3381 + $0xe8] sm:$0xf]
        %v3441 = vld [vmem:[%s3381 + $0xec] sm:$0xf]
        %v3442 = vld [vmem:[%s3381 + $0xf0] sm:$0xf]
        %v3443 = vld [vmem:[%s3381 + $0xf4] sm:$0xf]
        %v3444 = vld [vmem:[%s3381 + $0xf8] sm:$0xf]
        %v3445 = vld [vmem:[%s3381 + $0xfc] sm:$0xf]
        %v3446 = vrot.slane %v1006, 7
        %v3447 = vrot.slane %v1010, 6
        %v3448 = vsel %vm1015, %v3447, %v3446
        %v3449 = vrot.slane %v1007, 7
        %v3450 = vrot.slane %v1011, 6
        %v3451 = vsel %vm1015, %v3450, %v3449
        %v3452 = vrot.slane %v1008, 7
        %v3453 = vrot.slane %v1012, 6
        %v3454 = vsel %vm1015, %v3453, %v3452
        %v3455 = vrot.slane %v1009, 7
        %v3456 = vrot.slane %v1013, 6
        %v3457 = vsel %vm1015, %v3456, %v3455
        %v3458 = vpack.c.b16 %v3448, %v3448
        %v3459 = vpack.c.b16 %v3451, %v3451
        %v3460 = vpack.c.b16 %v3454, %v3454
        %v3461 = vpack.c.b16 %v3457, %v3457
        %v3530 = vunpack.c.l.b16 %v3382
        %v3531 = vunpack.c.l.b16 %v3383
        %v3532 = vunpack.c.l.b16 %v3384
        %v3533 = vunpack.c.l.b16 %v3385
        %v3534 = vunpack.c.l.b16 %v3386
        %v3535 = vunpack.c.l.b16 %v3387
        %v3536 = vunpack.c.l.b16 %v3388
        %v3537 = vunpack.c.l.b16 %v3389
        %v3538 = vunpack.c.l.b16 %v3390
        %v3539 = vunpack.c.l.b16 %v3391
        %v3540 = vunpack.c.l.b16 %v3392
        %v3541 = vunpack.c.l.b16 %v3393
        %v3542 = vunpack.c.l.b16 %v3394
        %v3543 = vunpack.c.l.b16 %v3395
        %v3544 = vunpack.c.l.b16 %v3396
        %v3545 = vunpack.c.l.b16 %v3397
        %v3546 = vunpack.c.l.b16 %v3398
        %v3547 = vunpack.c.l.b16 %v3399
        %v3548 = vunpack.c.l.b16 %v3400
        %v3549 = vunpack.c.l.b16 %v3401
        %v3550 = vunpack.c.l.b16 %v3402
        %v3551 = vunpack.c.l.b16 %v3403
        %v3552 = vunpack.c.l.b16 %v3404
        %v3553 = vunpack.c.l.b16 %v3405
        %v3554 = vunpack.c.l.b16 %v3406
        %v3555 = vunpack.c.l.b16 %v3407
        %v3556 = vunpack.c.l.b16 %v3408
        %v3557 = vunpack.c.l.b16 %v3409
        %v3558 = vunpack.c.l.b16 %v3410
        %v3559 = vunpack.c.l.b16 %v3411
        %v3560 = vunpack.c.l.b16 %v3412
        %v3561 = vunpack.c.l.b16 %v3413
        %v3562 = vunpack.c.l.b16 %v3414
        %v3563 = vunpack.c.l.b16 %v3415
        %v3564 = vunpack.c.l.b16 %v3416
        %v3565 = vunpack.c.l.b16 %v3417
        %v3566 = vunpack.c.l.b16 %v3418
        %v3567 = vunpack.c.l.b16 %v3419
        %v3568 = vunpack.c.l.b16 %v3420
        %v3569 = vunpack.c.l.b16 %v3421
        %v3570 = vunpack.c.l.b16 %v3422
        %v3571 = vunpack.c.l.b16 %v3423
        %v3572 = vunpack.c.l.b16 %v3424
        %v3573 = vunpack.c.l.b16 %v3425
        %v3574 = vunpack.c.l.b16 %v3426
        %v3575 = vunpack.c.l.b16 %v3427
        %v3576 = vunpack.c.l.b16 %v3428
        %v3577 = vunpack.c.l.b16 %v3429
        %v3578 = vunpack.c.l.b16 %v3430
        %v3579 = vunpack.c.l.b16 %v3431
        %v3580 = vunpack.c.l.b16 %v3432
        %v3581 = vunpack.c.l.b16 %v3433
        %v3582 = vunpack.c.l.b16 %v3434
        %v3583 = vunpack.c.l.b16 %v3435
        %v3584 = vunpack.c.l.b16 %v3436
        %v3585 = vunpack.c.l.b16 %v3437
        %v3586 = vunpack.c.l.b16 %v3438
        %v3587 = vunpack.c.l.b16 %v3439
        %v3588 = vunpack.c.l.b16 %v3440
        %v3589 = vunpack.c.l.b16 %v3441
        %v3590 = vunpack.c.l.b16 %v3442
        %v3591 = vunpack.c.l.b16 %v3443
        %v3592 = vunpack.c.l.b16 %v3444
        %v3593 = vunpack.c.l.b16 %v3445
        %v3594 = vpack.c.b16 %v3531, %v3530
        %v3595 = vpack.c.b16 %v3533, %v3532
        %v3596 = vpack.c.b16 %v3535, %v3534
        %v3597 = vpack.c.b16 %v3537, %v3536
        %v3598 = vpack.c.b16 %v3539, %v3538
        %v3599 = vpack.c.b16 %v3541, %v3540
        %v3600 = vpack.c.b16 %v3543, %v3542
        %v3601 = vpack.c.b16 %v3545, %v3544
        %v3602 = vpack.c.b16 %v3547, %v3546
        %v3603 = vpack.c.b16 %v3549, %v3548
        %v3604 = vpack.c.b16 %v3551, %v3550
        %v3605 = vpack.c.b16 %v3553, %v3552
        %v3606 = vpack.c.b16 %v3555, %v3554
        %v3607 = vpack.c.b16 %v3557, %v3556
        %v3608 = vpack.c.b16 %v3559, %v3558
        %v3609 = vpack.c.b16 %v3561, %v3560
        %v3610 = vpack.c.b16 %v3563, %v3562
        %v3611 = vpack.c.b16 %v3565, %v3564
        %v3612 = vpack.c.b16 %v3567, %v3566
        %v3613 = vpack.c.b16 %v3569, %v3568
        %v3614 = vpack.c.b16 %v3571, %v3570
        %v3615 = vpack.c.b16 %v3573, %v3572
        %v3616 = vpack.c.b16 %v3575, %v3574
        %v3617 = vpack.c.b16 %v3577, %v3576
        %v3618 = vpack.c.b16 %v3579, %v3578
        %v3619 = vpack.c.b16 %v3581, %v3580
        %v3620 = vpack.c.b16 %v3583, %v3582
        %v3621 = vpack.c.b16 %v3585, %v3584
        %v3622 = vpack.c.b16 %v3587, %v3586
        %v3623 = vpack.c.b16 %v3589, %v3588
        %v3624 = vpack.c.b16 %v3591, %v3590
        %v3625 = vpack.c.b16 %v3593, %v3592
        %3658 = vmatprep.subr.bf16.mxu0 0
        %3659 = vmatpush1.bf16.msra.mxu0 %v3594
        %3660 = vmatprep.subr.bf16.mxu0 0
        %3661 = vmatpush1.bf16.msra.mxu0 %v3595
        %3662 = vmatprep.subr.bf16.mxu0 0
        %3663 = vmatpush1.bf16.msra.mxu0 %v3596
        %3664 = vmatprep.subr.bf16.mxu0 0
        %3665 = vmatpush1.bf16.msra.mxu0 %v3597
        %3666 = vmatprep.subr.bf16.mxu0 0
        %3667 = vmatpush1.bf16.msra.mxu0 %v3598
        %3668 = vmatprep.subr.bf16.mxu0 0
        %3669 = vmatpush1.bf16.msra.mxu0 %v3599
        %3670 = vmatprep.subr.bf16.mxu0 0
        %3671 = vmatpush1.bf16.msra.mxu0 %v3600
        %3672 = vmatprep.subr.bf16.mxu0 0
        %3673 = vmatpush1.bf16.msra.mxu0 %v3601
        %3674 = vmatprep.subr.bf16.mxu0 0
        %3675 = vmatpush1.bf16.msra.mxu0 %v3602
        %3676 = vmatprep.subr.bf16.mxu0 0
        %3677 = vmatpush1.bf16.msra.mxu0 %v3603
        %3678 = vmatprep.subr.bf16.mxu0 0
        %3679 = vmatpush1.bf16.msra.mxu0 %v3604
        %3680 = vmatprep.subr.bf16.mxu0 0
        %3681 = vmatpush1.bf16.msra.mxu0 %v3605
        %3682 = vmatprep.subr.bf16.mxu0 0
        %3683 = vmatpush1.bf16.msra.mxu0 %v3606
        %3684 = vmatprep.subr.bf16.mxu0 0
        %3685 = vmatpush1.bf16.msra.mxu0 %v3607
        %3686 = vmatprep.subr.bf16.mxu0 0
        %3687 = vmatpush1.bf16.msra.mxu0 %v3608
        %3688 = vmatprep.subr.bf16.mxu0 0
        %3689 = vmatpush1.bf16.msra.mxu0 %v3609
        %3690 = vmatprep.mubr.bf16.mxu0 %v3459
        %3691 = vmatmul.mubr.bf16.gmra.mrb[0].mxu0 %v3458
        %v3692 = vpop.f32.mrb[0].mxu0
        %v3693 = vadd.f32 0.0, %v3692
        %v3694 = vpop.f32.mrb[0].mxu0
        %v3695 = vpop.f32.mrb[0].mxu0
        %v3696 = vpop.f32.mrb[0].mxu0
        %3697 = vdwg.mxu0
        %3698 = vmatprep.subr.bf16.mxu0 0
        %3699 = vmatpush1.bf16.msra.mxu0 %v3610
        %3700 = vmatprep.subr.bf16.mxu0 0
        %3701 = vmatpush1.bf16.msra.mxu0 %v3611
        %3702 = vmatprep.subr.bf16.mxu0 0
        %3703 = vmatpush1.bf16.msra.mxu0 %v3612
        %3704 = vmatprep.subr.bf16.mxu0 0
        %3705 = vmatpush1.bf16.msra.mxu0 %v3613
        %3706 = vmatprep.subr.bf16.mxu0 0
        %3707 = vmatpush1.bf16.msra.mxu0 %v3614
        %3708 = vmatprep.subr.bf16.mxu0 0
        %3709 = vmatpush1.bf16.msra.mxu0 %v3615
        %3710 = vmatprep.subr.bf16.mxu0 0
        %3711 = vmatpush1.bf16.msra.mxu0 %v3616
        %3712 = vmatprep.subr.bf16.mxu0 0
        %3713 = vmatpush1.bf16.msra.mxu0 %v3617
        %3714 = vmatprep.subr.bf16.mxu0 0
        %3715 = vmatpush1.bf16.msra.mxu0 %v3618
        %3716 = vmatprep.subr.bf16.mxu0 0
        %3717 = vmatpush1.bf16.msra.mxu0 %v3619
        %3718 = vmatprep.subr.bf16.mxu0 0
        %3719 = vmatpush1.bf16.msra.mxu0 %v3620
        %3720 = vmatprep.subr.bf16.mxu0 0
        %3721 = vmatpush1.bf16.msra.mxu0 %v3621
        %3722 = vmatprep.subr.bf16.mxu0 0
        %3723 = vmatpush1.bf16.msra.mxu0 %v3622
        %3724 = vmatprep.subr.bf16.mxu0 0
        %3725 = vmatpush1.bf16.msra.mxu0 %v3623
        %3726 = vmatprep.subr.bf16.mxu0 0
        %3727 = vmatpush1.bf16.msra.mxu0 %v3624
        %3728 = vmatprep.subr.bf16.mxu0 0
        %3729 = vmatpush1.bf16.msra.mxu0 %v3625
        %3730 = vmatprep.mubr.bf16.mxu0 %v3461
        %3731 = vmatmul.mubr.bf16.gmra.mrb[0].mxu0 %v3460
        %v3732 = vpop.f32.mrb[0].mxu0
        %v3733 = vadd.f32 %v3693, %v3732
        %v3734 = vpop.f32.mrb[0].mxu0
        %v3735 = vpop.f32.mrb[0].mxu0
        %v3736 = vpop.f32.mrb[0].mxu0
        %3737 = vdwg.mxu0
        %v3738 = vadd.f32 %v3380, %v3733
        %s3739 = scalar_lea.vmem [#allocation11], 2048
        %v3740 = vld [vmem:[%s3739] sm:$0xf]
        %v3741 = vld [vmem:[%s3739 + $0x4] sm:$0xf]
        %v3742 = vld [vmem:[%s3739 + $0x8] sm:$0xf]
        %v3743 = vld [vmem:[%s3739 + $0xc] sm:$0xf]
        %v3744 = vld [vmem:[%s3739 + $0x10] sm:$0xf]
        %v3745 = vld [vmem:[%s3739 + $0x14] sm:$0xf]
        %v3746 = vld [vmem:[%s3739 + $0x18] sm:$0xf]
        %v3747 = vld [vmem:[%s3739 + $0x1c] sm:$0xf]
        %v3748 = vld [vmem:[%s3739 + $0x20] sm:$0xf]
        %v3749 = vld [vmem:[%s3739 + $0x24] sm:$0xf]
        %v3750 = vld [vmem:[%s3739 + $0x28] sm:$0xf]
        %v3751 = vld [vmem:[%s3739 + $0x2c] sm:$0xf]
        %v3752 = vld [vmem:[%s3739 + $0x30] sm:$0xf]
        %v3753 = vld [vmem:[%s3739 + $0x34] sm:$0xf]
        %v3754 = vld [vmem:[%s3739 + $0x38] sm:$0xf]
        %v3755 = vld [vmem:[%s3739 + $0x3c] sm:$0xf]
        %v3756 = vld [vmem:[%s3739 + $0x40] sm:$0xf]
        %v3757 = vld [vmem:[%s3739 + $0x44] sm:$0xf]
        %v3758 = vld [vmem:[%s3739 + $0x48] sm:$0xf]
        %v3759 = vld [vmem:[%s3739 + $0x4c] sm:$0xf]
        %v3760 = vld [vmem:[%s3739 + $0x50] sm:$0xf]
        %v3761 = vld [vmem:[%s3739 + $0x54] sm:$0xf]
        %v3762 = vld [vmem:[%s3739 + $0x58] sm:$0xf]
        %v3763 = vld [vmem:[%s3739 + $0x5c] sm:$0xf]
        %v3764 = vld [vmem:[%s3739 + $0x60] sm:$0xf]
        %v3765 = vld [vmem:[%s3739 + $0x64] sm:$0xf]
        %v3766 = vld [vmem:[%s3739 + $0x68] sm:$0xf]
        %v3767 = vld [vmem:[%s3739 + $0x6c] sm:$0xf]
        %v3768 = vld [vmem:[%s3739 + $0x70] sm:$0xf]
        %v3769 = vld [vmem:[%s3739 + $0x74] sm:$0xf]
        %v3770 = vld [vmem:[%s3739 + $0x78] sm:$0xf]
        %v3771 = vld [vmem:[%s3739 + $0x7c] sm:$0xf]
        %v3772 = vld [vmem:[%s3739 + $0x80] sm:$0xf]
        %v3773 = vld [vmem:[%s3739 + $0x84] sm:$0xf]
        %v3774 = vld [vmem:[%s3739 + $0x88] sm:$0xf]
        %v3775 = vld [vmem:[%s3739 + $0x8c] sm:$0xf]
        %v3776 = vld [vmem:[%s3739 + $0x90] sm:$0xf]
        %v3777 = vld [vmem:[%s3739 + $0x94] sm:$0xf]
        %v3778 = vld [vmem:[%s3739 + $0x98] sm:$0xf]
        %v3779 = vld [vmem:[%s3739 + $0x9c] sm:$0xf]
        %v3780 = vld [vmem:[%s3739 + $0xa0] sm:$0xf]
        %v3781 = vld [vmem:[%s3739 + $0xa4] sm:$0xf]
        %v3782 = vld [vmem:[%s3739 + $0xa8] sm:$0xf]
        %v3783 = vld [vmem:[%s3739 + $0xac] sm:$0xf]
        %v3784 = vld [vmem:[%s3739 + $0xb0] sm:$0xf]
        %v3785 = vld [vmem:[%s3739 + $0xb4] sm:$0xf]
        %v3786 = vld [vmem:[%s3739 + $0xb8] sm:$0xf]
        %v3787 = vld [vmem:[%s3739 + $0xbc] sm:$0xf]
        %v3788 = vld [vmem:[%s3739 + $0xc0] sm:$0xf]
        %v3789 = vld [vmem:[%s3739 + $0xc4] sm:$0xf]
        %v3790 = vld [vmem:[%s3739 + $0xc8] sm:$0xf]
        %v3791 = vld [vmem:[%s3739 + $0xcc] sm:$0xf]
        %v3792 = vld [vmem:[%s3739 + $0xd0] sm:$0xf]
        %v3793 = vld [vmem:[%s3739 + $0xd4] sm:$0xf]
        %v3794 = vld [vmem:[%s3739 + $0xd8] sm:$0xf]
        %v3795 = vld [vmem:[%s3739 + $0xdc] sm:$0xf]
        %v3796 = vld [vmem:[%s3739 + $0xe0] sm:$0xf]
        %v3797 = vld [vmem:[%s3739 + $0xe4] sm:$0xf]
        %v3798 = vld [vmem:[%s3739 + $0xe8] sm:$0xf]
        %v3799 = vld [vmem:[%s3739 + $0xec] sm:$0xf]
        %v3800 = vld [vmem:[%s3739 + $0xf0] sm:$0xf]
        %v3801 = vld [vmem:[%s3739 + $0xf4] sm:$0xf]
        %v3802 = vld [vmem:[%s3739 + $0xf8] sm:$0xf]
        %v3803 = vld [vmem:[%s3739 + $0xfc] sm:$0xf]
        %v3804 = vunpack.c.h.b16 %v861
        %v3805 = vunpack.c.h.b16 %v862
        %v3806 = vunpack.c.h.b16 %v863
        %v3807 = vunpack.c.h.b16 %v864
        %v3808 = vunpack.c.h.b16 %v865
        %v3809 = vunpack.c.h.b16 %v866
        %v3810 = vunpack.c.h.b16 %v867
        %v3811 = vunpack.c.h.b16 %v868
        %v3812 = vrot.slane %v3808, 7
        %v3813 = vsel %vm1015, %v3812, %v3804
        %v3814 = vrot.slane %v3809, 7
        %v3815 = vsel %vm1015, %v3814, %v3805
        %v3816 = vrot.slane %v3810, 7
        %v3817 = vsel %vm1015, %v3816, %v3806
        %v3818 = vrot.slane %v3811, 7
        %v3819 = vsel %vm1015, %v3818, %v3807
        %v3820 = vpack.c.b16 %v3813, %v3813
        %v3821 = vpack.c.b16 %v3815, %v3815
        %v3822 = vpack.c.b16 %v3817, %v3817
        %v3823 = vpack.c.b16 %v3819, %v3819
        %v3892 = vunpack.c.l.b16 %v3740
        %v3893 = vunpack.c.l.b16 %v3741
        %v3894 = vunpack.c.l.b16 %v3742
        %v3895 = vunpack.c.l.b16 %v3743
        %v3896 = vunpack.c.l.b16 %v3744
        %v3897 = vunpack.c.l.b16 %v3745
        %v3898 = vunpack.c.l.b16 %v3746
        %v3899 = vunpack.c.l.b16 %v3747
        %v3900 = vunpack.c.l.b16 %v3748
        %v3901 = vunpack.c.l.b16 %v3749
        %v3902 = vunpack.c.l.b16 %v3750
        %v3903 = vunpack.c.l.b16 %v3751
        %v3904 = vunpack.c.l.b16 %v3752
        %v3905 = vunpack.c.l.b16 %v3753
        %v3906 = vunpack.c.l.b16 %v3754
        %v3907 = vunpack.c.l.b16 %v3755
        %v3908 = vunpack.c.l.b16 %v3756
        %v3909 = vunpack.c.l.b16 %v3757
        %v3910 = vunpack.c.l.b16 %v3758
        %v3911 = vunpack.c.l.b16 %v3759
        %v3912 = vunpack.c.l.b16 %v3760
        %v3913 = vunpack.c.l.b16 %v3761
        %v3914 = vunpack.c.l.b16 %v3762
        %v3915 = vunpack.c.l.b16 %v3763
        %v3916 = vunpack.c.l.b16 %v3764
        %v3917 = vunpack.c.l.b16 %v3765
        %v3918 = vunpack.c.l.b16 %v3766
        %v3919 = vunpack.c.l.b16 %v3767
        %v3920 = vunpack.c.l.b16 %v3768
        %v3921 = vunpack.c.l.b16 %v3769
        %v3922 = vunpack.c.l.b16 %v3770
        %v3923 = vunpack.c.l.b16 %v3771
        %v3924 = vunpack.c.l.b16 %v3772
        %v3925 = vunpack.c.l.b16 %v3773
        %v3926 = vunpack.c.l.b16 %v3774
        %v3927 = vunpack.c.l.b16 %v3775
        %v3928 = vunpack.c.l.b16 %v3776
        %v3929 = vunpack.c.l.b16 %v3777
        %v3930 = vunpack.c.l.b16 %v3778
        %v3931 = vunpack.c.l.b16 %v3779
        %v3932 = vunpack.c.l.b16 %v3780
        %v3933 = vunpack.c.l.b16 %v3781
        %v3934 = vunpack.c.l.b16 %v3782
        %v3935 = vunpack.c.l.b16 %v3783
        %v3936 = vunpack.c.l.b16 %v3784
        %v3937 = vunpack.c.l.b16 %v3785
        %v3938 = vunpack.c.l.b16 %v3786
        %v3939 = vunpack.c.l.b16 %v3787
        %v3940 = vunpack.c.l.b16 %v3788
        %v3941 = vunpack.c.l.b16 %v3789
        %v3942 = vunpack.c.l.b16 %v3790
        %v3943 = vunpack.c.l.b16 %v3791
        %v3944 = vunpack.c.l.b16 %v3792
        %v3945 = vunpack.c.l.b16 %v3793
        %v3946 = vunpack.c.l.b16 %v3794
        %v3947 = vunpack.c.l.b16 %v3795
        %v3948 = vunpack.c.l.b16 %v3796
        %v3949 = vunpack.c.l.b16 %v3797
        %v3950 = vunpack.c.l.b16 %v3798
        %v3951 = vunpack.c.l.b16 %v3799
        %v3952 = vunpack.c.l.b16 %v3800
        %v3953 = vunpack.c.l.b16 %v3801
        %v3954 = vunpack.c.l.b16 %v3802
        %v3955 = vunpack.c.l.b16 %v3803
        %v3956 = vpack.c.b16 %v3893, %v3892
        %v3957 = vpack.c.b16 %v3895, %v3894
        %v3958 = vpack.c.b16 %v3897, %v3896
        %v3959 = vpack.c.b16 %v3899, %v3898
        %v3960 = vpack.c.b16 %v3901, %v3900
        %v3961 = vpack.c.b16 %v3903, %v3902
        %v3962 = vpack.c.b16 %v3905, %v3904
        %v3963 = vpack.c.b16 %v3907, %v3906
        %v3964 = vpack.c.b16 %v3909, %v3908
        %v3965 = vpack.c.b16 %v3911, %v3910
        %v3966 = vpack.c.b16 %v3913, %v3912
        %v3967 = vpack.c.b16 %v3915, %v3914
        %v3968 = vpack.c.b16 %v3917, %v3916
        %v3969 = vpack.c.b16 %v3919, %v3918
        %v3970 = vpack.c.b16 %v3921, %v3920
        %v3971 = vpack.c.b16 %v3923, %v3922
        %v3972 = vpack.c.b16 %v3925, %v3924
        %v3973 = vpack.c.b16 %v3927, %v3926
        %v3974 = vpack.c.b16 %v3929, %v3928
        %v3975 = vpack.c.b16 %v3931, %v3930
        %v3976 = vpack.c.b16 %v3933, %v3932
        %v3977 = vpack.c.b16 %v3935, %v3934
        %v3978 = vpack.c.b16 %v3937, %v3936
        %v3979 = vpack.c.b16 %v3939, %v3938
        %v3980 = vpack.c.b16 %v3941, %v3940
        %v3981 = vpack.c.b16 %v3943, %v3942
        %v3982 = vpack.c.b16 %v3945, %v3944
        %v3983 = vpack.c.b16 %v3947, %v3946
        %v3984 = vpack.c.b16 %v3949, %v3948
        %v3985 = vpack.c.b16 %v3951, %v3950
        %v3986 = vpack.c.b16 %v3953, %v3952
        %v3987 = vpack.c.b16 %v3955, %v3954
        %4020 = vmatprep.subr.bf16.mxu0 0
        %4021 = vmatpush1.bf16.msra.mxu0 %v3956
        %4022 = vmatprep.subr.bf16.mxu0 0
        %4023 = vmatpush1.bf16.msra.mxu0 %v3957
        %4024 = vmatprep.subr.bf16.mxu0 0
        %4025 = vmatpush1.bf16.msra.mxu0 %v3958
        %4026 = vmatprep.subr.bf16.mxu0 0
        %4027 = vmatpush1.bf16.msra.mxu0 %v3959
        %4028 = vmatprep.subr.bf16.mxu0 0
        %4029 = vmatpush1.bf16.msra.mxu0 %v3960
        %4030 = vmatprep.subr.bf16.mxu0 0
        %4031 = vmatpush1.bf16.msra.mxu0 %v3961
        %4032 = vmatprep.subr.bf16.mxu0 0
        %4033 = vmatpush1.bf16.msra.mxu0 %v3962
        %4034 = vmatprep.subr.bf16.mxu0 0
        %4035 = vmatpush1.bf16.msra.mxu0 %v3963
        %4036 = vmatprep.subr.bf16.mxu0 0
        %4037 = vmatpush1.bf16.msra.mxu0 %v3964
        %4038 = vmatprep.subr.bf16.mxu0 0
        %4039 = vmatpush1.bf16.msra.mxu0 %v3965
        %4040 = vmatprep.subr.bf16.mxu0 0
        %4041 = vmatpush1.bf16.msra.mxu0 %v3966
        %4042 = vmatprep.subr.bf16.mxu0 0
        %4043 = vmatpush1.bf16.msra.mxu0 %v3967
        %4044 = vmatprep.subr.bf16.mxu0 0
        %4045 = vmatpush1.bf16.msra.mxu0 %v3968
        %4046 = vmatprep.subr.bf16.mxu0 0
        %4047 = vmatpush1.bf16.msra.mxu0 %v3969
        %4048 = vmatprep.subr.bf16.mxu0 0
        %4049 = vmatpush1.bf16.msra.mxu0 %v3970
        %4050 = vmatprep.subr.bf16.mxu0 0
        %4051 = vmatpush1.bf16.msra.mxu0 %v3971
        %4052 = vmatprep.mubr.bf16.mxu0 %v3821
        %4053 = vmatmul.mubr.bf16.gmra.mrb[0].mxu0 %v3820
        %v4054 = vpop.f32.mrb[0].mxu0
        %v4055 = vadd.f32 0.0, %v4054
        %v4056 = vpop.f32.mrb[0].mxu0
        %v4057 = vpop.f32.mrb[0].mxu0
        %v4058 = vpop.f32.mrb[0].mxu0
        %4059 = vdwg.mxu0
        %4060 = vmatprep.subr.bf16.mxu0 0
        %4061 = vmatpush1.bf16.msra.mxu0 %v3972
        %4062 = vmatprep.subr.bf16.mxu0 0
        %4063 = vmatpush1.bf16.msra.mxu0 %v3973
        %4064 = vmatprep.subr.bf16.mxu0 0
        %4065 = vmatpush1.bf16.msra.mxu0 %v3974
        %4066 = vmatprep.subr.bf16.mxu0 0
        %4067 = vmatpush1.bf16.msra.mxu0 %v3975
        %4068 = vmatprep.subr.bf16.mxu0 0
        %4069 = vmatpush1.bf16.msra.mxu0 %v3976
        %4070 = vmatprep.subr.bf16.mxu0 0
        %4071 = vmatpush1.bf16.msra.mxu0 %v3977
        %4072 = vmatprep.subr.bf16.mxu0 0
        %4073 = vmatpush1.bf16.msra.mxu0 %v3978
        %4074 = vmatprep.subr.bf16.mxu0 0
        %4075 = vmatpush1.bf16.msra.mxu0 %v3979
        %4076 = vmatprep.subr.bf16.mxu0 0
        %4077 = vmatpush1.bf16.msra.mxu0 %v3980
        %4078 = vmatprep.subr.bf16.mxu0 0
        %4079 = vmatpush1.bf16.msra.mxu0 %v3981
        %4080 = vmatprep.subr.bf16.mxu0 0
        %4081 = vmatpush1.bf16.msra.mxu0 %v3982
        %4082 = vmatprep.subr.bf16.mxu0 0
        %4083 = vmatpush1.bf16.msra.mxu0 %v3983
        %4084 = vmatprep.subr.bf16.mxu0 0
        %4085 = vmatpush1.bf16.msra.mxu0 %v3984
        %4086 = vmatprep.subr.bf16.mxu0 0
        %4087 = vmatpush1.bf16.msra.mxu0 %v3985
        %4088 = vmatprep.subr.bf16.mxu0 0
        %4089 = vmatpush1.bf16.msra.mxu0 %v3986
        %4090 = vmatprep.subr.bf16.mxu0 0
        %4091 = vmatpush1.bf16.msra.mxu0 %v3987
        %4092 = vmatprep.mubr.bf16.mxu0 %v3823
        %4093 = vmatmul.mubr.bf16.gmra.mrb[0].mxu0 %v3822
        %v4094 = vpop.f32.mrb[0].mxu0
        %v4095 = vadd.f32 %v4055, %v4094
        %v4096 = vpop.f32.mrb[0].mxu0
        %v4097 = vpop.f32.mrb[0].mxu0
        %v4098 = vpop.f32.mrb[0].mxu0
        %4099 = vdwg.mxu0
        %v4100 = vadd.f32 %v3738, %v4095
        %s4101 = scalar_lea.vmem [#allocation11], 2304
        %v4102 = vld [vmem:[%s4101] sm:$0xf]
        %v4103 = vld [vmem:[%s4101 + $0x4] sm:$0xf]
        %v4104 = vld [vmem:[%s4101 + $0x8] sm:$0xf]
        %v4105 = vld [vmem:[%s4101 + $0xc] sm:$0xf]
        %v4106 = vld [vmem:[%s4101 + $0x10] sm:$0xf]
        %v4107 = vld [vmem:[%s4101 + $0x14] sm:$0xf]
        %v4108 = vld [vmem:[%s4101 + $0x18] sm:$0xf]
        %v4109 = vld [vmem:[%s4101 + $0x1c] sm:$0xf]
        %v4110 = vld [vmem:[%s4101 + $0x20] sm:$0xf]
        %v4111 = vld [vmem:[%s4101 + $0x24] sm:$0xf]
        %v4112 = vld [vmem:[%s4101 + $0x28] sm:$0xf]
        %v4113 = vld [vmem:[%s4101 + $0x2c] sm:$0xf]
        %v4114 = vld [vmem:[%s4101 + $0x30] sm:$0xf]
        %v4115 = vld [vmem:[%s4101 + $0x34] sm:$0xf]
        %v4116 = vld [vmem:[%s4101 + $0x38] sm:$0xf]
        %v4117 = vld [vmem:[%s4101 + $0x3c] sm:$0xf]
        %v4118 = vld [vmem:[%s4101 + $0x40] sm:$0xf]
        %v4119 = vld [vmem:[%s4101 + $0x44] sm:$0xf]
        %v4120 = vld [vmem:[%s4101 + $0x48] sm:$0xf]
        %v4121 = vld [vmem:[%s4101 + $0x4c] sm:$0xf]
        %v4122 = vld [vmem:[%s4101 + $0x50] sm:$0xf]
        %v4123 = vld [vmem:[%s4101 + $0x54] sm:$0xf]
        %v4124 = vld [vmem:[%s4101 + $0x58] sm:$0xf]
        %v4125 = vld [vmem:[%s4101 + $0x5c] sm:$0xf]
        %v4126 = vld [vmem:[%s4101 + $0x60] sm:$0xf]
        %v4127 = vld [vmem:[%s4101 + $0x64] sm:$0xf]
        %v4128 = vld [vmem:[%s4101 + $0x68] sm:$0xf]
        %v4129 = vld [vmem:[%s4101 + $0x6c] sm:$0xf]
        %v4130 = vld [vmem:[%s4101 + $0x70] sm:$0xf]
        %v4131 = vld [vmem:[%s4101 + $0x74] sm:$0xf]
        %v4132 = vld [vmem:[%s4101 + $0x78] sm:$0xf]
        %v4133 = vld [vmem:[%s4101 + $0x7c] sm:$0xf]
        %v4134 = vld [vmem:[%s4101 + $0x80] sm:$0xf]
        %v4135 = vld [vmem:[%s4101 + $0x84] sm:$0xf]
        %v4136 = vld [vmem:[%s4101 + $0x88] sm:$0xf]
        %v4137 = vld [vmem:[%s4101 + $0x8c] sm:$0xf]
        %v4138 = vld [vmem:[%s4101 + $0x90] sm:$0xf]
        %v4139 = vld [vmem:[%s4101 + $0x94] sm:$0xf]
        %v4140 = vld [vmem:[%s4101 + $0x98] sm:$0xf]
        %v4141 = vld [vmem:[%s4101 + $0x9c] sm:$0xf]
        %v4142 = vld [vmem:[%s4101 + $0xa0] sm:$0xf]
        %v4143 = vld [vmem:[%s4101 + $0xa4] sm:$0xf]
        %v4144 = vld [vmem:[%s4101 + $0xa8] sm:$0xf]
        %v4145 = vld [vmem:[%s4101 + $0xac] sm:$0xf]
        %v4146 = vld [vmem:[%s4101 + $0xb0] sm:$0xf]
        %v4147 = vld [vmem:[%s4101 + $0xb4] sm:$0xf]
        %v4148 = vld [vmem:[%s4101 + $0xb8] sm:$0xf]
        %v4149 = vld [vmem:[%s4101 + $0xbc] sm:$0xf]
        %v4150 = vld [vmem:[%s4101 + $0xc0] sm:$0xf]
        %v4151 = vld [vmem:[%s4101 + $0xc4] sm:$0xf]
        %v4152 = vld [vmem:[%s4101 + $0xc8] sm:$0xf]
        %v4153 = vld [vmem:[%s4101 + $0xcc] sm:$0xf]
        %v4154 = vld [vmem:[%s4101 + $0xd0] sm:$0xf]
        %v4155 = vld [vmem:[%s4101 + $0xd4] sm:$0xf]
        %v4156 = vld [vmem:[%s4101 + $0xd8] sm:$0xf]
        %v4157 = vld [vmem:[%s4101 + $0xdc] sm:$0xf]
        %v4158 = vld [vmem:[%s4101 + $0xe0] sm:$0xf]
        %v4159 = vld [vmem:[%s4101 + $0xe4] sm:$0xf]
        %v4160 = vld [vmem:[%s4101 + $0xe8] sm:$0xf]
        %v4161 = vld [vmem:[%s4101 + $0xec] sm:$0xf]
        %v4162 = vld [vmem:[%s4101 + $0xf0] sm:$0xf]
        %v4163 = vld [vmem:[%s4101 + $0xf4] sm:$0xf]
        %v4164 = vld [vmem:[%s4101 + $0xf8] sm:$0xf]
        %v4165 = vld [vmem:[%s4101 + $0xfc] sm:$0xf]
        %v4166 = vrot.slane %v3804, 1
        %v4167 = vsel %vm1015, %v3808, %v4166
        %v4168 = vrot.slane %v3805, 1
        %v4169 = vsel %vm1015, %v3809, %v4168
        %v4170 = vrot.slane %v3806, 1
        %v4171 = vsel %vm1015, %v3810, %v4170
        %v4172 = vrot.slane %v3807, 1
        %v4173 = vsel %vm1015, %v3811, %v4172
        %v4174 = vpack.c.b16 %v4167, %v4167
        %v4175 = vpack.c.b16 %v4169, %v4169
        %v4176 = vpack.c.b16 %v4171, %v4171
        %v4177 = vpack.c.b16 %v4173, %v4173
        %v4246 = vunpack.c.l.b16 %v4102
        %v4247 = vunpack.c.l.b16 %v4103
        %v4248 = vunpack.c.l.b16 %v4104
        %v4249 = vunpack.c.l.b16 %v4105
        %v4250 = vunpack.c.l.b16 %v4106
        %v4251 = vunpack.c.l.b16 %v4107
        %v4252 = vunpack.c.l.b16 %v4108
        %v4253 = vunpack.c.l.b16 %v4109
        %v4254 = vunpack.c.l.b16 %v4110
        %v4255 = vunpack.c.l.b16 %v4111
        %v4256 = vunpack.c.l.b16 %v4112
        %v4257 = vunpack.c.l.b16 %v4113
        %v4258 = vunpack.c.l.b16 %v4114
        %v4259 = vunpack.c.l.b16 %v4115
        %v4260 = vunpack.c.l.b16 %v4116
        %v4261 = vunpack.c.l.b16 %v4117
        %v4262 = vunpack.c.l.b16 %v4118
        %v4263 = vunpack.c.l.b16 %v4119
        %v4264 = vunpack.c.l.b16 %v4120
        %v4265 = vunpack.c.l.b16 %v4121
        %v4266 = vunpack.c.l.b16 %v4122
        %v4267 = vunpack.c.l.b16 %v4123
        %v4268 = vunpack.c.l.b16 %v4124
        %v4269 = vunpack.c.l.b16 %v4125
        %v4270 = vunpack.c.l.b16 %v4126
        %v4271 = vunpack.c.l.b16 %v4127
        %v4272 = vunpack.c.l.b16 %v4128
        %v4273 = vunpack.c.l.b16 %v4129
        %v4274 = vunpack.c.l.b16 %v4130
        %v4275 = vunpack.c.l.b16 %v4131
        %v4276 = vunpack.c.l.b16 %v4132
        %v4277 = vunpack.c.l.b16 %v4133
        %v4278 = vunpack.c.l.b16 %v4134
        %v4279 = vunpack.c.l.b16 %v4135
        %v4280 = vunpack.c.l.b16 %v4136
        %v4281 = vunpack.c.l.b16 %v4137
        %v4282 = vunpack.c.l.b16 %v4138
        %v4283 = vunpack.c.l.b16 %v4139
        %v4284 = vunpack.c.l.b16 %v4140
        %v4285 = vunpack.c.l.b16 %v4141
        %v4286 = vunpack.c.l.b16 %v4142
        %v4287 = vunpack.c.l.b16 %v4143
        %v4288 = vunpack.c.l.b16 %v4144
        %v4289 = vunpack.c.l.b16 %v4145
        %v4290 = vunpack.c.l.b16 %v4146
        %v4291 = vunpack.c.l.b16 %v4147
        %v4292 = vunpack.c.l.b16 %v4148
        %v4293 = vunpack.c.l.b16 %v4149
        %v4294 = vunpack.c.l.b16 %v4150
        %v4295 = vunpack.c.l.b16 %v4151
        %v4296 = vunpack.c.l.b16 %v4152
        %v4297 = vunpack.c.l.b16 %v4153
        %v4298 = vunpack.c.l.b16 %v4154
        %v4299 = vunpack.c.l.b16 %v4155
        %v4300 = vunpack.c.l.b16 %v4156
        %v4301 = vunpack.c.l.b16 %v4157
        %v4302 = vunpack.c.l.b16 %v4158
        %v4303 = vunpack.c.l.b16 %v4159
        %v4304 = vunpack.c.l.b16 %v4160
        %v4305 = vunpack.c.l.b16 %v4161
        %v4306 = vunpack.c.l.b16 %v4162
        %v4307 = vunpack.c.l.b16 %v4163
        %v4308 = vunpack.c.l.b16 %v4164
        %v4309 = vunpack.c.l.b16 %v4165
        %v4310 = vpack.c.b16 %v4247, %v4246
        %v4311 = vpack.c.b16 %v4249, %v4248
        %v4312 = vpack.c.b16 %v4251, %v4250
        %v4313 = vpack.c.b16 %v4253, %v4252
        %v4314 = vpack.c.b16 %v4255, %v4254
        %v4315 = vpack.c.b16 %v4257, %v4256
        %v4316 = vpack.c.b16 %v4259, %v4258
        %v4317 = vpack.c.b16 %v4261, %v4260
        %v4318 = vpack.c.b16 %v4263, %v4262
        %v4319 = vpack.c.b16 %v4265, %v4264
        %v4320 = vpack.c.b16 %v4267, %v4266
        %v4321 = vpack.c.b16 %v4269, %v4268
        %v4322 = vpack.c.b16 %v4271, %v4270
        %v4323 = vpack.c.b16 %v4273, %v4272
        %v4324 = vpack.c.b16 %v4275, %v4274
        %v4325 = vpack.c.b16 %v4277, %v4276
        %v4326 = vpack.c.b16 %v4279, %v4278
        %v4327 = vpack.c.b16 %v4281, %v4280
        %v4328 = vpack.c.b16 %v4283, %v4282
        %v4329 = vpack.c.b16 %v4285, %v4284
        %v4330 = vpack.c.b16 %v4287, %v4286
        %v4331 = vpack.c.b16 %v4289, %v4288
        %v4332 = vpack.c.b16 %v4291, %v4290
        %v4333 = vpack.c.b16 %v4293, %v4292
        %v4334 = vpack.c.b16 %v4295, %v4294
        %v4335 = vpack.c.b16 %v4297, %v4296
        %v4336 = vpack.c.b16 %v4299, %v4298
        %v4337 = vpack.c.b16 %v4301, %v4300
        %v4338 = vpack.c.b16 %v4303, %v4302
        %v4339 = vpack.c.b16 %v4305, %v4304
        %v4340 = vpack.c.b16 %v4307, %v4306
        %v4341 = vpack.c.b16 %v4309, %v4308
        %4374 = vmatprep.subr.bf16.mxu0 0
        %4375 = vmatpush1.bf16.msra.mxu0 %v4310
        %4376 = vmatprep.subr.bf16.mxu0 0
        %4377 = vmatpush1.bf16.msra.mxu0 %v4311
        %4378 = vmatprep.subr.bf16.mxu0 0
        %4379 = vmatpush1.bf16.msra.mxu0 %v4312
        %4380 = vmatprep.subr.bf16.mxu0 0
        %4381 = vmatpush1.bf16.msra.mxu0 %v4313
        %4382 = vmatprep.subr.bf16.mxu0 0
        %4383 = vmatpush1.bf16.msra.mxu0 %v4314
        %4384 = vmatprep.subr.bf16.mxu0 0
        %4385 = vmatpush1.bf16.msra.mxu0 %v4315
        %4386 = vmatprep.subr.bf16.mxu0 0
        %4387 = vmatpush1.bf16.msra.mxu0 %v4316
        %4388 = vmatprep.subr.bf16.mxu0 0
        %4389 = vmatpush1.bf16.msra.mxu0 %v4317
        %4390 = vmatprep.subr.bf16.mxu0 0
        %4391 = vmatpush1.bf16.msra.mxu0 %v4318
        %4392 = vmatprep.subr.bf16.mxu0 0
        %4393 = vmatpush1.bf16.msra.mxu0 %v4319
        %4394 = vmatprep.subr.bf16.mxu0 0
        %4395 = vmatpush1.bf16.msra.mxu0 %v4320
        %4396 = vmatprep.subr.bf16.mxu0 0
        %4397 = vmatpush1.bf16.msra.mxu0 %v4321
        %4398 = vmatprep.subr.bf16.mxu0 0
        %4399 = vmatpush1.bf16.msra.mxu0 %v4322
        %4400 = vmatprep.subr.bf16.mxu0 0
        %4401 = vmatpush1.bf16.msra.mxu0 %v4323
        %4402 = vmatprep.subr.bf16.mxu0 0
        %4403 = vmatpush1.bf16.msra.mxu0 %v4324
        %4404 = vmatprep.subr.bf16.mxu0 0
        %4405 = vmatpush1.bf16.msra.mxu0 %v4325
        %4406 = vmatprep.mubr.bf16.mxu0 %v4175
        %4407 = vmatmul.mubr.bf16.gmra.mrb[0].mxu0 %v4174
        %v4408 = vpop.f32.mrb[0].mxu0
        %v4409 = vadd.f32 0.0, %v4408
        %v4410 = vpop.f32.mrb[0].mxu0
        %v4411 = vpop.f32.mrb[0].mxu0
        %v4412 = vpop.f32.mrb[0].mxu0
        %4413 = vdwg.mxu0
        %4414 = vmatprep.subr.bf16.mxu0 0
        %4415 = vmatpush1.bf16.msra.mxu0 %v4326
        %4416 = vmatprep.subr.bf16.mxu0 0
        %4417 = vmatpush1.bf16.msra.mxu0 %v4327
        %4418 = vmatprep.subr.bf16.mxu0 0
        %4419 = vmatpush1.bf16.msra.mxu0 %v4328
        %4420 = vmatprep.subr.bf16.mxu0 0
        %4421 = vmatpush1.bf16.msra.mxu0 %v4329
        %4422 = vmatprep.subr.bf16.mxu0 0
        %4423 = vmatpush1.bf16.msra.mxu0 %v4330
        %4424 = vmatprep.subr.bf16.mxu0 0
        %4425 = vmatpush1.bf16.msra.mxu0 %v4331
        %4426 = vmatprep.subr.bf16.mxu0 0
        %4427 = vmatpush1.bf16.msra.mxu0 %v4332
        %4428 = vmatprep.subr.bf16.mxu0 0
        %4429 = vmatpush1.bf16.msra.mxu0 %v4333
        %4430 = vmatprep.subr.bf16.mxu0 0
        %4431 = vmatpush1.bf16.msra.mxu0 %v4334
        %4432 = vmatprep.subr.bf16.mxu0 0
        %4433 = vmatpush1.bf16.msra.mxu0 %v4335
        %4434 = vmatprep.subr.bf16.mxu0 0
        %4435 = vmatpush1.bf16.msra.mxu0 %v4336
        %4436 = vmatprep.subr.bf16.mxu0 0
        %4437 = vmatpush1.bf16.msra.mxu0 %v4337
        %4438 = vmatprep.subr.bf16.mxu0 0
        %4439 = vmatpush1.bf16.msra.mxu0 %v4338
        %4440 = vmatprep.subr.bf16.mxu0 0
        %4441 = vmatpush1.bf16.msra.mxu0 %v4339
        %4442 = vmatprep.subr.bf16.mxu0 0
        %4443 = vmatpush1.bf16.msra.mxu0 %v4340
        %4444 = vmatprep.subr.bf16.mxu0 0
        %4445 = vmatpush1.bf16.msra.mxu0 %v4341
        %4446 = vmatprep.mubr.bf16.mxu0 %v4177
        %4447 = vmatmul.mubr.bf16.gmra.mrb[0].mxu0 %v4176
        %v4448 = vpop.f32.mrb[0].mxu0
        %v4449 = vadd.f32 %v4409, %v4448
        %v4450 = vpop.f32.mrb[0].mxu0
        %v4451 = vpop.f32.mrb[0].mxu0
        %v4452 = vpop.f32.mrb[0].mxu0
        %4453 = vdwg.mxu0
        %v4454 = vadd.f32 %v4100, %v4449
        %s4455 = scalar_lea.vmem [#allocation11], 2560
        %v4456 = vld [vmem:[%s4455] sm:$0xf]
        %v4457 = vld [vmem:[%s4455 + $0x4] sm:$0xf]
        %v4458 = vld [vmem:[%s4455 + $0x8] sm:$0xf]
        %v4459 = vld [vmem:[%s4455 + $0xc] sm:$0xf]
        %v4460 = vld [vmem:[%s4455 + $0x10] sm:$0xf]
        %v4461 = vld [vmem:[%s4455 + $0x14] sm:$0xf]
        %v4462 = vld [vmem:[%s4455 + $0x18] sm:$0xf]
        %v4463 = vld [vmem:[%s4455 + $0x1c] sm:$0xf]
        %v4464 = vld [vmem:[%s4455 + $0x20] sm:$0xf]
        %v4465 = vld [vmem:[%s4455 + $0x24] sm:$0xf]
        %v4466 = vld [vmem:[%s4455 + $0x28] sm:$0xf]
        %v4467 = vld [vmem:[%s4455 + $0x2c] sm:$0xf]
        %v4468 = vld [vmem:[%s4455 + $0x30] sm:$0xf]
        %v4469 = vld [vmem:[%s4455 + $0x34] sm:$0xf]
        %v4470 = vld [vmem:[%s4455 + $0x38] sm:$0xf]
        %v4471 = vld [vmem:[%s4455 + $0x3c] sm:$0xf]
        %v4472 = vld [vmem:[%s4455 + $0x40] sm:$0xf]
        %v4473 = vld [vmem:[%s4455 + $0x44] sm:$0xf]
        %v4474 = vld [vmem:[%s4455 + $0x48] sm:$0xf]
        %v4475 = vld [vmem:[%s4455 + $0x4c] sm:$0xf]
        %v4476 = vld [vmem:[%s4455 + $0x50] sm:$0xf]
        %v4477 = vld [vmem:[%s4455 + $0x54] sm:$0xf]
        %v4478 = vld [vmem:[%s4455 + $0x58] sm:$0xf]
        %v4479 = vld [vmem:[%s4455 + $0x5c] sm:$0xf]
        %v4480 = vld [vmem:[%s4455 + $0x60] sm:$0xf]
        %v4481 = vld [vmem:[%s4455 + $0x64] sm:$0xf]
        %v4482 = vld [vmem:[%s4455 + $0x68] sm:$0xf]
        %v4483 = vld [vmem:[%s4455 + $0x6c] sm:$0xf]
        %v4484 = vld [vmem:[%s4455 + $0x70] sm:$0xf]
        %v4485 = vld [vmem:[%s4455 + $0x74] sm:$0xf]
        %v4486 = vld [vmem:[%s4455 + $0x78] sm:$0xf]
        %v4487 = vld [vmem:[%s4455 + $0x7c] sm:$0xf]
        %v4488 = vld [vmem:[%s4455 + $0x80] sm:$0xf]
        %v4489 = vld [vmem:[%s4455 + $0x84] sm:$0xf]
        %v4490 = vld [vmem:[%s4455 + $0x88] sm:$0xf]
        %v4491 = vld [vmem:[%s4455 + $0x8c] sm:$0xf]
        %v4492 = vld [vmem:[%s4455 + $0x90] sm:$0xf]
        %v4493 = vld [vmem:[%s4455 + $0x94] sm:$0xf]
        %v4494 = vld [vmem:[%s4455 + $0x98] sm:$0xf]
        %v4495 = vld [vmem:[%s4455 + $0x9c] sm:$0xf]
        %v4496 = vld [vmem:[%s4455 + $0xa0] sm:$0xf]
        %v4497 = vld [vmem:[%s4455 + $0xa4] sm:$0xf]
        %v4498 = vld [vmem:[%s4455 + $0xa8] sm:$0xf]
        %v4499 = vld [vmem:[%s4455 + $0xac] sm:$0xf]
        %v4500 = vld [vmem:[%s4455 + $0xb0] sm:$0xf]
        %v4501 = vld [vmem:[%s4455 + $0xb4] sm:$0xf]
        %v4502 = vld [vmem:[%s4455 + $0xb8] sm:$0xf]
        %v4503 = vld [vmem:[%s4455 + $0xbc] sm:$0xf]
        %v4504 = vld [vmem:[%s4455 + $0xc0] sm:$0xf]
        %v4505 = vld [vmem:[%s4455 + $0xc4] sm:$0xf]
        %v4506 = vld [vmem:[%s4455 + $0xc8] sm:$0xf]
        %v4507 = vld [vmem:[%s4455 + $0xcc] sm:$0xf]
        %v4508 = vld [vmem:[%s4455 + $0xd0] sm:$0xf]
        %v4509 = vld [vmem:[%s4455 + $0xd4] sm:$0xf]
        %v4510 = vld [vmem:[%s4455 + $0xd8] sm:$0xf]
        %v4511 = vld [vmem:[%s4455 + $0xdc] sm:$0xf]
        %v4512 = vld [vmem:[%s4455 + $0xe0] sm:$0xf]
        %v4513 = vld [vmem:[%s4455 + $0xe4] sm:$0xf]
        %v4514 = vld [vmem:[%s4455 + $0xe8] sm:$0xf]
        %v4515 = vld [vmem:[%s4455 + $0xec] sm:$0xf]
        %v4516 = vld [vmem:[%s4455 + $0xf0] sm:$0xf]
        %v4517 = vld [vmem:[%s4455 + $0xf4] sm:$0xf]
        %v4518 = vld [vmem:[%s4455 + $0xf8] sm:$0xf]
        %v4519 = vld [vmem:[%s4455 + $0xfc] sm:$0xf]
        %v4520 = vrot.slane %v3804, 2
        %v4521 = vrot.slane %v3808, 1
        %v4522 = vsel %vm1015, %v4521, %v4520
        %v4523 = vrot.slane %v3805, 2
        %v4524 = vrot.slane %v3809, 1
        %v4525 = vsel %vm1015, %v4524, %v4523
        %v4526 = vrot.slane %v3806, 2
        %v4527 = vrot.slane %v3810, 1
        %v4528 = vsel %vm1015, %v4527, %v4526
        %v4529 = vrot.slane %v3807, 2
        %v4530 = vrot.slane %v3811, 1
        %v4531 = vsel %vm1015, %v4530, %v4529
        %v4532 = vpack.c.b16 %v4522, %v4522
        %v4533 = vpack.c.b16 %v4525, %v4525
        %v4534 = vpack.c.b16 %v4528, %v4528
        %v4535 = vpack.c.b16 %v4531, %v4531
        %v4604 = vunpack.c.l.b16 %v4456
        %v4605 = vunpack.c.l.b16 %v4457
        %v4606 = vunpack.c.l.b16 %v4458
        %v4607 = vunpack.c.l.b16 %v4459
        %v4608 = vunpack.c.l.b16 %v4460
        %v4609 = vunpack.c.l.b16 %v4461
        %v4610 = vunpack.c.l.b16 %v4462
        %v4611 = vunpack.c.l.b16 %v4463
        %v4612 = vunpack.c.l.b16 %v4464
        %v4613 = vunpack.c.l.b16 %v4465
        %v4614 = vunpack.c.l.b16 %v4466
        %v4615 = vunpack.c.l.b16 %v4467
        %v4616 = vunpack.c.l.b16 %v4468
        %v4617 = vunpack.c.l.b16 %v4469
        %v4618 = vunpack.c.l.b16 %v4470
        %v4619 = vunpack.c.l.b16 %v4471
        %v4620 = vunpack.c.l.b16 %v4472
        %v4621 = vunpack.c.l.b16 %v4473
        %v4622 = vunpack.c.l.b16 %v4474
        %v4623 = vunpack.c.l.b16 %v4475
        %v4624 = vunpack.c.l.b16 %v4476
        %v4625 = vunpack.c.l.b16 %v4477
        %v4626 = vunpack.c.l.b16 %v4478
        %v4627 = vunpack.c.l.b16 %v4479
        %v4628 = vunpack.c.l.b16 %v4480
        %v4629 = vunpack.c.l.b16 %v4481
        %v4630 = vunpack.c.l.b16 %v4482
        %v4631 = vunpack.c.l.b16 %v4483
        %v4632 = vunpack.c.l.b16 %v4484
        %v4633 = vunpack.c.l.b16 %v4485
        %v4634 = vunpack.c.l.b16 %v4486
        %v4635 = vunpack.c.l.b16 %v4487
        %v4636 = vunpack.c.l.b16 %v4488
        %v4637 = vunpack.c.l.b16 %v4489
        %v4638 = vunpack.c.l.b16 %v4490
        %v4639 = vunpack.c.l.b16 %v4491
        %v4640 = vunpack.c.l.b16 %v4492
        %v4641 = vunpack.c.l.b16 %v4493
        %v4642 = vunpack.c.l.b16 %v4494
        %v4643 = vunpack.c.l.b16 %v4495
        %v4644 = vunpack.c.l.b16 %v4496
        %v4645 = vunpack.c.l.b16 %v4497
        %v4646 = vunpack.c.l.b16 %v4498
        %v4647 = vunpack.c.l.b16 %v4499
        %v4648 = vunpack.c.l.b16 %v4500
        %v4649 = vunpack.c.l.b16 %v4501
        %v4650 = vunpack.c.l.b16 %v4502
        %v4651 = vunpack.c.l.b16 %v4503
        %v4652 = vunpack.c.l.b16 %v4504
        %v4653 = vunpack.c.l.b16 %v4505
        %v4654 = vunpack.c.l.b16 %v4506
        %v4655 = vunpack.c.l.b16 %v4507
        %v4656 = vunpack.c.l.b16 %v4508
        %v4657 = vunpack.c.l.b16 %v4509
        %v4658 = vunpack.c.l.b16 %v4510
        %v4659 = vunpack.c.l.b16 %v4511
        %v4660 = vunpack.c.l.b16 %v4512
        %v4661 = vunpack.c.l.b16 %v4513
        %v4662 = vunpack.c.l.b16 %v4514
        %v4663 = vunpack.c.l.b16 %v4515
        %v4664 = vunpack.c.l.b16 %v4516
        %v4665 = vunpack.c.l.b16 %v4517
        %v4666 = vunpack.c.l.b16 %v4518
        %v4667 = vunpack.c.l.b16 %v4519
        %v4668 = vpack.c.b16 %v4605, %v4604
        %v4669 = vpack.c.b16 %v4607, %v4606
        %v4670 = vpack.c.b16 %v4609, %v4608
        %v4671 = vpack.c.b16 %v4611, %v4610
        %v4672 = vpack.c.b16 %v4613, %v4612
        %v4673 = vpack.c.b16 %v4615, %v4614
        %v4674 = vpack.c.b16 %v4617, %v4616
        %v4675 = vpack.c.b16 %v4619, %v4618
        %v4676 = vpack.c.b16 %v4621, %v4620
        %v4677 = vpack.c.b16 %v4623, %v4622
        %v4678 = vpack.c.b16 %v4625, %v4624
        %v4679 = vpack.c.b16 %v4627, %v4626
        %v4680 = vpack.c.b16 %v4629, %v4628
        %v4681 = vpack.c.b16 %v4631, %v4630
        %v4682 = vpack.c.b16 %v4633, %v4632
        %v4683 = vpack.c.b16 %v4635, %v4634
        %v4684 = vpack.c.b16 %v4637, %v4636
        %v4685 = vpack.c.b16 %v4639, %v4638
        %v4686 = vpack.c.b16 %v4641, %v4640
        %v4687 = vpack.c.b16 %v4643, %v4642
        %v4688 = vpack.c.b16 %v4645, %v4644
        %v4689 = vpack.c.b16 %v4647, %v4646
        %v4690 = vpack.c.b16 %v4649, %v4648
        %v4691 = vpack.c.b16 %v4651, %v4650
        %v4692 = vpack.c.b16 %v4653, %v4652
        %v4693 = vpack.c.b16 %v4655, %v4654
        %v4694 = vpack.c.b16 %v4657, %v4656
        %v4695 = vpack.c.b16 %v4659, %v4658
        %v4696 = vpack.c.b16 %v4661, %v4660
        %v4697 = vpack.c.b16 %v4663, %v4662
        %v4698 = vpack.c.b16 %v4665, %v4664
        %v4699 = vpack.c.b16 %v4667, %v4666
        %4732 = vmatprep.subr.bf16.mxu0 0
        %4733 = vmatpush1.bf16.msra.mxu0 %v4668
        %4734 = vmatprep.subr.bf16.mxu0 0
        %4735 = vmatpush1.bf16.msra.mxu0 %v4669
        %4736 = vmatprep.subr.bf16.mxu0 0
        %4737 = vmatpush1.bf16.msra.mxu0 %v4670
        %4738 = vmatprep.subr.bf16.mxu0 0
        %4739 = vmatpush1.bf16.msra.mxu0 %v4671
        %4740 = vmatprep.subr.bf16.mxu0 0
        %4741 = vmatpush1.bf16.msra.mxu0 %v4672
        %4742 = vmatprep.subr.bf16.mxu0 0
        %4743 = vmatpush1.bf16.msra.mxu0 %v4673
        %4744 = vmatprep.subr.bf16.mxu0 0
        %4745 = vmatpush1.bf16.msra.mxu0 %v4674
        %4746 = vmatprep.subr.bf16.mxu0 0
        %4747 = vmatpush1.bf16.msra.mxu0 %v4675
        %4748 = vmatprep.subr.bf16.mxu0 0
        %4749 = vmatpush1.bf16.msra.mxu0 %v4676
        %4750 = vmatprep.subr.bf16.mxu0 0
        %4751 = vmatpush1.bf16.msra.mxu0 %v4677
        %4752 = vmatprep.subr.bf16.mxu0 0
        %4753 = vmatpush1.bf16.msra.mxu0 %v4678
        %4754 = vmatprep.subr.bf16.mxu0 0
        %4755 = vmatpush1.bf16.msra.mxu0 %v4679
        %4756 = vmatprep.subr.bf16.mxu0 0
        %4757 = vmatpush1.bf16.msra.mxu0 %v4680
        %4758 = vmatprep.subr.bf16.mxu0 0
        %4759 = vmatpush1.bf16.msra.mxu0 %v4681
        %4760 = vmatprep.subr.bf16.mxu0 0
        %4761 = vmatpush1.bf16.msra.mxu0 %v4682
        %4762 = vmatprep.subr.bf16.mxu0 0
        %4763 = vmatpush1.bf16.msra.mxu0 %v4683
        %4764 = vmatprep.mubr.bf16.mxu0 %v4533
        %4765 = vmatmul.mubr.bf16.gmra.mrb[0].mxu0 %v4532
        %v4766 = vpop.f32.mrb[0].mxu0
        %v4767 = vadd.f32 0.0, %v4766
        %v4768 = vpop.f32.mrb[0].mxu0
        %v4769 = vpop.f32.mrb[0].mxu0
        %v4770 = vpop.f32.mrb[0].mxu0
        %4771 = vdwg.mxu0
        %4772 = vmatprep.subr.bf16.mxu0 0
        %4773 = vmatpush1.bf16.msra.mxu0 %v4684
        %4774 = vmatprep.subr.bf16.mxu0 0
        %4775 = vmatpush1.bf16.msra.mxu0 %v4685
        %4776 = vmatprep.subr.bf16.mxu0 0
        %4777 = vmatpush1.bf16.msra.mxu0 %v4686
        %4778 = vmatprep.subr.bf16.mxu0 0
        %4779 = vmatpush1.bf16.msra.mxu0 %v4687
        %4780 = vmatprep.subr.bf16.mxu0 0
        %4781 = vmatpush1.bf16.msra.mxu0 %v4688
        %4782 = vmatprep.subr.bf16.mxu0 0
        %4783 = vmatpush1.bf16.msra.mxu0 %v4689
        %4784 = vmatprep.subr.bf16.mxu0 0
        %4785 = vmatpush1.bf16.msra.mxu0 %v4690
        %4786 = vmatprep.subr.bf16.mxu0 0
        %4787 = vmatpush1.bf16.msra.mxu0 %v4691
        %4788 = vmatprep.subr.bf16.mxu0 0
        %4789 = vmatpush1.bf16.msra.mxu0 %v4692
        %4790 = vmatprep.subr.bf16.mxu0 0
        %4791 = vmatpush1.bf16.msra.mxu0 %v4693
        %4792 = vmatprep.subr.bf16.mxu0 0
        %4793 = vmatpush1.bf16.msra.mxu0 %v4694
        %4794 = vmatprep.subr.bf16.mxu0 0
        %4795 = vmatpush1.bf16.msra.mxu0 %v4695
        %4796 = vmatprep.subr.bf16.mxu0 0
        %4797 = vmatpush1.bf16.msra.mxu0 %v4696
        %4798 = vmatprep.subr.bf16.mxu0 0
        %4799 = vmatpush1.bf16.msra.mxu0 %v4697
        %4800 = vmatprep.subr.bf16.mxu0 0
        %4801 = vmatpush1.bf16.msra.mxu0 %v4698
        %4802 = vmatprep.subr.bf16.mxu0 0
        %4803 = vmatpush1.bf16.msra.mxu0 %v4699
        %4804 = vmatprep.mubr.bf16.mxu0 %v4535
        %4805 = vmatmul.mubr.bf16.gmra.mrb[0].mxu0 %v4534
        %v4806 = vpop.f32.mrb[0].mxu0
        %v4807 = vadd.f32 %v4767, %v4806
        %v4808 = vpop.f32.mrb[0].mxu0
        %v4809 = vpop.f32.mrb[0].mxu0
        %v4810 = vpop.f32.mrb[0].mxu0
        %4811 = vdwg.mxu0
        %v4812 = vadd.f32 %v4454, %v4807
        %s4813 = scalar_lea.vmem [#allocation11], 2816
        %v4814 = vld [vmem:[%s4813] sm:$0xf]
        %v4815 = vld [vmem:[%s4813 + $0x4] sm:$0xf]
        %v4816 = vld [vmem:[%s4813 + $0x8] sm:$0xf]
        %v4817 = vld [vmem:[%s4813 + $0xc] sm:$0xf]
        %v4818 = vld [vmem:[%s4813 + $0x10] sm:$0xf]
        %v4819 = vld [vmem:[%s4813 + $0x14] sm:$0xf]
        %v4820 = vld [vmem:[%s4813 + $0x18] sm:$0xf]
        %v4821 = vld [vmem:[%s4813 + $0x1c] sm:$0xf]
        %v4822 = vld [vmem:[%s4813 + $0x20] sm:$0xf]
        %v4823 = vld [vmem:[%s4813 + $0x24] sm:$0xf]
        %v4824 = vld [vmem:[%s4813 + $0x28] sm:$0xf]
        %v4825 = vld [vmem:[%s4813 + $0x2c] sm:$0xf]
        %v4826 = vld [vmem:[%s4813 + $0x30] sm:$0xf]
        %v4827 = vld [vmem:[%s4813 + $0x34] sm:$0xf]
        %v4828 = vld [vmem:[%s4813 + $0x38] sm:$0xf]
        %v4829 = vld [vmem:[%s4813 + $0x3c] sm:$0xf]
        %v4830 = vld [vmem:[%s4813 + $0x40] sm:$0xf]
        %v4831 = vld [vmem:[%s4813 + $0x44] sm:$0xf]
        %v4832 = vld [vmem:[%s4813 + $0x48] sm:$0xf]
        %v4833 = vld [vmem:[%s4813 + $0x4c] sm:$0xf]
        %v4834 = vld [vmem:[%s4813 + $0x50] sm:$0xf]
        %v4835 = vld [vmem:[%s4813 + $0x54] sm:$0xf]
        %v4836 = vld [vmem:[%s4813 + $0x58] sm:$0xf]
        %v4837 = vld [vmem:[%s4813 + $0x5c] sm:$0xf]
        %v4838 = vld [vmem:[%s4813 + $0x60] sm:$0xf]
        %v4839 = vld [vmem:[%s4813 + $0x64] sm:$0xf]
        %v4840 = vld [vmem:[%s4813 + $0x68] sm:$0xf]
        %v4841 = vld [vmem:[%s4813 + $0x6c] sm:$0xf]
        %v4842 = vld [vmem:[%s4813 + $0x70] sm:$0xf]
        %v4843 = vld [vmem:[%s4813 + $0x74] sm:$0xf]
        %v4844 = vld [vmem:[%s4813 + $0x78] sm:$0xf]
        %v4845 = vld [vmem:[%s4813 + $0x7c] sm:$0xf]
        %v4846 = vld [vmem:[%s4813 + $0x80] sm:$0xf]
        %v4847 = vld [vmem:[%s4813 + $0x84] sm:$0xf]
        %v4848 = vld [vmem:[%s4813 + $0x88] sm:$0xf]
        %v4849 = vld [vmem:[%s4813 + $0x8c] sm:$0xf]
        %v4850 = vld [vmem:[%s4813 + $0x90] sm:$0xf]
        %v4851 = vld [vmem:[%s4813 + $0x94] sm:$0xf]
        %v4852 = vld [vmem:[%s4813 + $0x98] sm:$0xf]
        %v4853 = vld [vmem:[%s4813 + $0x9c] sm:$0xf]
        %v4854 = vld [vmem:[%s4813 + $0xa0] sm:$0xf]
        %v4855 = vld [vmem:[%s4813 + $0xa4] sm:$0xf]
        %v4856 = vld [vmem:[%s4813 + $0xa8] sm:$0xf]
        %v4857 = vld [vmem:[%s4813 + $0xac] sm:$0xf]
        %v4858 = vld [vmem:[%s4813 + $0xb0] sm:$0xf]
        %v4859 = vld [vmem:[%s4813 + $0xb4] sm:$0xf]
        %v4860 = vld [vmem:[%s4813 + $0xb8] sm:$0xf]
        %v4861 = vld [vmem:[%s4813 + $0xbc] sm:$0xf]
        %v4862 = vld [vmem:[%s4813 + $0xc0] sm:$0xf]
        %v4863 = vld [vmem:[%s4813 + $0xc4] sm:$0xf]
        %v4864 = vld [vmem:[%s4813 + $0xc8] sm:$0xf]
        %v4865 = vld [vmem:[%s4813 + $0xcc] sm:$0xf]
        %v4866 = vld [vmem:[%s4813 + $0xd0] sm:$0xf]
        %v4867 = vld [vmem:[%s4813 + $0xd4] sm:$0xf]
        %v4868 = vld [vmem:[%s4813 + $0xd8] sm:$0xf]
        %v4869 = vld [vmem:[%s4813 + $0xdc] sm:$0xf]
        %v4870 = vld [vmem:[%s4813 + $0xe0] sm:$0xf]
        %v4871 = vld [vmem:[%s4813 + $0xe4] sm:$0xf]
        %v4872 = vld [vmem:[%s4813 + $0xe8] sm:$0xf]
        %v4873 = vld [vmem:[%s4813 + $0xec] sm:$0xf]
        %v4874 = vld [vmem:[%s4813 + $0xf0] sm:$0xf]
        %v4875 = vld [vmem:[%s4813 + $0xf4] sm:$0xf]
        %v4876 = vld [vmem:[%s4813 + $0xf8] sm:$0xf]
        %v4877 = vld [vmem:[%s4813 + $0xfc] sm:$0xf]
        %v4878 = vrot.slane %v3804, 3
        %v4879 = vrot.slane %v3808, 2
        %v4880 = vsel %vm1015, %v4879, %v4878
        %v4881 = vrot.slane %v3805, 3
        %v4882 = vrot.slane %v3809, 2
        %v4883 = vsel %vm1015, %v4882, %v4881
        %v4884 = vrot.slane %v3806, 3
        %v4885 = vrot.slane %v3810, 2
        %v4886 = vsel %vm1015, %v4885, %v4884
        %v4887 = vrot.slane %v3807, 3
        %v4888 = vrot.slane %v3811, 2
        %v4889 = vsel %vm1015, %v4888, %v4887
        %v4890 = vpack.c.b16 %v4880, %v4880
        %v4891 = vpack.c.b16 %v4883, %v4883
        %v4892 = vpack.c.b16 %v4886, %v4886
        %v4893 = vpack.c.b16 %v4889, %v4889
        %v4962 = vunpack.c.l.b16 %v4814
        %v4963 = vunpack.c.l.b16 %v4815
        %v4964 = vunpack.c.l.b16 %v4816
        %v4965 = vunpack.c.l.b16 %v4817
        %v4966 = vunpack.c.l.b16 %v4818
        %v4967 = vunpack.c.l.b16 %v4819
        %v4968 = vunpack.c.l.b16 %v4820
        %v4969 = vunpack.c.l.b16 %v4821
        %v4970 = vunpack.c.l.b16 %v4822
        %v4971 = vunpack.c.l.b16 %v4823
        %v4972 = vunpack.c.l.b16 %v4824
        %v4973 = vunpack.c.l.b16 %v4825
        %v4974 = vunpack.c.l.b16 %v4826
        %v4975 = vunpack.c.l.b16 %v4827
        %v4976 = vunpack.c.l.b16 %v4828
        %v4977 = vunpack.c.l.b16 %v4829
        %v4978 = vunpack.c.l.b16 %v4830
        %v4979 = vunpack.c.l.b16 %v4831
        %v4980 = vunpack.c.l.b16 %v4832
        %v4981 = vunpack.c.l.b16 %v4833
        %v4982 = vunpack.c.l.b16 %v4834
        %v4983 = vunpack.c.l.b16 %v4835
        %v4984 = vunpack.c.l.b16 %v4836
        %v4985 = vunpack.c.l.b16 %v4837
        %v4986 = vunpack.c.l.b16 %v4838
        %v4987 = vunpack.c.l.b16 %v4839
        %v4988 = vunpack.c.l.b16 %v4840
        %v4989 = vunpack.c.l.b16 %v4841
        %v4990 = vunpack.c.l.b16 %v4842
        %v4991 = vunpack.c.l.b16 %v4843
        %v4992 = vunpack.c.l.b16 %v4844
        %v4993 = vunpack.c.l.b16 %v4845
        %v4994 = vunpack.c.l.b16 %v4846
        %v4995 = vunpack.c.l.b16 %v4847
        %v4996 = vunpack.c.l.b16 %v4848
        %v4997 = vunpack.c.l.b16 %v4849
        %v4998 = vunpack.c.l.b16 %v4850
        %v4999 = vunpack.c.l.b16 %v4851
        %v5000 = vunpack.c.l.b16 %v4852
        %v5001 = vunpack.c.l.b16 %v4853
        %v5002 = vunpack.c.l.b16 %v4854
        %v5003 = vunpack.c.l.b16 %v4855
        %v5004 = vunpack.c.l.b16 %v4856
        %v5005 = vunpack.c.l.b16 %v4857
        %v5006 = vunpack.c.l.b16 %v4858
        %v5007 = vunpack.c.l.b16 %v4859
        %v5008 = vunpack.c.l.b16 %v4860
        %v5009 = vunpack.c.l.b16 %v4861
        %v5010 = vunpack.c.l.b16 %v4862
        %v5011 = vunpack.c.l.b16 %v4863
        %v5012 = vunpack.c.l.b16 %v4864
        %v5013 = vunpack.c.l.b16 %v4865
        %v5014 = vunpack.c.l.b16 %v4866
        %v5015 = vunpack.c.l.b16 %v4867
        %v5016 = vunpack.c.l.b16 %v4868
        %v5017 = vunpack.c.l.b16 %v4869
        %v5018 = vunpack.c.l.b16 %v4870
        %v5019 = vunpack.c.l.b16 %v4871
        %v5020 = vunpack.c.l.b16 %v4872
        %v5021 = vunpack.c.l.b16 %v4873
        %v5022 = vunpack.c.l.b16 %v4874
        %v5023 = vunpack.c.l.b16 %v4875
        %v5024 = vunpack.c.l.b16 %v4876
        %v5025 = vunpack.c.l.b16 %v4877
        %v5026 = vpack.c.b16 %v4963, %v4962
        %v5027 = vpack.c.b16 %v4965, %v4964
        %v5028 = vpack.c.b16 %v4967, %v4966
        %v5029 = vpack.c.b16 %v4969, %v4968
        %v5030 = vpack.c.b16 %v4971, %v4970
        %v5031 = vpack.c.b16 %v4973, %v4972
        %v5032 = vpack.c.b16 %v4975, %v4974
        %v5033 = vpack.c.b16 %v4977, %v4976
        %v5034 = vpack.c.b16 %v4979, %v4978
        %v5035 = vpack.c.b16 %v4981, %v4980
        %v5036 = vpack.c.b16 %v4983, %v4982
        %v5037 = vpack.c.b16 %v4985, %v4984
        %v5038 = vpack.c.b16 %v4987, %v4986
        %v5039 = vpack.c.b16 %v4989, %v4988
        %v5040 = vpack.c.b16 %v4991, %v4990
        %v5041 = vpack.c.b16 %v4993, %v4992
        %v5042 = vpack.c.b16 %v4995, %v4994
        %v5043 = vpack.c.b16 %v4997, %v4996
        %v5044 = vpack.c.b16 %v4999, %v4998
        %v5045 = vpack.c.b16 %v5001, %v5000
        %v5046 = vpack.c.b16 %v5003, %v5002
        %v5047 = vpack.c.b16 %v5005, %v5004
        %v5048 = vpack.c.b16 %v5007, %v5006
        %v5049 = vpack.c.b16 %v5009, %v5008
        %v5050 = vpack.c.b16 %v5011, %v5010
        %v5051 = vpack.c.b16 %v5013, %v5012
        %v5052 = vpack.c.b16 %v5015, %v5014
        %v5053 = vpack.c.b16 %v5017, %v5016
        %v5054 = vpack.c.b16 %v5019, %v5018
        %v5055 = vpack.c.b16 %v5021, %v5020
        %v5056 = vpack.c.b16 %v5023, %v5022
        %v5057 = vpack.c.b16 %v5025, %v5024
        %5090 = vmatprep.subr.bf16.mxu0 0
        %5091 = vmatpush1.bf16.msra.mxu0 %v5026
        %5092 = vmatprep.subr.bf16.mxu0 0
        %5093 = vmatpush1.bf16.msra.mxu0 %v5027
        %5094 = vmatprep.subr.bf16.mxu0 0
        %5095 = vmatpush1.bf16.msra.mxu0 %v5028
        %5096 = vmatprep.subr.bf16.mxu0 0
        %5097 = vmatpush1.bf16.msra.mxu0 %v5029
        %5098 = vmatprep.subr.bf16.mxu0 0
        %5099 = vmatpush1.bf16.msra.mxu0 %v5030
        %5100 = vmatprep.subr.bf16.mxu0 0
        %5101 = vmatpush1.bf16.msra.mxu0 %v5031
        %5102 = vmatprep.subr.bf16.mxu0 0
        %5103 = vmatpush1.bf16.msra.mxu0 %v5032
        %5104 = vmatprep.subr.bf16.mxu0 0
        %5105 = vmatpush1.bf16.msra.mxu0 %v5033
        %5106 = vmatprep.subr.bf16.mxu0 0
        %5107 = vmatpush1.bf16.msra.mxu0 %v5034
        %5108 = vmatprep.subr.bf16.mxu0 0
        %5109 = vmatpush1.bf16.msra.mxu0 %v5035
        %5110 = vmatprep.subr.bf16.mxu0 0
        %5111 = vmatpush1.bf16.msra.mxu0 %v5036
        %5112 = vmatprep.subr.bf16.mxu0 0
        %5113 = vmatpush1.bf16.msra.mxu0 %v5037
        %5114 = vmatprep.subr.bf16.mxu0 0
        %5115 = vmatpush1.bf16.msra.mxu0 %v5038
        %5116 = vmatprep.subr.bf16.mxu0 0
        %5117 = vmatpush1.bf16.msra.mxu0 %v5039
        %5118 = vmatprep.subr.bf16.mxu0 0
        %5119 = vmatpush1.bf16.msra.mxu0 %v5040
        %5120 = vmatprep.subr.bf16.mxu0 0
        %5121 = vmatpush1.bf16.msra.mxu0 %v5041
        %5122 = vmatprep.mubr.bf16.mxu0 %v4891
        %5123 = vmatmul.mubr.bf16.gmra.mrb[0].mxu0 %v4890
        %v5124 = vpop.f32.mrb[0].mxu0
        %v5125 = vadd.f32 0.0, %v5124
        %v5126 = vpop.f32.mrb[0].mxu0
        %v5127 = vpop.f32.mrb[0].mxu0
        %v5128 = vpop.f32.mrb[0].mxu0
        %5129 = vdwg.mxu0
        %5130 = vmatprep.subr.bf16.mxu0 0
        %5131 = vmatpush1.bf16.msra.mxu0 %v5042
        %5132 = vmatprep.subr.bf16.mxu0 0
        %5133 = vmatpush1.bf16.msra.mxu0 %v5043
        %5134 = vmatprep.subr.bf16.mxu0 0
        %5135 = vmatpush1.bf16.msra.mxu0 %v5044
        %5136 = vmatprep.subr.bf16.mxu0 0
        %5137 = vmatpush1.bf16.msra.mxu0 %v5045
        %5138 = vmatprep.subr.bf16.mxu0 0
        %5139 = vmatpush1.bf16.msra.mxu0 %v5046
        %5140 = vmatprep.subr.bf16.mxu0 0
        %5141 = vmatpush1.bf16.msra.mxu0 %v5047
        %5142 = vmatprep.subr.bf16.mxu0 0
        %5143 = vmatpush1.bf16.msra.mxu0 %v5048
        %5144 = vmatprep.subr.bf16.mxu0 0
        %5145 = vmatpush1.bf16.msra.mxu0 %v5049
        %5146 = vmatprep.subr.bf16.mxu0 0
        %5147 = vmatpush1.bf16.msra.mxu0 %v5050
        %5148 = vmatprep.subr.bf16.mxu0 0
        %5149 = vmatpush1.bf16.msra.mxu0 %v5051
        %5150 = vmatprep.subr.bf16.mxu0 0
        %5151 = vmatpush1.bf16.msra.mxu0 %v5052
        %5152 = vmatprep.subr.bf16.mxu0 0
        %5153 = vmatpush1.bf16.msra.mxu0 %v5053
        %5154 = vmatprep.subr.bf16.mxu0 0
        %5155 = vmatpush1.bf16.msra.mxu0 %v5054
        %5156 = vmatprep.subr.bf16.mxu0 0
        %5157 = vmatpush1.bf16.msra.mxu0 %v5055
        %5158 = vmatprep.subr.bf16.mxu0 0
        %5159 = vmatpush1.bf16.msra.mxu0 %v5056
        %5160 = vmatprep.subr.bf16.mxu0 0
        %5161 = vmatpush1.bf16.msra.mxu0 %v5057
        %5162 = vmatprep.mubr.bf16.mxu0 %v4893
        %5163 = vmatmul.mubr.bf16.gmra.mrb[0].mxu0 %v4892
        %v5164 = vpop.f32.mrb[0].mxu0
        %v5165 = vadd.f32 %v5125, %v5164
        %v5166 = vpop.f32.mrb[0].mxu0
        %v5167 = vpop.f32.mrb[0].mxu0
        %v5168 = vpop.f32.mrb[0].mxu0
        %5169 = vdwg.mxu0
        %v5170 = vadd.f32 %v4812, %v5165
        %s5171 = scalar_lea.vmem [#allocation11], 3072
        %v5172 = vld [vmem:[%s5171] sm:$0xf]
        %v5173 = vld [vmem:[%s5171 + $0x4] sm:$0xf]
        %v5174 = vld [vmem:[%s5171 + $0x8] sm:$0xf]
        %v5175 = vld [vmem:[%s5171 + $0xc] sm:$0xf]
        %v5176 = vld [vmem:[%s5171 + $0x10] sm:$0xf]
        %v5177 = vld [vmem:[%s5171 + $0x14] sm:$0xf]
        %v5178 = vld [vmem:[%s5171 + $0x18] sm:$0xf]
        %v5179 = vld [vmem:[%s5171 + $0x1c] sm:$0xf]
        %v5180 = vld [vmem:[%s5171 + $0x20] sm:$0xf]
        %v5181 = vld [vmem:[%s5171 + $0x24] sm:$0xf]
        %v5182 = vld [vmem:[%s5171 + $0x28] sm:$0xf]
        %v5183 = vld [vmem:[%s5171 + $0x2c] sm:$0xf]
        %v5184 = vld [vmem:[%s5171 + $0x30] sm:$0xf]
        %v5185 = vld [vmem:[%s5171 + $0x34] sm:$0xf]
        %v5186 = vld [vmem:[%s5171 + $0x38] sm:$0xf]
        %v5187 = vld [vmem:[%s5171 + $0x3c] sm:$0xf]
        %v5188 = vld [vmem:[%s5171 + $0x40] sm:$0xf]
        %v5189 = vld [vmem:[%s5171 + $0x44] sm:$0xf]
        %v5190 = vld [vmem:[%s5171 + $0x48] sm:$0xf]
        %v5191 = vld [vmem:[%s5171 + $0x4c] sm:$0xf]
        %v5192 = vld [vmem:[%s5171 + $0x50] sm:$0xf]
        %v5193 = vld [vmem:[%s5171 + $0x54] sm:$0xf]
        %v5194 = vld [vmem:[%s5171 + $0x58] sm:$0xf]
        %v5195 = vld [vmem:[%s5171 + $0x5c] sm:$0xf]
        %v5196 = vld [vmem:[%s5171 + $0x60] sm:$0xf]
        %v5197 = vld [vmem:[%s5171 + $0x64] sm:$0xf]
        %v5198 = vld [vmem:[%s5171 + $0x68] sm:$0xf]
        %v5199 = vld [vmem:[%s5171 + $0x6c] sm:$0xf]
        %v5200 = vld [vmem:[%s5171 + $0x70] sm:$0xf]
        %v5201 = vld [vmem:[%s5171 + $0x74] sm:$0xf]
        %v5202 = vld [vmem:[%s5171 + $0x78] sm:$0xf]
        %v5203 = vld [vmem:[%s5171 + $0x7c] sm:$0xf]
        %v5204 = vld [vmem:[%s5171 + $0x80] sm:$0xf]
        %v5205 = vld [vmem:[%s5171 + $0x84] sm:$0xf]
        %v5206 = vld [vmem:[%s5171 + $0x88] sm:$0xf]
        %v5207 = vld [vmem:[%s5171 + $0x8c] sm:$0xf]
        %v5208 = vld [vmem:[%s5171 + $0x90] sm:$0xf]
        %v5209 = vld [vmem:[%s5171 + $0x94] sm:$0xf]
        %v5210 = vld [vmem:[%s5171 + $0x98] sm:$0xf]
        %v5211 = vld [vmem:[%s5171 + $0x9c] sm:$0xf]
        %v5212 = vld [vmem:[%s5171 + $0xa0] sm:$0xf]
        %v5213 = vld [vmem:[%s5171 + $0xa4] sm:$0xf]
        %v5214 = vld [vmem:[%s5171 + $0xa8] sm:$0xf]
        %v5215 = vld [vmem:[%s5171 + $0xac] sm:$0xf]
        %v5216 = vld [vmem:[%s5171 + $0xb0] sm:$0xf]
        %v5217 = vld [vmem:[%s5171 + $0xb4] sm:$0xf]
        %v5218 = vld [vmem:[%s5171 + $0xb8] sm:$0xf]
        %v5219 = vld [vmem:[%s5171 + $0xbc] sm:$0xf]
        %v5220 = vld [vmem:[%s5171 + $0xc0] sm:$0xf]
        %v5221 = vld [vmem:[%s5171 + $0xc4] sm:$0xf]
        %v5222 = vld [vmem:[%s5171 + $0xc8] sm:$0xf]
        %v5223 = vld [vmem:[%s5171 + $0xcc] sm:$0xf]
        %v5224 = vld [vmem:[%s5171 + $0xd0] sm:$0xf]
        %v5225 = vld [vmem:[%s5171 + $0xd4] sm:$0xf]
        %v5226 = vld [vmem:[%s5171 + $0xd8] sm:$0xf]
        %v5227 = vld [vmem:[%s5171 + $0xdc] sm:$0xf]
        %v5228 = vld [vmem:[%s5171 + $0xe0] sm:$0xf]
        %v5229 = vld [vmem:[%s5171 + $0xe4] sm:$0xf]
        %v5230 = vld [vmem:[%s5171 + $0xe8] sm:$0xf]
        %v5231 = vld [vmem:[%s5171 + $0xec] sm:$0xf]
        %v5232 = vld [vmem:[%s5171 + $0xf0] sm:$0xf]
        %v5233 = vld [vmem:[%s5171 + $0xf4] sm:$0xf]
        %v5234 = vld [vmem:[%s5171 + $0xf8] sm:$0xf]
        %v5235 = vld [vmem:[%s5171 + $0xfc] sm:$0xf]
        %v5236 = vrot.slane %v3804, 4
        %v5237 = vrot.slane %v3808, 3
        %v5238 = vsel %vm1015, %v5237, %v5236
        %v5239 = vrot.slane %v3805, 4
        %v5240 = vrot.slane %v3809, 3
        %v5241 = vsel %vm1015, %v5240, %v5239
        %v5242 = vrot.slane %v3806, 4
        %v5243 = vrot.slane %v3810, 3
        %v5244 = vsel %vm1015, %v5243, %v5242
        %v5245 = vrot.slane %v3807, 4
        %v5246 = vrot.slane %v3811, 3
        %v5247 = vsel %vm1015, %v5246, %v5245
        %v5248 = vpack.c.b16 %v5238, %v5238
        %v5249 = vpack.c.b16 %v5241, %v5241
        %v5250 = vpack.c.b16 %v5244, %v5244
        %v5251 = vpack.c.b16 %v5247, %v5247
        %v5320 = vunpack.c.l.b16 %v5172
        %v5321 = vunpack.c.l.b16 %v5173
        %v5322 = vunpack.c.l.b16 %v5174
        %v5323 = vunpack.c.l.b16 %v5175
        %v5324 = vunpack.c.l.b16 %v5176
        %v5325 = vunpack.c.l.b16 %v5177
        %v5326 = vunpack.c.l.b16 %v5178
        %v5327 = vunpack.c.l.b16 %v5179
        %v5328 = vunpack.c.l.b16 %v5180
        %v5329 = vunpack.c.l.b16 %v5181
        %v5330 = vunpack.c.l.b16 %v5182
        %v5331 = vunpack.c.l.b16 %v5183
        %v5332 = vunpack.c.l.b16 %v5184
        %v5333 = vunpack.c.l.b16 %v5185
        %v5334 = vunpack.c.l.b16 %v5186
        %v5335 = vunpack.c.l.b16 %v5187
        %v5336 = vunpack.c.l.b16 %v5188
        %v5337 = vunpack.c.l.b16 %v5189
        %v5338 = vunpack.c.l.b16 %v5190
        %v5339 = vunpack.c.l.b16 %v5191
        %v5340 = vunpack.c.l.b16 %v5192
        %v5341 = vunpack.c.l.b16 %v5193
        %v5342 = vunpack.c.l.b16 %v5194
        %v5343 = vunpack.c.l.b16 %v5195
        %v5344 = vunpack.c.l.b16 %v5196
        %v5345 = vunpack.c.l.b16 %v5197
        %v5346 = vunpack.c.l.b16 %v5198
        %v5347 = vunpack.c.l.b16 %v5199
        %v5348 = vunpack.c.l.b16 %v5200
        %v5349 = vunpack.c.l.b16 %v5201
        %v5350 = vunpack.c.l.b16 %v5202
        %v5351 = vunpack.c.l.b16 %v5203
        %v5352 = vunpack.c.l.b16 %v5204
        %v5353 = vunpack.c.l.b16 %v5205
        %v5354 = vunpack.c.l.b16 %v5206
        %v5355 = vunpack.c.l.b16 %v5207
        %v5356 = vunpack.c.l.b16 %v5208
        %v5357 = vunpack.c.l.b16 %v5209
        %v5358 = vunpack.c.l.b16 %v5210
        %v5359 = vunpack.c.l.b16 %v5211
        %v5360 = vunpack.c.l.b16 %v5212
        %v5361 = vunpack.c.l.b16 %v5213
        %v5362 = vunpack.c.l.b16 %v5214
        %v5363 = vunpack.c.l.b16 %v5215
        %v5364 = vunpack.c.l.b16 %v5216
        %v5365 = vunpack.c.l.b16 %v5217
        %v5366 = vunpack.c.l.b16 %v5218
        %v5367 = vunpack.c.l.b16 %v5219
        %v5368 = vunpack.c.l.b16 %v5220
        %v5369 = vunpack.c.l.b16 %v5221
        %v5370 = vunpack.c.l.b16 %v5222
        %v5371 = vunpack.c.l.b16 %v5223
        %v5372 = vunpack.c.l.b16 %v5224
        %v5373 = vunpack.c.l.b16 %v5225
        %v5374 = vunpack.c.l.b16 %v5226
        %v5375 = vunpack.c.l.b16 %v5227
        %v5376 = vunpack.c.l.b16 %v5228
        %v5377 = vunpack.c.l.b16 %v5229
        %v5378 = vunpack.c.l.b16 %v5230
        %v5379 = vunpack.c.l.b16 %v5231
        %v5380 = vunpack.c.l.b16 %v5232
        %v5381 = vunpack.c.l.b16 %v5233
        %v5382 = vunpack.c.l.b16 %v5234
        %v5383 = vunpack.c.l.b16 %v5235
        %v5384 = vpack.c.b16 %v5321, %v5320
        %v5385 = vpack.c.b16 %v5323, %v5322
        %v5386 = vpack.c.b16 %v5325, %v5324
        %v5387 = vpack.c.b16 %v5327, %v5326
        %v5388 = vpack.c.b16 %v5329, %v5328
        %v5389 = vpack.c.b16 %v5331, %v5330
        %v5390 = vpack.c.b16 %v5333, %v5332
        %v5391 = vpack.c.b16 %v5335, %v5334
        %v5392 = vpack.c.b16 %v5337, %v5336
        %v5393 = vpack.c.b16 %v5339, %v5338
        %v5394 = vpack.c.b16 %v5341, %v5340
        %v5395 = vpack.c.b16 %v5343, %v5342
        %v5396 = vpack.c.b16 %v5345, %v5344
        %v5397 = vpack.c.b16 %v5347, %v5346
        %v5398 = vpack.c.b16 %v5349, %v5348
        %v5399 = vpack.c.b16 %v5351, %v5350
        %v5400 = vpack.c.b16 %v5353, %v5352
        %v5401 = vpack.c.b16 %v5355, %v5354
        %v5402 = vpack.c.b16 %v5357, %v5356
        %v5403 = vpack.c.b16 %v5359, %v5358
        %v5404 = vpack.c.b16 %v5361, %v5360
        %v5405 = vpack.c.b16 %v5363, %v5362
        %v5406 = vpack.c.b16 %v5365, %v5364
        %v5407 = vpack.c.b16 %v5367, %v5366
        %v5408 = vpack.c.b16 %v5369, %v5368
        %v5409 = vpack.c.b16 %v5371, %v5370
        %v5410 = vpack.c.b16 %v5373, %v5372
        %v5411 = vpack.c.b16 %v5375, %v5374
        %v5412 = vpack.c.b16 %v5377, %v5376
        %v5413 = vpack.c.b16 %v5379, %v5378
        %v5414 = vpack.c.b16 %v5381, %v5380
        %v5415 = vpack.c.b16 %v5383, %v5382
        %5448 = vmatprep.subr.bf16.mxu0 0
        %5449 = vmatpush1.bf16.msra.mxu0 %v5384
        %5450 = vmatprep.subr.bf16.mxu0 0
        %5451 = vmatpush1.bf16.msra.mxu0 %v5385
        %5452 = vmatprep.subr.bf16.mxu0 0
        %5453 = vmatpush1.bf16.msra.mxu0 %v5386
        %5454 = vmatprep.subr.bf16.mxu0 0
        %5455 = vmatpush1.bf16.msra.mxu0 %v5387
        %5456 = vmatprep.subr.bf16.mxu0 0
        %5457 = vmatpush1.bf16.msra.mxu0 %v5388
        %5458 = vmatprep.subr.bf16.mxu0 0
        %5459 = vmatpush1.bf16.msra.mxu0 %v5389
        %5460 = vmatprep.subr.bf16.mxu0 0
        %5461 = vmatpush1.bf16.msra.mxu0 %v5390
        %5462 = vmatprep.subr.bf16.mxu0 0
        %5463 = vmatpush1.bf16.msra.mxu0 %v5391
        %5464 = vmatprep.subr.bf16.mxu0 0
        %5465 = vmatpush1.bf16.msra.mxu0 %v5392
        %5466 = vmatprep.subr.bf16.mxu0 0
        %5467 = vmatpush1.bf16.msra.mxu0 %v5393
        %5468 = vmatprep.subr.bf16.mxu0 0
        %5469 = vmatpush1.bf16.msra.mxu0 %v5394
        %5470 = vmatprep.subr.bf16.mxu0 0
        %5471 = vmatpush1.bf16.msra.mxu0 %v5395
        %5472 = vmatprep.subr.bf16.mxu0 0
        %5473 = vmatpush1.bf16.msra.mxu0 %v5396
        %5474 = vmatprep.subr.bf16.mxu0 0
        %5475 = vmatpush1.bf16.msra.mxu0 %v5397
        %5476 = vmatprep.subr.bf16.mxu0 0
        %5477 = vmatpush1.bf16.msra.mxu0 %v5398
        %5478 = vmatprep.subr.bf16.mxu0 0
        %5479 = vmatpush1.bf16.msra.mxu0 %v5399
        %5480 = vmatprep.mubr.bf16.mxu0 %v5249
        %5481 = vmatmul.mubr.bf16.gmra.mrb[0].mxu0 %v5248
        %v5482 = vpop.f32.mrb[0].mxu0
        %v5483 = vadd.f32 0.0, %v5482
        %v5484 = vpop.f32.mrb[0].mxu0
        %v5485 = vpop.f32.mrb[0].mxu0
        %v5486 = vpop.f32.mrb[0].mxu0
        %5487 = vdwg.mxu0
        %5488 = vmatprep.subr.bf16.mxu0 0
        %5489 = vmatpush1.bf16.msra.mxu0 %v5400
        %5490 = vmatprep.subr.bf16.mxu0 0
        %5491 = vmatpush1.bf16.msra.mxu0 %v5401
        %5492 = vmatprep.subr.bf16.mxu0 0
        %5493 = vmatpush1.bf16.msra.mxu0 %v5402
        %5494 = vmatprep.subr.bf16.mxu0 0
        %5495 = vmatpush1.bf16.msra.mxu0 %v5403
        %5496 = vmatprep.subr.bf16.mxu0 0
        %5497 = vmatpush1.bf16.msra.mxu0 %v5404
        %5498 = vmatprep.subr.bf16.mxu0 0
        %5499 = vmatpush1.bf16.msra.mxu0 %v5405
        %5500 = vmatprep.subr.bf16.mxu0 0
        %5501 = vmatpush1.bf16.msra.mxu0 %v5406
        %5502 = vmatprep.subr.bf16.mxu0 0
        %5503 = vmatpush1.bf16.msra.mxu0 %v5407
        %5504 = vmatprep.subr.bf16.mxu0 0
        %5505 = vmatpush1.bf16.msra.mxu0 %v5408
        %5506 = vmatprep.subr.bf16.mxu0 0
        %5507 = vmatpush1.bf16.msra.mxu0 %v5409
        %5508 = vmatprep.subr.bf16.mxu0 0
        %5509 = vmatpush1.bf16.msra.mxu0 %v5410
        %5510 = vmatprep.subr.bf16.mxu0 0
        %5511 = vmatpush1.bf16.msra.mxu0 %v5411
        %5512 = vmatprep.subr.bf16.mxu0 0
        %5513 = vmatpush1.bf16.msra.mxu0 %v5412
        %5514 = vmatprep.subr.bf16.mxu0 0
        %5515 = vmatpush1.bf16.msra.mxu0 %v5413
        %5516 = vmatprep.subr.bf16.mxu0 0
        %5517 = vmatpush1.bf16.msra.mxu0 %v5414
        %5518 = vmatprep.subr.bf16.mxu0 0
        %5519 = vmatpush1.bf16.msra.mxu0 %v5415
        %5520 = vmatprep.mubr.bf16.mxu0 %v5251
        %5521 = vmatmul.mubr.bf16.gmra.mrb[0].mxu0 %v5250
        %v5522 = vpop.f32.mrb[0].mxu0
        %v5523 = vadd.f32 %v5483, %v5522
        %v5524 = vpop.f32.mrb[0].mxu0
        %v5525 = vpop.f32.mrb[0].mxu0
        %v5526 = vpop.f32.mrb[0].mxu0
        %5527 = vdwg.mxu0
        %v5528 = vadd.f32 %v5170, %v5523
        %s5529 = scalar_lea.vmem [#allocation11], 3328
        %v5530 = vld [vmem:[%s5529] sm:$0xf]
        %v5531 = vld [vmem:[%s5529 + $0x4] sm:$0xf]
        %v5532 = vld [vmem:[%s5529 + $0x8] sm:$0xf]
        %v5533 = vld [vmem:[%s5529 + $0xc] sm:$0xf]
        %v5534 = vld [vmem:[%s5529 + $0x10] sm:$0xf]
        %v5535 = vld [vmem:[%s5529 + $0x14] sm:$0xf]
        %v5536 = vld [vmem:[%s5529 + $0x18] sm:$0xf]
        %v5537 = vld [vmem:[%s5529 + $0x1c] sm:$0xf]
        %v5538 = vld [vmem:[%s5529 + $0x20] sm:$0xf]
        %v5539 = vld [vmem:[%s5529 + $0x24] sm:$0xf]
        %v5540 = vld [vmem:[%s5529 + $0x28] sm:$0xf]
        %v5541 = vld [vmem:[%s5529 + $0x2c] sm:$0xf]
        %v5542 = vld [vmem:[%s5529 + $0x30] sm:$0xf]
        %v5543 = vld [vmem:[%s5529 + $0x34] sm:$0xf]
        %v5544 = vld [vmem:[%s5529 + $0x38] sm:$0xf]
        %v5545 = vld [vmem:[%s5529 + $0x3c] sm:$0xf]
        %v5546 = vld [vmem:[%s5529 + $0x40] sm:$0xf]
        %v5547 = vld [vmem:[%s5529 + $0x44] sm:$0xf]
        %v5548 = vld [vmem:[%s5529 + $0x48] sm:$0xf]
        %v5549 = vld [vmem:[%s5529 + $0x4c] sm:$0xf]
        %v5550 = vld [vmem:[%s5529 + $0x50] sm:$0xf]
        %v5551 = vld [vmem:[%s5529 + $0x54] sm:$0xf]
        %v5552 = vld [vmem:[%s5529 + $0x58] sm:$0xf]
        %v5553 = vld [vmem:[%s5529 + $0x5c] sm:$0xf]
        %v5554 = vld [vmem:[%s5529 + $0x60] sm:$0xf]
        %v5555 = vld [vmem:[%s5529 + $0x64] sm:$0xf]
        %v5556 = vld [vmem:[%s5529 + $0x68] sm:$0xf]
        %v5557 = vld [vmem:[%s5529 + $0x6c] sm:$0xf]
        %v5558 = vld [vmem:[%s5529 + $0x70] sm:$0xf]
        %v5559 = vld [vmem:[%s5529 + $0x74] sm:$0xf]
        %v5560 = vld [vmem:[%s5529 + $0x78] sm:$0xf]
        %v5561 = vld [vmem:[%s5529 + $0x7c] sm:$0xf]
        %v5562 = vld [vmem:[%s5529 + $0x80] sm:$0xf]
        %v5563 = vld [vmem:[%s5529 + $0x84] sm:$0xf]
        %v5564 = vld [vmem:[%s5529 + $0x88] sm:$0xf]
        %v5565 = vld [vmem:[%s5529 + $0x8c] sm:$0xf]
        %v5566 = vld [vmem:[%s5529 + $0x90] sm:$0xf]
        %v5567 = vld [vmem:[%s5529 + $0x94] sm:$0xf]
        %v5568 = vld [vmem:[%s5529 + $0x98] sm:$0xf]
        %v5569 = vld [vmem:[%s5529 + $0x9c] sm:$0xf]
        %v5570 = vld [vmem:[%s5529 + $0xa0] sm:$0xf]
        %v5571 = vld [vmem:[%s5529 + $0xa4] sm:$0xf]
        %v5572 = vld [vmem:[%s5529 + $0xa8] sm:$0xf]
        %v5573 = vld [vmem:[%s5529 + $0xac] sm:$0xf]
        %v5574 = vld [vmem:[%s5529 + $0xb0] sm:$0xf]
        %v5575 = vld [vmem:[%s5529 + $0xb4] sm:$0xf]
        %v5576 = vld [vmem:[%s5529 + $0xb8] sm:$0xf]
        %v5577 = vld [vmem:[%s5529 + $0xbc] sm:$0xf]
        %v5578 = vld [vmem:[%s5529 + $0xc0] sm:$0xf]
        %v5579 = vld [vmem:[%s5529 + $0xc4] sm:$0xf]
        %v5580 = vld [vmem:[%s5529 + $0xc8] sm:$0xf]
        %v5581 = vld [vmem:[%s5529 + $0xcc] sm:$0xf]
        %v5582 = vld [vmem:[%s5529 + $0xd0] sm:$0xf]
        %v5583 = vld [vmem:[%s5529 + $0xd4] sm:$0xf]
        %v5584 = vld [vmem:[%s5529 + $0xd8] sm:$0xf]
        %v5585 = vld [vmem:[%s5529 + $0xdc] sm:$0xf]
        %v5586 = vld [vmem:[%s5529 + $0xe0] sm:$0xf]
        %v5587 = vld [vmem:[%s5529 + $0xe4] sm:$0xf]
        %v5588 = vld [vmem:[%s5529 + $0xe8] sm:$0xf]
        %v5589 = vld [vmem:[%s5529 + $0xec] sm:$0xf]
        %v5590 = vld [vmem:[%s5529 + $0xf0] sm:$0xf]
        %v5591 = vld [vmem:[%s5529 + $0xf4] sm:$0xf]
        %v5592 = vld [vmem:[%s5529 + $0xf8] sm:$0xf]
        %v5593 = vld [vmem:[%s5529 + $0xfc] sm:$0xf]
        %v5594 = vrot.slane %v3804, 5
        %v5595 = vrot.slane %v3808, 4
        %v5596 = vsel %vm1015, %v5595, %v5594
        %v5597 = vrot.slane %v3805, 5
        %v5598 = vrot.slane %v3809, 4
        %v5599 = vsel %vm1015, %v5598, %v5597
        %v5600 = vrot.slane %v3806, 5
        %v5601 = vrot.slane %v3810, 4
        %v5602 = vsel %vm1015, %v5601, %v5600
        %v5603 = vrot.slane %v3807, 5
        %v5604 = vrot.slane %v3811, 4
        %v5605 = vsel %vm1015, %v5604, %v5603
        %v5606 = vpack.c.b16 %v5596, %v5596
        %v5607 = vpack.c.b16 %v5599, %v5599
        %v5608 = vpack.c.b16 %v5602, %v5602
        %v5609 = vpack.c.b16 %v5605, %v5605
        %v5678 = vunpack.c.l.b16 %v5530
        %v5679 = vunpack.c.l.b16 %v5531
        %v5680 = vunpack.c.l.b16 %v5532
        %v5681 = vunpack.c.l.b16 %v5533
        %v5682 = vunpack.c.l.b16 %v5534
        %v5683 = vunpack.c.l.b16 %v5535
        %v5684 = vunpack.c.l.b16 %v5536
        %v5685 = vunpack.c.l.b16 %v5537
        %v5686 = vunpack.c.l.b16 %v5538
        %v5687 = vunpack.c.l.b16 %v5539
        %v5688 = vunpack.c.l.b16 %v5540
        %v5689 = vunpack.c.l.b16 %v5541
        %v5690 = vunpack.c.l.b16 %v5542
        %v5691 = vunpack.c.l.b16 %v5543
        %v5692 = vunpack.c.l.b16 %v5544
        %v5693 = vunpack.c.l.b16 %v5545
        %v5694 = vunpack.c.l.b16 %v5546
        %v5695 = vunpack.c.l.b16 %v5547
        %v5696 = vunpack.c.l.b16 %v5548
        %v5697 = vunpack.c.l.b16 %v5549
        %v5698 = vunpack.c.l.b16 %v5550
        %v5699 = vunpack.c.l.b16 %v5551
        %v5700 = vunpack.c.l.b16 %v5552
        %v5701 = vunpack.c.l.b16 %v5553
        %v5702 = vunpack.c.l.b16 %v5554
        %v5703 = vunpack.c.l.b16 %v5555
        %v5704 = vunpack.c.l.b16 %v5556
        %v5705 = vunpack.c.l.b16 %v5557
        %v5706 = vunpack.c.l.b16 %v5558
        %v5707 = vunpack.c.l.b16 %v5559
        %v5708 = vunpack.c.l.b16 %v5560
        %v5709 = vunpack.c.l.b16 %v5561
        %v5710 = vunpack.c.l.b16 %v5562
        %v5711 = vunpack.c.l.b16 %v5563
        %v5712 = vunpack.c.l.b16 %v5564
        %v5713 = vunpack.c.l.b16 %v5565
        %v5714 = vunpack.c.l.b16 %v5566
        %v5715 = vunpack.c.l.b16 %v5567
        %v5716 = vunpack.c.l.b16 %v5568
        %v5717 = vunpack.c.l.b16 %v5569
        %v5718 = vunpack.c.l.b16 %v5570
        %v5719 = vunpack.c.l.b16 %v5571
        %v5720 = vunpack.c.l.b16 %v5572
        %v5721 = vunpack.c.l.b16 %v5573
        %v5722 = vunpack.c.l.b16 %v5574
        %v5723 = vunpack.c.l.b16 %v5575
        %v5724 = vunpack.c.l.b16 %v5576
        %v5725 = vunpack.c.l.b16 %v5577
        %v5726 = vunpack.c.l.b16 %v5578
        %v5727 = vunpack.c.l.b16 %v5579
        %v5728 = vunpack.c.l.b16 %v5580
        %v5729 = vunpack.c.l.b16 %v5581
        %v5730 = vunpack.c.l.b16 %v5582
        %v5731 = vunpack.c.l.b16 %v5583
        %v5732 = vunpack.c.l.b16 %v5584
        %v5733 = vunpack.c.l.b16 %v5585
        %v5734 = vunpack.c.l.b16 %v5586
        %v5735 = vunpack.c.l.b16 %v5587
        %v5736 = vunpack.c.l.b16 %v5588
        %v5737 = vunpack.c.l.b16 %v5589
        %v5738 = vunpack.c.l.b16 %v5590
        %v5739 = vunpack.c.l.b16 %v5591
        %v5740 = vunpack.c.l.b16 %v5592
        %v5741 = vunpack.c.l.b16 %v5593
        %v5742 = vpack.c.b16 %v5679, %v5678
        %v5743 = vpack.c.b16 %v5681, %v5680
        %v5744 = vpack.c.b16 %v5683, %v5682
        %v5745 = vpack.c.b16 %v5685, %v5684
        %v5746 = vpack.c.b16 %v5687, %v5686
        %v5747 = vpack.c.b16 %v5689, %v5688
        %v5748 = vpack.c.b16 %v5691, %v5690
        %v5749 = vpack.c.b16 %v5693, %v5692
        %v5750 = vpack.c.b16 %v5695, %v5694
        %v5751 = vpack.c.b16 %v5697, %v5696
        %v5752 = vpack.c.b16 %v5699, %v5698
        %v5753 = vpack.c.b16 %v5701, %v5700
        %v5754 = vpack.c.b16 %v5703, %v5702
        %v5755 = vpack.c.b16 %v5705, %v5704
        %v5756 = vpack.c.b16 %v5707, %v5706
        %v5757 = vpack.c.b16 %v5709, %v5708
        %v5758 = vpack.c.b16 %v5711, %v5710
        %v5759 = vpack.c.b16 %v5713, %v5712
        %v5760 = vpack.c.b16 %v5715, %v5714
        %v5761 = vpack.c.b16 %v5717, %v5716
        %v5762 = vpack.c.b16 %v5719, %v5718
        %v5763 = vpack.c.b16 %v5721, %v5720
        %v5764 = vpack.c.b16 %v5723, %v5722
        %v5765 = vpack.c.b16 %v5725, %v5724
        %v5766 = vpack.c.b16 %v5727, %v5726
        %v5767 = vpack.c.b16 %v5729, %v5728
        %v5768 = vpack.c.b16 %v5731, %v5730
        %v5769 = vpack.c.b16 %v5733, %v5732
        %v5770 = vpack.c.b16 %v5735, %v5734
        %v5771 = vpack.c.b16 %v5737, %v5736
        %v5772 = vpack.c.b16 %v5739, %v5738
        %v5773 = vpack.c.b16 %v5741, %v5740
        %5806 = vmatprep.subr.bf16.mxu0 0
        %5807 = vmatpush1.bf16.msra.mxu0 %v5742
        %5808 = vmatprep.subr.bf16.mxu0 0
        %5809 = vmatpush1.bf16.msra.mxu0 %v5743
        %5810 = vmatprep.subr.bf16.mxu0 0
        %5811 = vmatpush1.bf16.msra.mxu0 %v5744
        %5812 = vmatprep.subr.bf16.mxu0 0
        %5813 = vmatpush1.bf16.msra.mxu0 %v5745
        %5814 = vmatprep.subr.bf16.mxu0 0
        %5815 = vmatpush1.bf16.msra.mxu0 %v5746
        %5816 = vmatprep.subr.bf16.mxu0 0
        %5817 = vmatpush1.bf16.msra.mxu0 %v5747
        %5818 = vmatprep.subr.bf16.mxu0 0
        %5819 = vmatpush1.bf16.msra.mxu0 %v5748
        %5820 = vmatprep.subr.bf16.mxu0 0
        %5821 = vmatpush1.bf16.msra.mxu0 %v5749
        %5822 = vmatprep.subr.bf16.mxu0 0
        %5823 = vmatpush1.bf16.msra.mxu0 %v5750
        %5824 = vmatprep.subr.bf16.mxu0 0
        %5825 = vmatpush1.bf16.msra.mxu0 %v5751
        %5826 = vmatprep.subr.bf16.mxu0 0
        %5827 = vmatpush1.bf16.msra.mxu0 %v5752
        %5828 = vmatprep.subr.bf16.mxu0 0
        %5829 = vmatpush1.bf16.msra.mxu0 %v5753
        %5830 = vmatprep.subr.bf16.mxu0 0
        %5831 = vmatpush1.bf16.msra.mxu0 %v5754
        %5832 = vmatprep.subr.bf16.mxu0 0
        %5833 = vmatpush1.bf16.msra.mxu0 %v5755
        %5834 = vmatprep.subr.bf16.mxu0 0
        %5835 = vmatpush1.bf16.msra.mxu0 %v5756
        %5836 = vmatprep.subr.bf16.mxu0 0
        %5837 = vmatpush1.bf16.msra.mxu0 %v5757
        %5838 = vmatprep.mubr.bf16.mxu0 %v5607
        %5839 = vmatmul.mubr.bf16.gmra.mrb[0].mxu0 %v5606
        %v5840 = vpop.f32.mrb[0].mxu0
        %v5841 = vadd.f32 0.0, %v5840
        %v5842 = vpop.f32.mrb[0].mxu0
        %v5843 = vpop.f32.mrb[0].mxu0
        %v5844 = vpop.f32.mrb[0].mxu0
        %5845 = vdwg.mxu0
        %5846 = vmatprep.subr.bf16.mxu0 0
        %5847 = vmatpush1.bf16.msra.mxu0 %v5758
        %5848 = vmatprep.subr.bf16.mxu0 0
        %5849 = vmatpush1.bf16.msra.mxu0 %v5759
        %5850 = vmatprep.subr.bf16.mxu0 0
        %5851 = vmatpush1.bf16.msra.mxu0 %v5760
        %5852 = vmatprep.subr.bf16.mxu0 0
        %5853 = vmatpush1.bf16.msra.mxu0 %v5761
        %5854 = vmatprep.subr.bf16.mxu0 0
        %5855 = vmatpush1.bf16.msra.mxu0 %v5762
        %5856 = vmatprep.subr.bf16.mxu0 0
        %5857 = vmatpush1.bf16.msra.mxu0 %v5763
        %5858 = vmatprep.subr.bf16.mxu0 0
        %5859 = vmatpush1.bf16.msra.mxu0 %v5764
        %5860 = vmatprep.subr.bf16.mxu0 0
        %5861 = vmatpush1.bf16.msra.mxu0 %v5765
        %5862 = vmatprep.subr.bf16.mxu0 0
        %5863 = vmatpush1.bf16.msra.mxu0 %v5766
        %5864 = vmatprep.subr.bf16.mxu0 0
        %5865 = vmatpush1.bf16.msra.mxu0 %v5767
        %5866 = vmatprep.subr.bf16.mxu0 0
        %5867 = vmatpush1.bf16.msra.mxu0 %v5768
        %5868 = vmatprep.subr.bf16.mxu0 0
        %5869 = vmatpush1.bf16.msra.mxu0 %v5769
        %5870 = vmatprep.subr.bf16.mxu0 0
        %5871 = vmatpush1.bf16.msra.mxu0 %v5770
        %5872 = vmatprep.subr.bf16.mxu0 0
        %5873 = vmatpush1.bf16.msra.mxu0 %v5771
        %5874 = vmatprep.subr.bf16.mxu0 0
        %5875 = vmatpush1.bf16.msra.mxu0 %v5772
        %5876 = vmatprep.subr.bf16.mxu0 0
        %5877 = vmatpush1.bf16.msra.mxu0 %v5773
        %5878 = vmatprep.mubr.bf16.mxu0 %v5609
        %5879 = vmatmul.mubr.bf16.gmra.mrb[0].mxu0 %v5608
        %v5880 = vpop.f32.mrb[0].mxu0
        %v5881 = vadd.f32 %v5841, %v5880
        %v5882 = vpop.f32.mrb[0].mxu0
        %v5883 = vpop.f32.mrb[0].mxu0
        %v5884 = vpop.f32.mrb[0].mxu0
        %5885 = vdwg.mxu0
        %v5886 = vadd.f32 %v5528, %v5881
        %s5887 = scalar_lea.vmem [#allocation11], 3584
        %v5888 = vld [vmem:[%s5887] sm:$0xf]
        %v5889 = vld [vmem:[%s5887 + $0x4] sm:$0xf]
        %v5890 = vld [vmem:[%s5887 + $0x8] sm:$0xf]
        %v5891 = vld [vmem:[%s5887 + $0xc] sm:$0xf]
        %v5892 = vld [vmem:[%s5887 + $0x10] sm:$0xf]
        %v5893 = vld [vmem:[%s5887 + $0x14] sm:$0xf]
        %v5894 = vld [vmem:[%s5887 + $0x18] sm:$0xf]
        %v5895 = vld [vmem:[%s5887 + $0x1c] sm:$0xf]
        %v5896 = vld [vmem:[%s5887 + $0x20] sm:$0xf]
        %v5897 = vld [vmem:[%s5887 + $0x24] sm:$0xf]
        %v5898 = vld [vmem:[%s5887 + $0x28] sm:$0xf]
        %v5899 = vld [vmem:[%s5887 + $0x2c] sm:$0xf]
        %v5900 = vld [vmem:[%s5887 + $0x30] sm:$0xf]
        %v5901 = vld [vmem:[%s5887 + $0x34] sm:$0xf]
        %v5902 = vld [vmem:[%s5887 + $0x38] sm:$0xf]
        %v5903 = vld [vmem:[%s5887 + $0x3c] sm:$0xf]
        %v5904 = vld [vmem:[%s5887 + $0x40] sm:$0xf]
        %v5905 = vld [vmem:[%s5887 + $0x44] sm:$0xf]
        %v5906 = vld [vmem:[%s5887 + $0x48] sm:$0xf]
        %v5907 = vld [vmem:[%s5887 + $0x4c] sm:$0xf]
        %v5908 = vld [vmem:[%s5887 + $0x50] sm:$0xf]
        %v5909 = vld [vmem:[%s5887 + $0x54] sm:$0xf]
        %v5910 = vld [vmem:[%s5887 + $0x58] sm:$0xf]
        %v5911 = vld [vmem:[%s5887 + $0x5c] sm:$0xf]
        %v5912 = vld [vmem:[%s5887 + $0x60] sm:$0xf]
        %v5913 = vld [vmem:[%s5887 + $0x64] sm:$0xf]
        %v5914 = vld [vmem:[%s5887 + $0x68] sm:$0xf]
        %v5915 = vld [vmem:[%s5887 + $0x6c] sm:$0xf]
        %v5916 = vld [vmem:[%s5887 + $0x70] sm:$0xf]
        %v5917 = vld [vmem:[%s5887 + $0x74] sm:$0xf]
        %v5918 = vld [vmem:[%s5887 + $0x78] sm:$0xf]
        %v5919 = vld [vmem:[%s5887 + $0x7c] sm:$0xf]
        %v5920 = vld [vmem:[%s5887 + $0x80] sm:$0xf]
        %v5921 = vld [vmem:[%s5887 + $0x84] sm:$0xf]
        %v5922 = vld [vmem:[%s5887 + $0x88] sm:$0xf]
        %v5923 = vld [vmem:[%s5887 + $0x8c] sm:$0xf]
        %v5924 = vld [vmem:[%s5887 + $0x90] sm:$0xf]
        %v5925 = vld [vmem:[%s5887 + $0x94] sm:$0xf]
        %v5926 = vld [vmem:[%s5887 + $0x98] sm:$0xf]
        %v5927 = vld [vmem:[%s5887 + $0x9c] sm:$0xf]
        %v5928 = vld [vmem:[%s5887 + $0xa0] sm:$0xf]
        %v5929 = vld [vmem:[%s5887 + $0xa4] sm:$0xf]
        %v5930 = vld [vmem:[%s5887 + $0xa8] sm:$0xf]
        %v5931 = vld [vmem:[%s5887 + $0xac] sm:$0xf]
        %v5932 = vld [vmem:[%s5887 + $0xb0] sm:$0xf]
        %v5933 = vld [vmem:[%s5887 + $0xb4] sm:$0xf]
        %v5934 = vld [vmem:[%s5887 + $0xb8] sm:$0xf]
        %v5935 = vld [vmem:[%s5887 + $0xbc] sm:$0xf]
        %v5936 = vld [vmem:[%s5887 + $0xc0] sm:$0xf]
        %v5937 = vld [vmem:[%s5887 + $0xc4] sm:$0xf]
        %v5938 = vld [vmem:[%s5887 + $0xc8] sm:$0xf]
        %v5939 = vld [vmem:[%s5887 + $0xcc] sm:$0xf]
        %v5940 = vld [vmem:[%s5887 + $0xd0] sm:$0xf]
        %v5941 = vld [vmem:[%s5887 + $0xd4] sm:$0xf]
        %v5942 = vld [vmem:[%s5887 + $0xd8] sm:$0xf]
        %v5943 = vld [vmem:[%s5887 + $0xdc] sm:$0xf]
        %v5944 = vld [vmem:[%s5887 + $0xe0] sm:$0xf]
        %v5945 = vld [vmem:[%s5887 + $0xe4] sm:$0xf]
        %v5946 = vld [vmem:[%s5887 + $0xe8] sm:$0xf]
        %v5947 = vld [vmem:[%s5887 + $0xec] sm:$0xf]
        %v5948 = vld [vmem:[%s5887 + $0xf0] sm:$0xf]
        %v5949 = vld [vmem:[%s5887 + $0xf4] sm:$0xf]
        %v5950 = vld [vmem:[%s5887 + $0xf8] sm:$0xf]
        %v5951 = vld [vmem:[%s5887 + $0xfc] sm:$0xf]
        %v5952 = vrot.slane %v3804, 6
        %v5953 = vrot.slane %v3808, 5
        %v5954 = vsel %vm1015, %v5953, %v5952
        %v5955 = vrot.slane %v3805, 6
        %v5956 = vrot.slane %v3809, 5
        %v5957 = vsel %vm1015, %v5956, %v5955
        %v5958 = vrot.slane %v3806, 6
        %v5959 = vrot.slane %v3810, 5
        %v5960 = vsel %vm1015, %v5959, %v5958
        %v5961 = vrot.slane %v3807, 6
        %v5962 = vrot.slane %v3811, 5
        %v5963 = vsel %vm1015, %v5962, %v5961
        %v5964 = vpack.c.b16 %v5954, %v5954
        %v5965 = vpack.c.b16 %v5957, %v5957
        %v5966 = vpack.c.b16 %v5960, %v5960
        %v5967 = vpack.c.b16 %v5963, %v5963
        %v6036 = vunpack.c.l.b16 %v5888
        %v6037 = vunpack.c.l.b16 %v5889
        %v6038 = vunpack.c.l.b16 %v5890
        %v6039 = vunpack.c.l.b16 %v5891
        %v6040 = vunpack.c.l.b16 %v5892
        %v6041 = vunpack.c.l.b16 %v5893
        %v6042 = vunpack.c.l.b16 %v5894
        %v6043 = vunpack.c.l.b16 %v5895
        %v6044 = vunpack.c.l.b16 %v5896
        %v6045 = vunpack.c.l.b16 %v5897
        %v6046 = vunpack.c.l.b16 %v5898
        %v6047 = vunpack.c.l.b16 %v5899
        %v6048 = vunpack.c.l.b16 %v5900
        %v6049 = vunpack.c.l.b16 %v5901
        %v6050 = vunpack.c.l.b16 %v5902
        %v6051 = vunpack.c.l.b16 %v5903
        %v6052 = vunpack.c.l.b16 %v5904
        %v6053 = vunpack.c.l.b16 %v5905
        %v6054 = vunpack.c.l.b16 %v5906
        %v6055 = vunpack.c.l.b16 %v5907
        %v6056 = vunpack.c.l.b16 %v5908
        %v6057 = vunpack.c.l.b16 %v5909
        %v6058 = vunpack.c.l.b16 %v5910
        %v6059 = vunpack.c.l.b16 %v5911
        %v6060 = vunpack.c.l.b16 %v5912
        %v6061 = vunpack.c.l.b16 %v5913
        %v6062 = vunpack.c.l.b16 %v5914
        %v6063 = vunpack.c.l.b16 %v5915
        %v6064 = vunpack.c.l.b16 %v5916
        %v6065 = vunpack.c.l.b16 %v5917
        %v6066 = vunpack.c.l.b16 %v5918
        %v6067 = vunpack.c.l.b16 %v5919
        %v6068 = vunpack.c.l.b16 %v5920
        %v6069 = vunpack.c.l.b16 %v5921
        %v6070 = vunpack.c.l.b16 %v5922
        %v6071 = vunpack.c.l.b16 %v5923
        %v6072 = vunpack.c.l.b16 %v5924
        %v6073 = vunpack.c.l.b16 %v5925
        %v6074 = vunpack.c.l.b16 %v5926
        %v6075 = vunpack.c.l.b16 %v5927
        %v6076 = vunpack.c.l.b16 %v5928
        %v6077 = vunpack.c.l.b16 %v5929
        %v6078 = vunpack.c.l.b16 %v5930
        %v6079 = vunpack.c.l.b16 %v5931
        %v6080 = vunpack.c.l.b16 %v5932
        %v6081 = vunpack.c.l.b16 %v5933
        %v6082 = vunpack.c.l.b16 %v5934
        %v6083 = vunpack.c.l.b16 %v5935
        %v6084 = vunpack.c.l.b16 %v5936
        %v6085 = vunpack.c.l.b16 %v5937
        %v6086 = vunpack.c.l.b16 %v5938
        %v6087 = vunpack.c.l.b16 %v5939
        %v6088 = vunpack.c.l.b16 %v5940
        %v6089 = vunpack.c.l.b16 %v5941
        %v6090 = vunpack.c.l.b16 %v5942
        %v6091 = vunpack.c.l.b16 %v5943
        %v6092 = vunpack.c.l.b16 %v5944
        %v6093 = vunpack.c.l.b16 %v5945
        %v6094 = vunpack.c.l.b16 %v5946
        %v6095 = vunpack.c.l.b16 %v5947
        %v6096 = vunpack.c.l.b16 %v5948
        %v6097 = vunpack.c.l.b16 %v5949
        %v6098 = vunpack.c.l.b16 %v5950
        %v6099 = vunpack.c.l.b16 %v5951
        %v6100 = vpack.c.b16 %v6037, %v6036
        %v6101 = vpack.c.b16 %v6039, %v6038
        %v6102 = vpack.c.b16 %v6041, %v6040
        %v6103 = vpack.c.b16 %v6043, %v6042
        %v6104 = vpack.c.b16 %v6045, %v6044
        %v6105 = vpack.c.b16 %v6047, %v6046
        %v6106 = vpack.c.b16 %v6049, %v6048
        %v6107 = vpack.c.b16 %v6051, %v6050
        %v6108 = vpack.c.b16 %v6053, %v6052
        %v6109 = vpack.c.b16 %v6055, %v6054
        %v6110 = vpack.c.b16 %v6057, %v6056
        %v6111 = vpack.c.b16 %v6059, %v6058
        %v6112 = vpack.c.b16 %v6061, %v6060
        %v6113 = vpack.c.b16 %v6063, %v6062
        %v6114 = vpack.c.b16 %v6065, %v6064
        %v6115 = vpack.c.b16 %v6067, %v6066
        %v6116 = vpack.c.b16 %v6069, %v6068
        %v6117 = vpack.c.b16 %v6071, %v6070
        %v6118 = vpack.c.b16 %v6073, %v6072
        %v6119 = vpack.c.b16 %v6075, %v6074
        %v6120 = vpack.c.b16 %v6077, %v6076
        %v6121 = vpack.c.b16 %v6079, %v6078
        %v6122 = vpack.c.b16 %v6081, %v6080
        %v6123 = vpack.c.b16 %v6083, %v6082
        %v6124 = vpack.c.b16 %v6085, %v6084
        %v6125 = vpack.c.b16 %v6087, %v6086
        %v6126 = vpack.c.b16 %v6089, %v6088
        %v6127 = vpack.c.b16 %v6091, %v6090
        %v6128 = vpack.c.b16 %v6093, %v6092
        %v6129 = vpack.c.b16 %v6095, %v6094
        %v6130 = vpack.c.b16 %v6097, %v6096
        %v6131 = vpack.c.b16 %v6099, %v6098
        %6164 = vmatprep.subr.bf16.mxu0 0
        %6165 = vmatpush1.bf16.msra.mxu0 %v6100
        %6166 = vmatprep.subr.bf16.mxu0 0
        %6167 = vmatpush1.bf16.msra.mxu0 %v6101
        %6168 = vmatprep.subr.bf16.mxu0 0
        %6169 = vmatpush1.bf16.msra.mxu0 %v6102
        %6170 = vmatprep.subr.bf16.mxu0 0
        %6171 = vmatpush1.bf16.msra.mxu0 %v6103
        %6172 = vmatprep.subr.bf16.mxu0 0
        %6173 = vmatpush1.bf16.msra.mxu0 %v6104
        %6174 = vmatprep.subr.bf16.mxu0 0
        %6175 = vmatpush1.bf16.msra.mxu0 %v6105
        %6176 = vmatprep.subr.bf16.mxu0 0
        %6177 = vmatpush1.bf16.msra.mxu0 %v6106
        %6178 = vmatprep.subr.bf16.mxu0 0
        %6179 = vmatpush1.bf16.msra.mxu0 %v6107
        %6180 = vmatprep.subr.bf16.mxu0 0
        %6181 = vmatpush1.bf16.msra.mxu0 %v6108
        %6182 = vmatprep.subr.bf16.mxu0 0
        %6183 = vmatpush1.bf16.msra.mxu0 %v6109
        %6184 = vmatprep.subr.bf16.mxu0 0
        %6185 = vmatpush1.bf16.msra.mxu0 %v6110
        %6186 = vmatprep.subr.bf16.mxu0 0
        %6187 = vmatpush1.bf16.msra.mxu0 %v6111
        %6188 = vmatprep.subr.bf16.mxu0 0
        %6189 = vmatpush1.bf16.msra.mxu0 %v6112
        %6190 = vmatprep.subr.bf16.mxu0 0
        %6191 = vmatpush1.bf16.msra.mxu0 %v6113
        %6192 = vmatprep.subr.bf16.mxu0 0
        %6193 = vmatpush1.bf16.msra.mxu0 %v6114
        %6194 = vmatprep.subr.bf16.mxu0 0
        %6195 = vmatpush1.bf16.msra.mxu0 %v6115
        %6196 = vmatprep.mubr.bf16.mxu0 %v5965
        %6197 = vmatmul.mubr.bf16.gmra.mrb[0].mxu0 %v5964
        %v6198 = vpop.f32.mrb[0].mxu0
        %v6199 = vadd.f32 0.0, %v6198
        %v6200 = vpop.f32.mrb[0].mxu0
        %v6201 = vpop.f32.mrb[0].mxu0
        %v6202 = vpop.f32.mrb[0].mxu0
        %6203 = vdwg.mxu0
        %6204 = vmatprep.subr.bf16.mxu0 0
        %6205 = vmatpush1.bf16.msra.mxu0 %v6116
        %6206 = vmatprep.subr.bf16.mxu0 0
        %6207 = vmatpush1.bf16.msra.mxu0 %v6117
        %6208 = vmatprep.subr.bf16.mxu0 0
        %6209 = vmatpush1.bf16.msra.mxu0 %v6118
        %6210 = vmatprep.subr.bf16.mxu0 0
        %6211 = vmatpush1.bf16.msra.mxu0 %v6119
        %6212 = vmatprep.subr.bf16.mxu0 0
        %6213 = vmatpush1.bf16.msra.mxu0 %v6120
        %6214 = vmatprep.subr.bf16.mxu0 0
        %6215 = vmatpush1.bf16.msra.mxu0 %v6121
        %6216 = vmatprep.subr.bf16.mxu0 0
        %6217 = vmatpush1.bf16.msra.mxu0 %v6122
        %6218 = vmatprep.subr.bf16.mxu0 0
        %6219 = vmatpush1.bf16.msra.mxu0 %v6123
        %6220 = vmatprep.subr.bf16.mxu0 0
        %6221 = vmatpush1.bf16.msra.mxu0 %v6124
        %6222 = vmatprep.subr.bf16.mxu0 0
        %6223 = vmatpush1.bf16.msra.mxu0 %v6125
        %6224 = vmatprep.subr.bf16.mxu0 0
        %6225 = vmatpush1.bf16.msra.mxu0 %v6126
        %6226 = vmatprep.subr.bf16.mxu0 0
        %6227 = vmatpush1.bf16.msra.mxu0 %v6127
        %6228 = vmatprep.subr.bf16.mxu0 0
        %6229 = vmatpush1.bf16.msra.mxu0 %v6128
        %6230 = vmatprep.subr.bf16.mxu0 0
        %6231 = vmatpush1.bf16.msra.mxu0 %v6129
        %6232 = vmatprep.subr.bf16.mxu0 0
        %6233 = vmatpush1.bf16.msra.mxu0 %v6130
        %6234 = vmatprep.subr.bf16.mxu0 0
        %6235 = vmatpush1.bf16.msra.mxu0 %v6131
        %6236 = vmatprep.mubr.bf16.mxu0 %v5967
        %6237 = vmatmul.mubr.bf16.gmra.mrb[0].mxu0 %v5966
        %v6238 = vpop.f32.mrb[0].mxu0
        %v6239 = vadd.f32 %v6199, %v6238
        %v6240 = vpop.f32.mrb[0].mxu0
        %v6241 = vpop.f32.mrb[0].mxu0
        %v6242 = vpop.f32.mrb[0].mxu0
        %6243 = vdwg.mxu0
        %v6244 = vadd.f32 %v5886, %v6239
        %s6245 = scalar_lea.vmem [#allocation11], 3840
        %v6246 = vld [vmem:[%s6245] sm:$0xf]
        %v6247 = vld [vmem:[%s6245 + $0x4] sm:$0xf]
        %v6248 = vld [vmem:[%s6245 + $0x8] sm:$0xf]
        %v6249 = vld [vmem:[%s6245 + $0xc] sm:$0xf]
        %v6250 = vld [vmem:[%s6245 + $0x10] sm:$0xf]
        %v6251 = vld [vmem:[%s6245 + $0x14] sm:$0xf]
        %v6252 = vld [vmem:[%s6245 + $0x18] sm:$0xf]
        %v6253 = vld [vmem:[%s6245 + $0x1c] sm:$0xf]
        %v6254 = vld [vmem:[%s6245 + $0x20] sm:$0xf]
        %v6255 = vld [vmem:[%s6245 + $0x24] sm:$0xf]
        %v6256 = vld [vmem:[%s6245 + $0x28] sm:$0xf]
        %v6257 = vld [vmem:[%s6245 + $0x2c] sm:$0xf]
        %v6258 = vld [vmem:[%s6245 + $0x30] sm:$0xf]
        %v6259 = vld [vmem:[%s6245 + $0x34] sm:$0xf]
        %v6260 = vld [vmem:[%s6245 + $0x38] sm:$0xf]
        %v6261 = vld [vmem:[%s6245 + $0x3c] sm:$0xf]
        %v6262 = vld [vmem:[%s6245 + $0x40] sm:$0xf]
        %v6263 = vld [vmem:[%s6245 + $0x44] sm:$0xf]
        %v6264 = vld [vmem:[%s6245 + $0x48] sm:$0xf]
        %v6265 = vld [vmem:[%s6245 + $0x4c] sm:$0xf]
        %v6266 = vld [vmem:[%s6245 + $0x50] sm:$0xf]
        %v6267 = vld [vmem:[%s6245 + $0x54] sm:$0xf]
        %v6268 = vld [vmem:[%s6245 + $0x58] sm:$0xf]
        %v6269 = vld [vmem:[%s6245 + $0x5c] sm:$0xf]
        %v6270 = vld [vmem:[%s6245 + $0x60] sm:$0xf]
        %v6271 = vld [vmem:[%s6245 + $0x64] sm:$0xf]
        %v6272 = vld [vmem:[%s6245 + $0x68] sm:$0xf]
        %v6273 = vld [vmem:[%s6245 + $0x6c] sm:$0xf]
        %v6274 = vld [vmem:[%s6245 + $0x70] sm:$0xf]
        %v6275 = vld [vmem:[%s6245 + $0x74] sm:$0xf]
        %v6276 = vld [vmem:[%s6245 + $0x78] sm:$0xf]
        %v6277 = vld [vmem:[%s6245 + $0x7c] sm:$0xf]
        %v6278 = vld [vmem:[%s6245 + $0x80] sm:$0xf]
        %v6279 = vld [vmem:[%s6245 + $0x84] sm:$0xf]
        %v6280 = vld [vmem:[%s6245 + $0x88] sm:$0xf]
        %v6281 = vld [vmem:[%s6245 + $0x8c] sm:$0xf]
        %v6282 = vld [vmem:[%s6245 + $0x90] sm:$0xf]
        %v6283 = vld [vmem:[%s6245 + $0x94] sm:$0xf]
        %v6284 = vld [vmem:[%s6245 + $0x98] sm:$0xf]
        %v6285 = vld [vmem:[%s6245 + $0x9c] sm:$0xf]
        %v6286 = vld [vmem:[%s6245 + $0xa0] sm:$0xf]
        %v6287 = vld [vmem:[%s6245 + $0xa4] sm:$0xf]
        %v6288 = vld [vmem:[%s6245 + $0xa8] sm:$0xf]
        %v6289 = vld [vmem:[%s6245 + $0xac] sm:$0xf]
        %v6290 = vld [vmem:[%s6245 + $0xb0] sm:$0xf]
        %v6291 = vld [vmem:[%s6245 + $0xb4] sm:$0xf]
        %v6292 = vld [vmem:[%s6245 + $0xb8] sm:$0xf]
        %v6293 = vld [vmem:[%s6245 + $0xbc] sm:$0xf]
        %v6294 = vld [vmem:[%s6245 + $0xc0] sm:$0xf]
        %v6295 = vld [vmem:[%s6245 + $0xc4] sm:$0xf]
        %v6296 = vld [vmem:[%s6245 + $0xc8] sm:$0xf]
        %v6297 = vld [vmem:[%s6245 + $0xcc] sm:$0xf]
        %v6298 = vld [vmem:[%s6245 + $0xd0] sm:$0xf]
        %v6299 = vld [vmem:[%s6245 + $0xd4] sm:$0xf]
        %v6300 = vld [vmem:[%s6245 + $0xd8] sm:$0xf]
        %v6301 = vld [vmem:[%s6245 + $0xdc] sm:$0xf]
        %v6302 = vld [vmem:[%s6245 + $0xe0] sm:$0xf]
        %v6303 = vld [vmem:[%s6245 + $0xe4] sm:$0xf]
        %v6304 = vld [vmem:[%s6245 + $0xe8] sm:$0xf]
        %v6305 = vld [vmem:[%s6245 + $0xec] sm:$0xf]
        %v6306 = vld [vmem:[%s6245 + $0xf0] sm:$0xf]
        %v6307 = vld [vmem:[%s6245 + $0xf4] sm:$0xf]
        %v6308 = vld [vmem:[%s6245 + $0xf8] sm:$0xf]
        %v6309 = vld [vmem:[%s6245 + $0xfc] sm:$0xf]
        %v6310 = vrot.slane %v3804, 7
        %v6311 = vrot.slane %v3808, 6
        %v6312 = vsel %vm1015, %v6311, %v6310
        %v6313 = vrot.slane %v3805, 7
        %v6314 = vrot.slane %v3809, 6
        %v6315 = vsel %vm1015, %v6314, %v6313
        %v6316 = vrot.slane %v3806, 7
        %v6317 = vrot.slane %v3810, 6
        %v6318 = vsel %vm1015, %v6317, %v6316
        %v6319 = vrot.slane %v3807, 7
        %v6320 = vrot.slane %v3811, 6
        %v6321 = vsel %vm1015, %v6320, %v6319
        %v6322 = vpack.c.b16 %v6312, %v6312
        %v6323 = vpack.c.b16 %v6315, %v6315
        %v6324 = vpack.c.b16 %v6318, %v6318
        %v6325 = vpack.c.b16 %v6321, %v6321
        %v6394 = vunpack.c.l.b16 %v6246
        %v6395 = vunpack.c.l.b16 %v6247
        %v6396 = vunpack.c.l.b16 %v6248
        %v6397 = vunpack.c.l.b16 %v6249
        %v6398 = vunpack.c.l.b16 %v6250
        %v6399 = vunpack.c.l.b16 %v6251
        %v6400 = vunpack.c.l.b16 %v6252
        %v6401 = vunpack.c.l.b16 %v6253
        %v6402 = vunpack.c.l.b16 %v6254
        %v6403 = vunpack.c.l.b16 %v6255
        %v6404 = vunpack.c.l.b16 %v6256
        %v6405 = vunpack.c.l.b16 %v6257
        %v6406 = vunpack.c.l.b16 %v6258
        %v6407 = vunpack.c.l.b16 %v6259
        %v6408 = vunpack.c.l.b16 %v6260
        %v6409 = vunpack.c.l.b16 %v6261
        %v6410 = vunpack.c.l.b16 %v6262
        %v6411 = vunpack.c.l.b16 %v6263
        %v6412 = vunpack.c.l.b16 %v6264
        %v6413 = vunpack.c.l.b16 %v6265
        %v6414 = vunpack.c.l.b16 %v6266
        %v6415 = vunpack.c.l.b16 %v6267
        %v6416 = vunpack.c.l.b16 %v6268
        %v6417 = vunpack.c.l.b16 %v6269
        %v6418 = vunpack.c.l.b16 %v6270
        %v6419 = vunpack.c.l.b16 %v6271
        %v6420 = vunpack.c.l.b16 %v6272
        %v6421 = vunpack.c.l.b16 %v6273
        %v6422 = vunpack.c.l.b16 %v6274
        %v6423 = vunpack.c.l.b16 %v6275
        %v6424 = vunpack.c.l.b16 %v6276
        %v6425 = vunpack.c.l.b16 %v6277
        %v6426 = vunpack.c.l.b16 %v6278
        %v6427 = vunpack.c.l.b16 %v6279
        %v6428 = vunpack.c.l.b16 %v6280
        %v6429 = vunpack.c.l.b16 %v6281
        %v6430 = vunpack.c.l.b16 %v6282
        %v6431 = vunpack.c.l.b16 %v6283
        %v6432 = vunpack.c.l.b16 %v6284
        %v6433 = vunpack.c.l.b16 %v6285
        %v6434 = vunpack.c.l.b16 %v6286
        %v6435 = vunpack.c.l.b16 %v6287
        %v6436 = vunpack.c.l.b16 %v6288
        %v6437 = vunpack.c.l.b16 %v6289
        %v6438 = vunpack.c.l.b16 %v6290
        %v6439 = vunpack.c.l.b16 %v6291
        %v6440 = vunpack.c.l.b16 %v6292
        %v6441 = vunpack.c.l.b16 %v6293
        %v6442 = vunpack.c.l.b16 %v6294
        %v6443 = vunpack.c.l.b16 %v6295
        %v6444 = vunpack.c.l.b16 %v6296
        %v6445 = vunpack.c.l.b16 %v6297
        %v6446 = vunpack.c.l.b16 %v6298
        %v6447 = vunpack.c.l.b16 %v6299
        %v6448 = vunpack.c.l.b16 %v6300
        %v6449 = vunpack.c.l.b16 %v6301
        %v6450 = vunpack.c.l.b16 %v6302
        %v6451 = vunpack.c.l.b16 %v6303
        %v6452 = vunpack.c.l.b16 %v6304
        %v6453 = vunpack.c.l.b16 %v6305
        %v6454 = vunpack.c.l.b16 %v6306
        %v6455 = vunpack.c.l.b16 %v6307
        %v6456 = vunpack.c.l.b16 %v6308
        %v6457 = vunpack.c.l.b16 %v6309
        %v6458 = vpack.c.b16 %v6395, %v6394
        %v6459 = vpack.c.b16 %v6397, %v6396
        %v6460 = vpack.c.b16 %v6399, %v6398
        %v6461 = vpack.c.b16 %v6401, %v6400
        %v6462 = vpack.c.b16 %v6403, %v6402
        %v6463 = vpack.c.b16 %v6405, %v6404
        %v6464 = vpack.c.b16 %v6407, %v6406
        %v6465 = vpack.c.b16 %v6409, %v6408
        %v6466 = vpack.c.b16 %v6411, %v6410
        %v6467 = vpack.c.b16 %v6413, %v6412
        %v6468 = vpack.c.b16 %v6415, %v6414
        %v6469 = vpack.c.b16 %v6417, %v6416
        %v6470 = vpack.c.b16 %v6419, %v6418
        %v6471 = vpack.c.b16 %v6421, %v6420
        %v6472 = vpack.c.b16 %v6423, %v6422
        %v6473 = vpack.c.b16 %v6425, %v6424
        %v6474 = vpack.c.b16 %v6427, %v6426
        %v6475 = vpack.c.b16 %v6429, %v6428
        %v6476 = vpack.c.b16 %v6431, %v6430
        %v6477 = vpack.c.b16 %v6433, %v6432
        %v6478 = vpack.c.b16 %v6435, %v6434
        %v6479 = vpack.c.b16 %v6437, %v6436
        %v6480 = vpack.c.b16 %v6439, %v6438
        %v6481 = vpack.c.b16 %v6441, %v6440
        %v6482 = vpack.c.b16 %v6443, %v6442
        %v6483 = vpack.c.b16 %v6445, %v6444
        %v6484 = vpack.c.b16 %v6447, %v6446
        %v6485 = vpack.c.b16 %v6449, %v6448
        %v6486 = vpack.c.b16 %v6451, %v6450
        %v6487 = vpack.c.b16 %v6453, %v6452
        %v6488 = vpack.c.b16 %v6455, %v6454
        %v6489 = vpack.c.b16 %v6457, %v6456
        %6522 = vmatprep.subr.bf16.mxu0 0
        %6523 = vmatpush1.bf16.msra.mxu0 %v6458
        %6524 = vmatprep.subr.bf16.mxu0 0
        %6525 = vmatpush1.bf16.msra.mxu0 %v6459
        %6526 = vmatprep.subr.bf16.mxu0 0
        %6527 = vmatpush1.bf16.msra.mxu0 %v6460
        %6528 = vmatprep.subr.bf16.mxu0 0
        %6529 = vmatpush1.bf16.msra.mxu0 %v6461
        %6530 = vmatprep.subr.bf16.mxu0 0
        %6531 = vmatpush1.bf16.msra.mxu0 %v6462
        %6532 = vmatprep.subr.bf16.mxu0 0
        %6533 = vmatpush1.bf16.msra.mxu0 %v6463
        %6534 = vmatprep.subr.bf16.mxu0 0
        %6535 = vmatpush1.bf16.msra.mxu0 %v6464
        %6536 = vmatprep.subr.bf16.mxu0 0
        %6537 = vmatpush1.bf16.msra.mxu0 %v6465
        %6538 = vmatprep.subr.bf16.mxu0 0
        %6539 = vmatpush1.bf16.msra.mxu0 %v6466
        %6540 = vmatprep.subr.bf16.mxu0 0
        %6541 = vmatpush1.bf16.msra.mxu0 %v6467
        %6542 = vmatprep.subr.bf16.mxu0 0
        %6543 = vmatpush1.bf16.msra.mxu0 %v6468
        %6544 = vmatprep.subr.bf16.mxu0 0
        %6545 = vmatpush1.bf16.msra.mxu0 %v6469
        %6546 = vmatprep.subr.bf16.mxu0 0
        %6547 = vmatpush1.bf16.msra.mxu0 %v6470
        %6548 = vmatprep.subr.bf16.mxu0 0
        %6549 = vmatpush1.bf16.msra.mxu0 %v6471
        %6550 = vmatprep.subr.bf16.mxu0 0
        %6551 = vmatpush1.bf16.msra.mxu0 %v6472
        %6552 = vmatprep.subr.bf16.mxu0 0
        %6553 = vmatpush1.bf16.msra.mxu0 %v6473
        %6554 = vmatprep.mubr.bf16.mxu0 %v6323
        %6555 = vmatmul.mubr.bf16.gmra.mrb[0].mxu0 %v6322
        %v6556 = vpop.f32.mrb[0].mxu0
        %v6557 = vadd.f32 0.0, %v6556
        %v6558 = vpop.f32.mrb[0].mxu0
        %v6559 = vpop.f32.mrb[0].mxu0
        %v6560 = vpop.f32.mrb[0].mxu0
        %6561 = vdwg.mxu0
        %6562 = vmatprep.subr.bf16.mxu0 0
        %6563 = vmatpush1.bf16.msra.mxu0 %v6474
        %6564 = vmatprep.subr.bf16.mxu0 0
        %6565 = vmatpush1.bf16.msra.mxu0 %v6475
        %6566 = vmatprep.subr.bf16.mxu0 0
        %6567 = vmatpush1.bf16.msra.mxu0 %v6476
        %6568 = vmatprep.subr.bf16.mxu0 0
        %6569 = vmatpush1.bf16.msra.mxu0 %v6477
        %6570 = vmatprep.subr.bf16.mxu0 0
        %6571 = vmatpush1.bf16.msra.mxu0 %v6478
        %6572 = vmatprep.subr.bf16.mxu0 0
        %6573 = vmatpush1.bf16.msra.mxu0 %v6479
        %6574 = vmatprep.subr.bf16.mxu0 0
        %6575 = vmatpush1.bf16.msra.mxu0 %v6480
        %6576 = vmatprep.subr.bf16.mxu0 0
        %6577 = vmatpush1.bf16.msra.mxu0 %v6481
        %6578 = vmatprep.subr.bf16.mxu0 0
        %6579 = vmatpush1.bf16.msra.mxu0 %v6482
        %6580 = vmatprep.subr.bf16.mxu0 0
        %6581 = vmatpush1.bf16.msra.mxu0 %v6483
        %6582 = vmatprep.subr.bf16.mxu0 0
        %6583 = vmatpush1.bf16.msra.mxu0 %v6484
        %6584 = vmatprep.subr.bf16.mxu0 0
        %6585 = vmatpush1.bf16.msra.mxu0 %v6485
        %6586 = vmatprep.subr.bf16.mxu0 0
        %6587 = vmatpush1.bf16.msra.mxu0 %v6486
        %6588 = vmatprep.subr.bf16.mxu0 0
        %6589 = vmatpush1.bf16.msra.mxu0 %v6487
        %6590 = vmatprep.subr.bf16.mxu0 0
        %6591 = vmatpush1.bf16.msra.mxu0 %v6488
        %6592 = vmatprep.subr.bf16.mxu0 0
        %6593 = vmatpush1.bf16.msra.mxu0 %v6489
        %6594 = vmatprep.mubr.bf16.mxu0 %v6325
        %6595 = vmatmul.mubr.bf16.gmra.mrb[0].mxu0 %v6324
        %v6596 = vpop.f32.mrb[0].mxu0
        %v6597 = vadd.f32 %v6557, %v6596
        %v6598 = vpop.f32.mrb[0].mxu0
        %v6599 = vpop.f32.mrb[0].mxu0
        %v6600 = vpop.f32.mrb[0].mxu0
        %6601 = vdwg.mxu0
        %v6602 = vadd.f32 %v6244, %v6597
        %v6603 = vld [vmem:[#allocation13] sm:$0x1]
        %v6605 = vlaneseq
        %v6606 = vshrl.u32 %v6605, 7
        %v6607 = vsub.s32 0, %v6606
        %v6608 = vrot.slane %v6603, %v6607
        %v6610 = vadd.f32 %v6602, %v6608
        %v6611 = vmax.f32 %v6610, 0.0
        %v6612 = vpack.c.bf16 %v6611, %v6611
        %v6613 = vld [vmem:[#allocation14] sm:$0xf]
        %v6614 = vld [vmem:[#allocation14 + $0x4] sm:$0xf]
        %v6615 = vld [vmem:[#allocation14 + $0x8] sm:$0xf]
        %v6616 = vld [vmem:[#allocation14 + $0xc] sm:$0xf]
        %v6617 = vld [vmem:[#allocation14 + $0x10] sm:$0xf]
        %v6618 = vld [vmem:[#allocation14 + $0x14] sm:$0xf]
        %v6619 = vld [vmem:[#allocation14 + $0x18] sm:$0xf]
        %v6620 = vld [vmem:[#allocation14 + $0x1c] sm:$0xf]
        %v6621 = vld [vmem:[#allocation14 + $0x20] sm:$0xf]
        %v6622 = vld [vmem:[#allocation14 + $0x24] sm:$0xf]
        %v6623 = vld [vmem:[#allocation14 + $0x28] sm:$0xf]
        %v6624 = vld [vmem:[#allocation14 + $0x2c] sm:$0xf]
        %v6625 = vld [vmem:[#allocation14 + $0x30] sm:$0xf]
        %v6626 = vld [vmem:[#allocation14 + $0x34] sm:$0xf]
        %v6627 = vld [vmem:[#allocation14 + $0x38] sm:$0xf]
        %v6628 = vld [vmem:[#allocation14 + $0x3c] sm:$0xf]
        %v6629 = vld [vmem:[#allocation16] sm:$0x1]
        %v6631 = vlaneseq
        %v6632 = vshrl.u32 %v6631, 7
        %v6633 = vsub.s32 0, %v6632
        %v6634 = vrot.slane %v6629, %v6633
        %v6652 = vunpack.c.l.b16 %v6613
        %v6653 = vunpack.c.l.b16 %v6614
        %v6654 = vunpack.c.l.b16 %v6615
        %v6655 = vunpack.c.l.b16 %v6616
        %v6656 = vunpack.c.l.b16 %v6617
        %v6657 = vunpack.c.l.b16 %v6618
        %v6658 = vunpack.c.l.b16 %v6619
        %v6659 = vunpack.c.l.b16 %v6620
        %v6660 = vunpack.c.l.b16 %v6621
        %v6661 = vunpack.c.l.b16 %v6622
        %v6662 = vunpack.c.l.b16 %v6623
        %v6663 = vunpack.c.l.b16 %v6624
        %v6664 = vunpack.c.l.b16 %v6625
        %v6665 = vunpack.c.l.b16 %v6626
        %v6666 = vunpack.c.l.b16 %v6627
        %v6667 = vunpack.c.l.b16 %v6628
        %v6668 = vpack.c.b16 %v6653, %v6652
        %v6669 = vpack.c.b16 %v6655, %v6654
        %v6670 = vpack.c.b16 %v6657, %v6656
        %v6671 = vpack.c.b16 %v6659, %v6658
        %v6672 = vpack.c.b16 %v6661, %v6660
        %v6673 = vpack.c.b16 %v6663, %v6662
        %v6674 = vpack.c.b16 %v6665, %v6664
        %v6675 = vpack.c.b16 %v6667, %v6666
        %6684 = vmatprep.subr.bf16.mxu0 0
        %6685 = vmatpush1.bf16.msra.mxu0 %v6668
        %6686 = vmatprep.subr.bf16.mxu0 0
        %6687 = vmatpush1.bf16.msra.mxu0 %v6669
        %6688 = vmatprep.subr.bf16.mxu0 0
        %6689 = vmatpush1.bf16.msra.mxu0 %v6670
        %6690 = vmatprep.subr.bf16.mxu0 0
        %6691 = vmatpush1.bf16.msra.mxu0 %v6671
        %6692 = vmatprep.subr.bf16.mxu0 0
        %6693 = vmatpush1.bf16.msra.mxu0 %v6672
        %6694 = vmatprep.subr.bf16.mxu0 0
        %6695 = vmatpush1.bf16.msra.mxu0 %v6673
        %6696 = vmatprep.subr.bf16.mxu0 0
        %6697 = vmatpush1.bf16.msra.mxu0 %v6674
        %6698 = vmatprep.subr.bf16.mxu0 0
        %6699 = vmatpush1.bf16.msra.mxu0 %v6675
        %6700 = vmatprep.subr.bf16.mxu0 0
        %6701 = vmatpush1.bf16.msra.mxu0 0
        %6702 = vmatprep.subr.bf16.mxu0 0
        %6703 = vmatpush1.bf16.msra.mxu0 0
        %6704 = vmatprep.subr.bf16.mxu0 0
        %6705 = vmatpush1.bf16.msra.mxu0 0
        %6706 = vmatprep.subr.bf16.mxu0 0
        %6707 = vmatpush1.bf16.msra.mxu0 0
        %6708 = vmatprep.subr.bf16.mxu0 0
        %6709 = vmatpush1.bf16.msra.mxu0 0
        %6710 = vmatprep.subr.bf16.mxu0 0
        %6711 = vmatpush1.bf16.msra.mxu0 0
        %6712 = vmatprep.subr.bf16.mxu0 0
        %6713 = vmatpush1.bf16.msra.mxu0 0
        %6714 = vmatprep.subr.bf16.mxu0 0
        %6715 = vmatpush1.bf16.msra.mxu0 0
        %6716 = vmatprep.mubr.bf16.mxu0 0
        %6717 = vmatmul.mubr.bf16.gmra.mrb[0].mxu0 %v6612
        %v6718 = vpop.f32.mrb[0].mxu0
        %v6719 = vadd.f32 %v6634, %v6718
        %v6720 = vpop.f32.mrb[0].mxu0
        %v6721 = vpop.f32.mrb[0].mxu0
        %v6722 = vpop.f32.mrb[0].mxu0
        %6723 = vdwg.mxu0
        %6724 = vst [vmem:[%s457] sm:$0x3] %v6719
        %s6725 = sand.u32 %s232, 1
        %s6726 = scalar_lea.sflag [#allocation4], %s6725
        %s6727 = sand.u32 %s232, 1
        %s6728 = smul.addr %s6727, 2
        %s6729 = scalar_lea.vmem [#allocation17], %s6728
        // Predicated region
        $region93: #{tpu_custom_call.1} parent=55 // pred_check
          %p6730 = pneg %p242
        $region94: #{tpu_custom_call.1} parent=55 // pred_check_branch
          %6732 = sbr.rel (%p6730) target = $region96
        $region95: #{tpu_custom_call.1} parent=55 // pred_region
          %s6734 = ssub.s32 32, 32
          %6735 = vsyncadd %s6726, %s6734
          %s6736 = smul.addr %s30, 32
          %s6737 = scalar_lea.hbm %s9, %s6736
          %s6739 = sshll.u32 %s6729, 4
          %s6740 = int_to_ptr.vmem [resolvable:$true] %s6739
          %6742 = dma.vmem_to_hbm [thread:$0]  %s6740, 32, %s6737, %s6726
        $region96: #{tpu_custom_call.1} parent=55 // pred_fallthru
          _
      $region56: #{tpu_custom_call.1} parent=5 // pred_fallthru
        _
      %p6743 = scmp.le.s32.totalorder 2, %s25
      // Predicated region
      $region97: #{tpu_custom_call.1} parent=5 // pred_check
        %p6744 = pneg %p6743
      $region98: #{tpu_custom_call.1} parent=5 // pred_check_branch
        %6746 = sbr.rel (%p6744) target = $region100
      $region99: #{tpu_custom_call.1} parent=5 // pred_region
        %s6747 = ssub.s32 %s25, 2
        // Predicated region
        $region101: #{tpu_custom_call.1} parent=99 // pred_check
          %p6748 = pneg %p248
        $region102: #{tpu_custom_call.1} parent=99 // pred_check_branch
          %6750 = sbr.rel (%p6748) target = $region104
        $region103: #{tpu_custom_call.1} parent=99 // pred_region
          %s6751 = sand.u32 %s233, 1
          %s6752 = scalar_lea.sflag [#allocation4], %s6751
          %s6753 = sand.u32 %s233, 1
          %s6754 = smul.addr %s6753, 2
          %s6755 = scalar_lea.vmem [#allocation17], %s6754
          %6756 = dma.done %s6752, 32
        $region104: #{tpu_custom_call.1} parent=99 // pred_fallthru
          _
      $region100: #{tpu_custom_call.1} parent=5 // pred_fallthru
        _
    $region6: #{tpu_custom_call.1} parent=1 // loop_footer
      %s29 = sadd.s32 1, %s25
    $region7: #{tpu_custom_call.1} parent=1 // loop_footer_branch
      %24 = sbr.rel target = $region3
    $region8: #{tpu_custom_call.1} parent=1 // loop_exit
      _
    %6757 = vsyncpa [#allocation3], 1
    %s6758 = scalar_lea.sflag [#allocation3], 1
    %6759 = vsyncpa %s6758, 1
    %6760 = vsyncpa [#allocation6], 1
    %6761 = vsyncpa [#allocation9], 1
    %6762 = vsyncpa [#allocation12], 1
    %6763 = vsyncpa [#allocation15], 1
    %6764 = vsyncpa [#allocation4], 1
    %s6765 = scalar_lea.sflag [#allocation4], 1
    %6766 = vsyncpa %s6765, 1

</llo_original>
